<compile_context>
chip_gen: v7x
topology: tpu7x:2x2x1
jax: 0.10.0
libtpu: 0.0.40
codegen_flags: <defaults>
</compile_context>

<pallas_src>
import numpy as np

import jax
import jax.numpy as jnp
from jax.experimental import pallas as pl
from jax.experimental.pallas import tpu as pltpu

HIAML_NUM_BLOCKS_PER_STACK = 2  # standard HiAML value (constant not in the snippet)


# ---------------------------------------------------------------------------
# Fused whole-network Pallas kernel
# ---------------------------------------------------------------------------
def _build_fused_kernel(layer_meta, batch):
    """layer_meta: tuple of (stride, h_in, h_out) per conv layer, stem first."""

    def kernel(*refs):
        # refs = [x_strip, per layer (T, scale, bias[, sel]), wcls, bcls, out, act*L]
        idx = 0
        x_ref = refs[idx]; idx += 1
        layer_refs = []
        for (stride, _h_in, _h_out) in layer_meta:
            if stride == 1:
                layer_refs.append((refs[idx], refs[idx + 1], refs[idx + 2], None))
                idx += 3
            else:
                layer_refs.append((refs[idx], refs[idx + 1], refs[idx + 2], refs[idx + 3]))
                idx += 4
        wcls_ref = refs[idx]; bcls_ref = refs[idx + 1]
        out_ref = refs[idx + 2]
        act_refs = refs[idx + 3:]

        # Zero ONLY the halo rows of each activation scratch buffer: interior rows are
        # fully overwritten every layer, so a full-buffer memset is wasted store traffic.
        for li, (_s, _h_in, h_out) in enumerate(layer_meta):
            buf = act_refs[li]
            zrow = jnp.zeros((1, buf.shape[1]), buf.dtype)
            for b in range(batch):
                base = b * (h_out + 2)
                buf[base:base + 1, :] = zrow
                buf[base + h_out + 1:base + h_out + 2, :] = zrow

        prev = x_ref                                     # strip: (B*(h_in+2), W_in*C_in)
        for li, (stride, h_in, h_out) in enumerate(layer_meta):
            t_ref, sc_ref, bi_ref, sel_ref = layer_refs[li]
            nxt = act_refs[li]
            r_in = batch * (h_in + 2)

            # Stack the 3 kernel-row windows along K -> one fat matmul per layer that
            # covers every batch image at once (zero halo rows give free H padding).
            lhs = jnp.concatenate(
                [prev[kh:kh + r_in - 2, :] for kh in range(3)], axis=-1)
            if sel_ref is not None:
                # Stride-2 layer: select the strided window-base rows with a tiny 0/1
                # matmul (exact, keeps all ref reads contiguous).
                lhs = jnp.dot(sel_ref[...], lhs,
                              preferred_element_type=jnp.float32).astype(t_ref.dtype)

            acc = jnp.dot(lhs, t_ref[...], preferred_element_type=jnp.float32)
            # Fused eval-mode BatchNorm + ReLU epilogue in fp32.
            y = jnp.maximum(acc * sc_ref[...] + bi_ref[...], 0.0).astype(nxt.dtype)

            # Write only the valid interior rows of each batch segment (halos stay zero).
            for b in range(batch):
                if sel_ref is None:
                    src = y[b * (h_in + 2):b * (h_in + 2) + h_out, :]
                else:
                    src = y[b * h_out:(b + 1) * h_out, :]
                dst = b * (h_out + 2) + 1
                nxt[dst:dst + h_out, :] = src
            prev = nxt

        # Global average pool (1/(H*W) folded into wcls) + linear head:
        # one batched matmul, one store.
        _s, _h_in, h_last = layer_meta[-1]
        pooled = jnp.concatenate(
            [jnp.sum(prev[b * (h_last + 2) + 1:b * (h_last + 2) + 1 + h_last, :]
                     .astype(jnp.float32), axis=0, keepdims=True)
             for b in range(batch)], axis=0)
        logits = jnp.dot(pooled.astype(wcls_ref.dtype), wcls_ref[...],
                         preferred_element_type=jnp.float32) + bcls_ref[...]
        out_ref[...] = logits

    return kernel


def hiaml_fused_forward(prep, x_nchw):
    """Runs the whole HiAMLNet forward as one fused Pallas call."""
    B = x_nchw.shape[0]
    dtype = prep["dtype"]

    # NCHW (PyTorch) -> NHWC -> row layout (B, H, W*Cin) -> batch strip with one-row
    # zero halos between / around images.
    x = jnp.transpose(x_nchw, (0, 2, 3, 1)).astype(jnp.float32)
    _, H, W, Cin = x.shape
    x_rows = x.reshape(B, H, W * Cin)
    x_strip = jnp.pad(x_rows, ((0, 0), (1, 1), (0, 0))).reshape(B * (H + 2), W * Cin)
    x_strip = x_strip.astype(dtype)

    inputs = [x_strip]
    for lp in prep["layers"]:
        inputs += [lp["T"], lp["scale"], lp["bias"]]
        if "sel" in lp:
            inputs.append(lp["sel"])
    inputs += [prep["wcls"], prep["bcls"]]

    scratch = [pltpu.VMEM((B * (ho + 2), wo * cout), dtype)
               for (_s, _hi, ho, wo, cout) in prep["metas"]]

    kernel = _build_fused_kernel(
        tuple((s, hi, ho) for (s, hi, ho, _w, _c) in prep["metas"]), B)

    return pl.pallas_call(
        kernel,
        out_shape=jax.ShapeDtypeStruct((B, prep["n_classes"]), jnp.float32),
        in_specs=[pl.BlockSpec(memory_space=pltpu.MemorySpace.VMEM)] * len(inputs),
        out_specs=pl.BlockSpec(memory_space=pltpu.MemorySpace.VMEM),
        scratch_shapes=scratch,
    )(*inputs)


# ---------------------------------------------------------------------------
# Host-side weight preparation (block-Toeplitz conv weights, folded BN, folded pool)
# ---------------------------------------------------------------------------
def _make_row_toeplitz(w_hwio, w_in, stride):
    """(3,3,Cin,Cout) conv weight -> (3*W_in*Cin, W_out*Cout) block-Toeplitz matrix: the
    kw sliding window, the width stride and the width zero-padding are baked in
    (kh-major row blocks, matching the in-kernel lane-concat of the 3 row windows)."""
    w_np = np.asarray(jax.device_get(w_hwio), dtype=np.float32)
    k, _, cin, cout = w_np.shape
    w_out = (w_in + 2 - k) // stride + 1
    T = np.zeros((k, w_in * cin, w_out * cout), np.float32)
    for kh in range(k):
        for wo in range(w_out):
            for kw in range(k):
                wi = stride * wo + kw - 1                 # padding = 1
                if 0 <= wi < w_in:
                    T[kh, wi * cin:(wi + 1) * cin, wo * cout:(wo + 1) * cout] = w_np[kh, kw]
    return T.reshape(k * w_in * cin, w_out * cout)


def _make_row_selection(batch, h_in, h_out, stride):
    """0/1 matrix that picks the stride-s window-base rows out of the batch strip."""
    r_in = batch * (h_in + 2)
    S = np.zeros((batch * h_out, r_in - 2), np.float32)
    for b in range(batch):
        for i in range(h_out):
            S[b * h_out + i, b * (h_in + 2) + stride * i] = 1.0
    return S


def prepare_fused_params(params, H, W, batch, compute_dtype=jnp.bfloat16):
    layer_list = [dict(stride=2, **params["stem"])] + list(params["blocks"])
    layers, metas = [], []
    h, w = H, W
    for lyr in layer_list:
        s = int(lyr["stride"])
        wt = lyr["w"]
        cout = wt.shape[3]
        ho = (h + 2 - 3) // s + 1
        wo = (w + 2 - 3) // s + 1
        entry = {
            "T": jnp.asarray(_make_row_toeplitz(wt, w, s)).astype(compute_dtype),
            "scale": jnp.tile(lyr["scale"], wo).reshape(1, wo * cout).astype(jnp.float32),
            "bias": jnp.tile(lyr["bias"], wo).reshape(1, wo * cout).astype(jnp.float32),
        }
        if s != 1:
            entry["sel"] = jnp.asarray(
                _make_row_selection(batch, h, ho, s)).astype(compute_dtype)
        layers.append(entry)
        metas.append((s, h, ho, wo, cout))
        h, w = ho, wo

    # Global-average-pool folded into the classifier: last-layer lane index is (w*C + c),
    # so tile the (C, n_classes) weight w times and fold 1/(h*w) in.
    wcls = params["classifier_w"]
    wcls_exp = (jnp.tile(wcls, (w, 1)) / float(h * w)).astype(compute_dtype)
    bcls = params["classifier_b"].reshape(1, -1).astype(jnp.float32)
    return {"layers": layers, "metas": tuple(metas), "wcls": wcls_exp, "bcls": bcls,
            "n_classes": int(wcls.shape[1]), "dtype": compute_dtype}


# ---------------------------------------------------------------------------
# Deterministic parameter construction (synthetic weights, no checkpoint load)
# ---------------------------------------------------------------------------
def _conv_bn_params(key, cin, cout):
    k1, k2, k3, k4, k5 = jax.random.split(key, 5)
    w = jax.random.normal(k1, (3, 3, cin, cout), jnp.float32) / jnp.sqrt(9.0 * cin)
    gamma = 1.0 + 0.1 * jax.random.normal(k2, (cout,), jnp.float32)
    beta = 0.1 * jax.random.normal(k3, (cout,), jnp.float32)
    rmean = 0.1 * jax.random.normal(k4, (cout,), jnp.float32)
    rvar = 1.0 + 0.1 * jax.random.uniform(k5, (cout,), jnp.float32)
    eps = 1e-5
    scale = gamma / jnp.sqrt(rvar + eps)          # eval-mode BN folded into scale/bias
    bias = beta - rmean * scale
    return {"w": w, "scale": scale, "bias": bias}


def init_hiaml_net(key, net_config, C_in=3, C_init=16, reduction_stage_inds=(1, 3),
                   n_classes=10, n_blocks_per_stack=HIAML_NUM_BLOCKS_PER_STACK):
    n_keys = 2 + len(net_config) * n_blocks_per_stack
    keys = iter(jax.random.split(key, n_keys))

    params = {"stem": _conv_bn_params(next(keys), C_in, C_init)}
    blocks = []
    C_block = C_init
    for si, _op_name in enumerate(net_config):
        for bi in range(n_blocks_per_stack):
            # TODO(synk): get_hiaml_block_op_model internals were not provided; each block
            # is realized as a single Conv3x3-BN-ReLU unit with the declared
            # (C_in, C_out, stride) from HiAMLNet.__init__.
            if si in reduction_stage_inds and bi == 0:
                new_C = 2 * C_block
                blocks.append({"stride": 2, **_conv_bn_params(next(keys), C_block, new_C)})
                C_block = new_C
            else:
                blocks.append({"stride": 1, **_conv_bn_params(next(keys), C_block, C_block)})
    params["blocks"] = blocks

    kw, kb = jax.random.split(next(keys))
    params["classifier_w"] = (
        jax.random.normal(kw, (C_block, n_classes), jnp.float32) / jnp.sqrt(float(C_block)))
    params["classifier_b"] = 0.01 * jax.random.normal(kb, (n_classes,), jnp.float32)
    return params


# ---------------------------------------------------------------------------
# Plain-JAX reference (sanity check of the fused kernel)
# ---------------------------------------------------------------------------
def reference_forward(params, x_nchw):
    x = jnp.transpose(x_nchw, (0, 2, 3, 1))
    layer_list = [dict(stride=2, **params["stem"])] + list(params["blocks"])
    for lyr in layer_list:
        s = int(lyr["stride"])
        y = jax.lax.conv_general_dilated(
            x, lyr["w"], window_strides=(s, s), padding=((1, 1), (1, 1)),
            dimension_numbers=("NHWC", "HWIO", "NHWC"))
        x = jnp.maximum(y * lyr["scale"] + lyr["bias"], 0.0)
    pooled = jnp.mean(x, axis=(1, 2))
    return pooled @ params["classifier_w"] + params["classifier_b"]


if __name__ == "__main__":
    key = jax.random.PRNGKey(0)
    k_params, k_x = jax.random.split(key)

    net_config = ["hiaml_a", "hiaml_b", "hiaml_c", "hiaml_d"]     # 4 stages x 2 blocks
    params = init_hiaml_net(k_params, net_config, C_in=3, C_init=16,
                            reduction_stage_inds=(1, 3), n_classes=10)

    # Small NCHW input, consistent with the PyTorch module's expectations.
    x = jax.random.normal(k_x, (2, 3, 16, 16), jnp.float32)
    B, _, H, W = x.shape

    ref = reference_forward(params, x)
    ref_mag = float(jnp.max(jnp.abs(ref))) + 1e-6

    # fp32 compute path: tighter check to validate the Toeplitz / strip-layout indexing.
    prep32 = prepare_fused_params(params, H=H, W=W, batch=B, compute_dtype=jnp.float32)
    fwd32 = jax.jit(lambda xin: hiaml_fused_forward(prep32, xin))
    out32 = fwd32(x)
    jax.block_until_ready(out32)
    assert out32.shape == (B, 10), out32.shape
    assert bool(jnp.all(jnp.isfinite(out32)))
    err32 = float(jnp.max(jnp.abs(out32 - ref)))
    assert err32 <= 0.03 * ref_mag + 1e-3, (err32, ref_mag)

    # bf16 MXU path (production config): loose check for bf16 drift.
    prep16 = prepare_fused_params(params, H=H, W=W, batch=B, compute_dtype=jnp.bfloat16)
    fwd16 = jax.jit(lambda xin: hiaml_fused_forward(prep16, xin))
    out16 = fwd16(x)
    jax.block_until_ready(out16)
    assert out16.shape == (B, 10), out16.shape
    assert bool(jnp.all(jnp.isfinite(out16)))
    err16 = float(jnp.max(jnp.abs(out16 - ref)))
    assert err16 <= 0.2 * ref_mag + 1e-3, (err16, ref_mag)

    print("KERNEL_OK")
</pallas_src>

<mosaic_0001>
module attributes {stable_mosaic.version = 11 : i64} {
  func.func @kernel(%arg0: memref<36x48xf32, #tpu.memory_space<vmem>>, %arg1: memref<144x128xf32, #tpu.memory_space<vmem>>, %arg2: memref<1x128xf32, #tpu.memory_space<vmem>>, %arg3: memref<1x128xf32, #tpu.memory_space<vmem>>, %arg4: memref<16x34xf32, #tpu.memory_space<vmem>>, %arg5: memref<384x128xf32, #tpu.memory_space<vmem>>, %arg6: memref<1x128xf32, #tpu.memory_space<vmem>>, %arg7: memref<1x128xf32, #tpu.memory_space<vmem>>, %arg8: memref<384x128xf32, #tpu.memory_space<vmem>>, %arg9: memref<1x128xf32, #tpu.memory_space<vmem>>, %arg10: memref<1x128xf32, #tpu.memory_space<vmem>>, %arg11: memref<384x128xf32, #tpu.memory_space<vmem>>, %arg12: memref<1x128xf32, #tpu.memory_space<vmem>>, %arg13: memref<1x128xf32, #tpu.memory_space<vmem>>, %arg14: memref<8x18xf32, #tpu.memory_space<vmem>>, %arg15: memref<384x128xf32, #tpu.memory_space<vmem>>, %arg16: memref<1x128xf32, #tpu.memory_space<vmem>>, %arg17: memref<1x128xf32, #tpu.memory_space<vmem>>, %arg18: memref<384x128xf32, #tpu.memory_space<vmem>>, %arg19: memref<1x128xf32, #tpu.memory_space<vmem>>, %arg20: memref<1x128xf32, #tpu.memory_space<vmem>>, %arg21: memref<384x128xf32, #tpu.memory_space<vmem>>, %arg22: memref<1x128xf32, #tpu.memory_space<vmem>>, %arg23: memref<1x128xf32, #tpu.memory_space<vmem>>, %arg24: memref<384x128xf32, #tpu.memory_space<vmem>>, %arg25: memref<1x128xf32, #tpu.memory_space<vmem>>, %arg26: memref<1x128xf32, #tpu.memory_space<vmem>>, %arg27: memref<4x10xf32, #tpu.memory_space<vmem>>, %arg28: memref<384x128xf32, #tpu.memory_space<vmem>>, %arg29: memref<1x128xf32, #tpu.memory_space<vmem>>, %arg30: memref<1x128xf32, #tpu.memory_space<vmem>>, %arg31: memref<128x10xf32, #tpu.memory_space<vmem>>, %arg32: memref<1x10xf32, #tpu.memory_space<vmem>>, %arg33: memref<2x10xf32, #tpu.memory_space<vmem>>, %arg34: memref<20x128xf32, #tpu.memory_space<vmem>>, %arg35: memref<20x128xf32, #tpu.memory_space<vmem>>, %arg36: memref<20x128xf32, #tpu.memory_space<vmem>>, %arg37: memref<12x128xf32, #tpu.memory_space<vmem>>, %arg38: memref<12x128xf32, #tpu.memory_space<vmem>>, %arg39: memref<12x128xf32, #tpu.memory_space<vmem>>, %arg40: memref<12x128xf32, #tpu.memory_space<vmem>>, %arg41: memref<8x128xf32, #tpu.memory_space<vmem>>, %arg42: memref<8x128xf32, #tpu.memory_space<vmem>>) attributes {dimension_semantics = [], scalar_prefetch = 0 : i64, scratch_operands = 9 : i64, tpu.core_type = #tpu.core_type<tc>} {
    %cst = arith.constant 0.000000e+00 : f32
    %0 = vector.broadcast %cst : f32 to vector<1x128xf32>
    %c0 = arith.constant 0 : index
    %c0_0 = arith.constant 0 : index
    %1 = vector.load %arg34[%c0, %c0_0] : memref<20x128xf32, #tpu.memory_space<vmem>>, vector<1x128xf32>
    tpu.vector_store %arg34[%c0, %c0_0], %0 {strides = array<i32>} : memref<20x128xf32, #tpu.memory_space<vmem>>, vector<1x128xf32>,
    %c9 = arith.constant 9 : index
    %c0_1 = arith.constant 0 : index
    %2 = vector.load %arg34[%c9, %c0_1] : memref<20x128xf32, #tpu.memory_space<vmem>>, vector<1x128xf32>
    tpu.vector_store %arg34[%c9, %c0_1], %0 {strides = array<i32>} : memref<20x128xf32, #tpu.memory_space<vmem>>, vector<1x128xf32>,
    %c10 = arith.constant 10 : index
    %c0_2 = arith.constant 0 : index
    %3 = vector.load %arg34[%c10, %c0_2] : memref<20x128xf32, #tpu.memory_space<vmem>>, vector<1x128xf32>
    tpu.vector_store %arg34[%c10, %c0_2], %0 {strides = array<i32>} : memref<20x128xf32, #tpu.memory_space<vmem>>, vector<1x128xf32>,
    %c19 = arith.constant 19 : index
    %c0_3 = arith.constant 0 : index
    %4 = vector.load %arg34[%c19, %c0_3] : memref<20x128xf32, #tpu.memory_space<vmem>>, vector<1x128xf32>
    tpu.vector_store %arg34[%c19, %c0_3], %0 {strides = array<i32>} : memref<20x128xf32, #tpu.memory_space<vmem>>, vector<1x128xf32>,
    %cst_4 = arith.constant 0.000000e+00 : f32
    %5 = vector.broadcast %cst_4 : f32 to vector<1x128xf32>
    %c0_5 = arith.constant 0 : index
    %c0_6 = arith.constant 0 : index
    %6 = vector.load %arg35[%c0_5, %c0_6] : memref<20x128xf32, #tpu.memory_space<vmem>>, vector<1x128xf32>
    tpu.vector_store %arg35[%c0_5, %c0_6], %5 {strides = array<i32>} : memref<20x128xf32, #tpu.memory_space<vmem>>, vector<1x128xf32>,
    %c9_7 = arith.constant 9 : index
    %c0_8 = arith.constant 0 : index
    %7 = vector.load %arg35[%c9_7, %c0_8] : memref<20x128xf32, #tpu.memory_space<vmem>>, vector<1x128xf32>
    tpu.vector_store %arg35[%c9_7, %c0_8], %5 {strides = array<i32>} : memref<20x128xf32, #tpu.memory_space<vmem>>, vector<1x128xf32>,
    %c10_9 = arith.constant 10 : index
    %c0_10 = arith.constant 0 : index
    %8 = vector.load %arg35[%c10_9, %c0_10] : memref<20x128xf32, #tpu.memory_space<vmem>>, vector<1x128xf32>
    tpu.vector_store %arg35[%c10_9, %c0_10], %5 {strides = array<i32>} : memref<20x128xf32, #tpu.memory_space<vmem>>, vector<1x128xf32>,
    %c19_11 = arith.constant 19 : index
    %c0_12 = arith.constant 0 : index
    %9 = vector.load %arg35[%c19_11, %c0_12] : memref<20x128xf32, #tpu.memory_space<vmem>>, vector<1x128xf32>
    tpu.vector_store %arg35[%c19_11, %c0_12], %5 {strides = array<i32>} : memref<20x128xf32, #tpu.memory_space<vmem>>, vector<1x128xf32>,
    %cst_13 = arith.constant 0.000000e+00 : f32
    %10 = vector.broadcast %cst_13 : f32 to vector<1x128xf32>
    %c0_14 = arith.constant 0 : index
    %c0_15 = arith.constant 0 : index
    %11 = vector.load %arg36[%c0_14, %c0_15] : memref<20x128xf32, #tpu.memory_space<vmem>>, vector<1x128xf32>
    tpu.vector_store %arg36[%c0_14, %c0_15], %10 {strides = array<i32>} : memref<20x128xf32, #tpu.memory_space<vmem>>, vector<1x128xf32>,
    %c9_16 = arith.constant 9 : index
    %c0_17 = arith.constant 0 : index
    %12 = vector.load %arg36[%c9_16, %c0_17] : memref<20x128xf32, #tpu.memory_space<vmem>>, vector<1x128xf32>
    tpu.vector_store %arg36[%c9_16, %c0_17], %10 {strides = array<i32>} : memref<20x128xf32, #tpu.memory_space<vmem>>, vector<1x128xf32>,
    %c10_18 = arith.constant 10 : index
    %c0_19 = arith.constant 0 : index
    %13 = vector.load %arg36[%c10_18, %c0_19] : memref<20x128xf32, #tpu.memory_space<vmem>>, vector<1x128xf32>
    tpu.vector_store %arg36[%c10_18, %c0_19], %10 {strides = array<i32>} : memref<20x128xf32, #tpu.memory_space<vmem>>, vector<1x128xf32>,
    %c19_20 = arith.constant 19 : index
    %c0_21 = arith.constant 0 : index
    %14 = vector.load %arg36[%c19_20, %c0_21] : memref<20x128xf32, #tpu.memory_space<vmem>>, vector<1x128xf32>
    tpu.vector_store %arg36[%c19_20, %c0_21], %10 {strides = array<i32>} : memref<20x128xf32, #tpu.memory_space<vmem>>, vector<1x128xf32>,
    %cst_22 = arith.constant 0.000000e+00 : f32
    %15 = vector.broadcast %cst_22 : f32 to vector<1x128xf32>
    %c0_23 = arith.constant 0 : index
    %c0_24 = arith.constant 0 : index
    %16 = vector.load %arg37[%c0_23, %c0_24] : memref<12x128xf32, #tpu.memory_space<vmem>>, vector<1x128xf32>
    tpu.vector_store %arg37[%c0_23, %c0_24], %15 {strides = array<i32>} : memref<12x128xf32, #tpu.memory_space<vmem>>, vector<1x128xf32>,
    %c5 = arith.constant 5 : index
    %c0_25 = arith.constant 0 : index
    %17 = vector.load %arg37[%c5, %c0_25] : memref<12x128xf32, #tpu.memory_space<vmem>>, vector<1x128xf32>
    tpu.vector_store %arg37[%c5, %c0_25], %15 {strides = array<i32>} : memref<12x128xf32, #tpu.memory_space<vmem>>, vector<1x128xf32>,
    %c6 = arith.constant 6 : index
    %c0_26 = arith.constant 0 : index
    %18 = vector.load %arg37[%c6, %c0_26] : memref<12x128xf32, #tpu.memory_space<vmem>>, vector<1x128xf32>
    tpu.vector_store %arg37[%c6, %c0_26], %15 {strides = array<i32>} : memref<12x128xf32, #tpu.memory_space<vmem>>, vector<1x128xf32>,
    %c11 = arith.constant 11 : index
    %c0_27 = arith.constant 0 : index
    %19 = vector.load %arg37[%c11, %c0_27] : memref<12x128xf32, #tpu.memory_space<vmem>>, vector<1x128xf32>
    tpu.vector_store %arg37[%c11, %c0_27], %15 {strides = array<i32>} : memref<12x128xf32, #tpu.memory_space<vmem>>, vector<1x128xf32>,
    %cst_28 = arith.constant 0.000000e+00 : f32
    %20 = vector.broadcast %cst_28 : f32 to vector<1x128xf32>
    %c0_29 = arith.constant 0 : index
    %c0_30 = arith.constant 0 : index
    %21 = vector.load %arg38[%c0_29, %c0_30] : memref<12x128xf32, #tpu.memory_space<vmem>>, vector<1x128xf32>
    tpu.vector_store %arg38[%c0_29, %c0_30], %20 {strides = array<i32>} : memref<12x128xf32, #tpu.memory_space<vmem>>, vector<1x128xf32>,
    %c5_31 = arith.constant 5 : index
    %c0_32 = arith.constant 0 : index
    %22 = vector.load %arg38[%c5_31, %c0_32] : memref<12x128xf32, #tpu.memory_space<vmem>>, vector<1x128xf32>
    tpu.vector_store %arg38[%c5_31, %c0_32], %20 {strides = array<i32>} : memref<12x128xf32, #tpu.memory_space<vmem>>, vector<1x128xf32>,
    %c6_33 = arith.constant 6 : index
    %c0_34 = arith.constant 0 : index
    %23 = vector.load %arg38[%c6_33, %c0_34] : memref<12x128xf32, #tpu.memory_space<vmem>>, vector<1x128xf32>
    tpu.vector_store %arg38[%c6_33, %c0_34], %20 {strides = array<i32>} : memref<12x128xf32, #tpu.memory_space<vmem>>, vector<1x128xf32>,
    %c11_35 = arith.constant 11 : index
    %c0_36 = arith.constant 0 : index
    %24 = vector.load %arg38[%c11_35, %c0_36] : memref<12x128xf32, #tpu.memory_space<vmem>>, vector<1x128xf32>
    tpu.vector_store %arg38[%c11_35, %c0_36], %20 {strides = array<i32>} : memref<12x128xf32, #tpu.memory_space<vmem>>, vector<1x128xf32>,
    %cst_37 = arith.constant 0.000000e+00 : f32
    %25 = vector.broadcast %cst_37 : f32 to vector<1x128xf32>
    %c0_38 = arith.constant 0 : index
    %c0_39 = arith.constant 0 : index
    %26 = vector.load %arg39[%c0_38, %c0_39] : memref<12x128xf32, #tpu.memory_space<vmem>>, vector<1x128xf32>
    tpu.vector_store %arg39[%c0_38, %c0_39], %25 {strides = array<i32>} : memref<12x128xf32, #tpu.memory_space<vmem>>, vector<1x128xf32>,
    %c5_40 = arith.constant 5 : index
    %c0_41 = arith.constant 0 : index
    %27 = vector.load %arg39[%c5_40, %c0_41] : memref<12x128xf32, #tpu.memory_space<vmem>>, vector<1x128xf32>
    tpu.vector_store %arg39[%c5_40, %c0_41], %25 {strides = array<i32>} : memref<12x128xf32, #tpu.memory_space<vmem>>, vector<1x128xf32>,
    %c6_42 = arith.constant 6 : index
    %c0_43 = arith.constant 0 : index
    %28 = vector.load %arg39[%c6_42, %c0_43] : memref<12x128xf32, #tpu.memory_space<vmem>>, vector<1x128xf32>
    tpu.vector_store %arg39[%c6_42, %c0_43], %25 {strides = array<i32>} : memref<12x128xf32, #tpu.memory_space<vmem>>, vector<1x128xf32>,
    %c11_44 = arith.constant 11 : index
    %c0_45 = arith.constant 0 : index
    %29 = vector.load %arg39[%c11_44, %c0_45] : memref<12x128xf32, #tpu.memory_space<vmem>>, vector<1x128xf32>
    tpu.vector_store %arg39[%c11_44, %c0_45], %25 {strides = array<i32>} : memref<12x128xf32, #tpu.memory_space<vmem>>, vector<1x128xf32>,
    %cst_46 = arith.constant 0.000000e+00 : f32
    %30 = vector.broadcast %cst_46 : f32 to vector<1x128xf32>
    %c0_47 = arith.constant 0 : index
    %c0_48 = arith.constant 0 : index
    %31 = vector.load %arg40[%c0_47, %c0_48] : memref<12x128xf32, #tpu.memory_space<vmem>>, vector<1x128xf32>
    tpu.vector_store %arg40[%c0_47, %c0_48], %30 {strides = array<i32>} : memref<12x128xf32, #tpu.memory_space<vmem>>, vector<1x128xf32>,
    %c5_49 = arith.constant 5 : index
    %c0_50 = arith.constant 0 : index
    %32 = vector.load %arg40[%c5_49, %c0_50] : memref<12x128xf32, #tpu.memory_space<vmem>>, vector<1x128xf32>
    tpu.vector_store %arg40[%c5_49, %c0_50], %30 {strides = array<i32>} : memref<12x128xf32, #tpu.memory_space<vmem>>, vector<1x128xf32>,
    %c6_51 = arith.constant 6 : index
    %c0_52 = arith.constant 0 : index
    %33 = vector.load %arg40[%c6_51, %c0_52] : memref<12x128xf32, #tpu.memory_space<vmem>>, vector<1x128xf32>
    tpu.vector_store %arg40[%c6_51, %c0_52], %30 {strides = array<i32>} : memref<12x128xf32, #tpu.memory_space<vmem>>, vector<1x128xf32>,
    %c11_53 = arith.constant 11 : index
    %c0_54 = arith.constant 0 : index
    %34 = vector.load %arg40[%c11_53, %c0_54] : memref<12x128xf32, #tpu.memory_space<vmem>>, vector<1x128xf32>
    tpu.vector_store %arg40[%c11_53, %c0_54], %30 {strides = array<i32>} : memref<12x128xf32, #tpu.memory_space<vmem>>, vector<1x128xf32>,
    %cst_55 = arith.constant 0.000000e+00 : f32
    %35 = vector.broadcast %cst_55 : f32 to vector<1x128xf32>
    %c0_56 = arith.constant 0 : index
    %c0_57 = arith.constant 0 : index
    %36 = vector.load %arg41[%c0_56, %c0_57] : memref<8x128xf32, #tpu.memory_space<vmem>>, vector<1x128xf32>
    tpu.vector_store %arg41[%c0_56, %c0_57], %35 {strides = array<i32>} : memref<8x128xf32, #tpu.memory_space<vmem>>, vector<1x128xf32>,
    %c3 = arith.constant 3 : index
    %c0_58 = arith.constant 0 : index
    %37 = vector.load %arg41[%c3, %c0_58] : memref<8x128xf32, #tpu.memory_space<vmem>>, vector<1x128xf32>
    tpu.vector_store %arg41[%c3, %c0_58], %35 {strides = array<i32>} : memref<8x128xf32, #tpu.memory_space<vmem>>, vector<1x128xf32>,
    %c4 = arith.constant 4 : index
    %c0_59 = arith.constant 0 : index
    %38 = vector.load %arg41[%c4, %c0_59] : memref<8x128xf32, #tpu.memory_space<vmem>>, vector<1x128xf32>
    tpu.vector_store %arg41[%c4, %c0_59], %35 {strides = array<i32>} : memref<8x128xf32, #tpu.memory_space<vmem>>, vector<1x128xf32>,
    %c7 = arith.constant 7 : index
    %c0_60 = arith.constant 0 : index
    %39 = vector.load %arg41[%c7, %c0_60] : memref<8x128xf32, #tpu.memory_space<vmem>>, vector<1x128xf32>
    tpu.vector_store %arg41[%c7, %c0_60], %35 {strides = array<i32>} : memref<8x128xf32, #tpu.memory_space<vmem>>, vector<1x128xf32>,
    %cst_61 = arith.constant 0.000000e+00 : f32
    %40 = vector.broadcast %cst_61 : f32 to vector<1x128xf32>
    %c0_62 = arith.constant 0 : index
    %c0_63 = arith.constant 0 : index
    %41 = vector.load %arg42[%c0_62, %c0_63] : memref<8x128xf32, #tpu.memory_space<vmem>>, vector<1x128xf32>
    tpu.vector_store %arg42[%c0_62, %c0_63], %40 {strides = array<i32>} : memref<8x128xf32, #tpu.memory_space<vmem>>, vector<1x128xf32>,
    %c3_64 = arith.constant 3 : index
    %c0_65 = arith.constant 0 : index
    %42 = vector.load %arg42[%c3_64, %c0_65] : memref<8x128xf32, #tpu.memory_space<vmem>>, vector<1x128xf32>
    tpu.vector_store %arg42[%c3_64, %c0_65], %40 {strides = array<i32>} : memref<8x128xf32, #tpu.memory_space<vmem>>, vector<1x128xf32>,
    %c4_66 = arith.constant 4 : index
    %c0_67 = arith.constant 0 : index
    %43 = vector.load %arg42[%c4_66, %c0_67] : memref<8x128xf32, #tpu.memory_space<vmem>>, vector<1x128xf32>
    tpu.vector_store %arg42[%c4_66, %c0_67], %40 {strides = array<i32>} : memref<8x128xf32, #tpu.memory_space<vmem>>, vector<1x128xf32>,
    %c7_68 = arith.constant 7 : index
    %c0_69 = arith.constant 0 : index
    %44 = vector.load %arg42[%c7_68, %c0_69] : memref<8x128xf32, #tpu.memory_space<vmem>>, vector<1x128xf32>
    tpu.vector_store %arg42[%c7_68, %c0_69], %40 {strides = array<i32>} : memref<8x128xf32, #tpu.memory_space<vmem>>, vector<1x128xf32>,
    %c0_70 = arith.constant 0 : index
    %c0_71 = arith.constant 0 : index
    %45 = vector.load %arg0[%c0_70, %c0_71] : memref<36x48xf32, #tpu.memory_space<vmem>>, vector<34x48xf32>
    %c1 = arith.constant 1 : index
    %c0_72 = arith.constant 0 : index
    %46 = vector.load %arg0[%c1, %c0_72] : memref<36x48xf32, #tpu.memory_space<vmem>>, vector<34x48xf32>
    %c2 = arith.constant 2 : index
    %c0_73 = arith.constant 0 : index
    %47 = vector.load %arg0[%c2, %c0_73] : memref<36x48xf32, #tpu.memory_space<vmem>>, vector<34x48xf32>
    %48 = tpu.concatenate %45, %46, %47 in 1 : vector<34x48xf32>, vector<34x48xf32>, vector<34x48xf32> -> vector<34x144xf32>
    %c0_74 = arith.constant 0 : index
    %c0_75 = arith.constant 0 : index
    %49 = vector.load %arg4[%c0_74, %c0_75] : memref<16x34xf32, #tpu.memory_space<vmem>>, vector<16x34xf32>
    %cst_76 = arith.constant dense<0.000000e+00> : vector<16x144xf32>
    %50 = tpu.matmul %49, %48, %cst_76 {dimension_numbers = #tpu.dot_dimension_numbers<[1], [0], [0], [1], [0, 0, 1, 1], [], []>} : vector<16x34xf32>, vector<34x144xf32>, vector<16x144xf32> -> vector<16x144xf32>
    %c0_77 = arith.constant 0 : index
    %c0_78 = arith.constant 0 : index
    %51 = vector.load %arg1[%c0_77, %c0_78] : memref<144x128xf32, #tpu.memory_space<vmem>>, vector<144x128xf32>
    %cst_79 = arith.constant dense<0.000000e+00> : vector<16x128xf32>
    %52 = tpu.matmul %50, %51, %cst_79 {dimension_numbers = #tpu.dot_dimension_numbers<[1], [0], [0], [1], [0, 0, 1, 1], [], []>} : vector<16x144xf32>, vector<144x128xf32>, vector<16x128xf32> -> vector<16x128xf32>
    %c0_80 = arith.constant 0 : index
    %c0_81 = arith.constant 0 : index
    %53 = vector.load %arg2[%c0_80, %c0_81] : memref<1x128xf32, #tpu.memory_space<vmem>>, vector<1x128xf32>
    %54 = vector.broadcast %53 : vector<1x128xf32> to vector<16x128xf32>
    %55 = arith.mulf %52, %54 : vector<16x128xf32>
    %c0_82 = arith.constant 0 : index
    %c0_83 = arith.constant 0 : index
    %56 = vector.load %arg3[%c0_82, %c0_83] : memref<1x128xf32, #tpu.memory_space<vmem>>, vector<1x128xf32>
    %57 = vector.broadcast %56 : vector<1x128xf32> to vector<16x128xf32>
    %58 = arith.addf %55, %57 : vector<16x128xf32>
    %cst_84 = arith.constant 0.000000e+00 : f32
    %59 = vector.broadcast %cst_84 : f32 to vector<16x128xf32>
    %60 = arith.maximumf %58, %59 : vector<16x128xf32>
    %61 = vector.extract_strided_slice %60 {offsets = [0, 0], sizes = [8, 128], strides = [1, 1]} : vector<16x128xf32> to vector<8x128xf32>
    %c1_85 = arith.constant 1 : index
    %c0_86 = arith.constant 0 : index
    %62 = vector.load %arg34[%c1_85, %c0_86] : memref<20x128xf32, #tpu.memory_space<vmem>>, vector<8x128xf32>
    tpu.vector_store %arg34[%c1_85, %c0_86], %61 {strides = array<i32>} : memref<20x128xf32, #tpu.memory_space<vmem>>, vector<8x128xf32>,
    %63 = vector.extract_strided_slice %60 {offsets = [8, 0], sizes = [8, 128], strides = [1, 1]} : vector<16x128xf32> to vector<8x128xf32>
    %c11_87 = arith.constant 11 : index
    %c0_88 = arith.constant 0 : index
    %64 = vector.load %arg34[%c11_87, %c0_88] : memref<20x128xf32, #tpu.memory_space<vmem>>, vector<8x128xf32>
    tpu.vector_store %arg34[%c11_87, %c0_88], %63 {strides = array<i32>} : memref<20x128xf32, #tpu.memory_space<vmem>>, vector<8x128xf32>,
    %c0_89 = arith.constant 0 : index
    %c0_90 = arith.constant 0 : index
    %65 = vector.load %arg34[%c0_89, %c0_90] : memref<20x128xf32, #tpu.memory_space<vmem>>, vector<18x128xf32>
    %c1_91 = arith.constant 1 : index
    %c0_92 = arith.constant 0 : index
    %66 = vector.load %arg34[%c1_91, %c0_92] : memref<20x128xf32, #tpu.memory_space<vmem>>, vector<18x128xf32>
    %c2_93 = arith.constant 2 : index
    %c0_94 = arith.constant 0 : index
    %67 = vector.load %arg34[%c2_93, %c0_94] : memref<20x128xf32, #tpu.memory_space<vmem>>, vector<18x128xf32>
    %68 = tpu.concatenate %65, %66, %67 in 1 : vector<18x128xf32>, vector<18x128xf32>, vector<18x128xf32> -> vector<18x384xf32>
    %c0_95 = arith.constant 0 : index
    %c0_96 = arith.constant 0 : index
    %69 = vector.load %arg5[%c0_95, %c0_96] : memref<384x128xf32, #tpu.memory_space<vmem>>, vector<384x128xf32>
    %cst_97 = arith.constant dense<0.000000e+00> : vector<18x128xf32>
    %70 = tpu.matmul %68, %69, %cst_97 {dimension_numbers = #tpu.dot_dimension_numbers<[1], [0], [0], [1], [0, 0, 1, 1], [], []>} : vector<18x384xf32>, vector<384x128xf32>, vector<18x128xf32> -> vector<18x128xf32>
    %c0_98 = arith.constant 0 : index
    %c0_99 = arith.constant 0 : index
    %71 = vector.load %arg6[%c0_98, %c0_99] : memref<1x128xf32, #tpu.memory_space<vmem>>, vector<1x128xf32>
    %72 = vector.broadcast %71 : vector<1x128xf32> to vector<18x128xf32>
    %73 = arith.mulf %70, %72 : vector<18x128xf32>
    %c0_100 = arith.constant 0 : index
    %c0_101 = arith.constant 0 : index
    %74 = vector.load %arg7[%c0_100, %c0_101] : memref<1x128xf32, #tpu.memory_space<vmem>>, vector<1x128xf32>
    %75 = vector.broadcast %74 : vector<1x128xf32> to vector<18x128xf32>
    %76 = arith.addf %73, %75 : vector<18x128xf32>
    %cst_102 = arith.constant 0.000000e+00 : f32
    %77 = vector.broadcast %cst_102 : f32 to vector<18x128xf32>
    %78 = arith.maximumf %76, %77 : vector<18x128xf32>
    %79 = vector.extract_strided_slice %78 {offsets = [0, 0], sizes = [8, 128], strides = [1, 1]} : vector<18x128xf32> to vector<8x128xf32>
    %c1_103 = arith.constant 1 : index
    %c0_104 = arith.constant 0 : index
    %80 = vector.load %arg35[%c1_103, %c0_104] : memref<20x128xf32, #tpu.memory_space<vmem>>, vector<8x128xf32>
    tpu.vector_store %arg35[%c1_103, %c0_104], %79 {strides = array<i32>} : memref<20x128xf32, #tpu.memory_space<vmem>>, vector<8x128xf32>,
    %81 = vector.extract_strided_slice %78 {offsets = [10, 0], sizes = [8, 128], strides = [1, 1]} : vector<18x128xf32> to vector<8x128xf32>
    %c11_105 = arith.constant 11 : index
    %c0_106 = arith.constant 0 : index
    %82 = vector.load %arg35[%c11_105, %c0_106] : memref<20x128xf32, #tpu.memory_space<vmem>>, vector<8x128xf32>
    tpu.vector_store %arg35[%c11_105, %c0_106], %81 {strides = array<i32>} : memref<20x128xf32, #tpu.memory_space<vmem>>, vector<8x128xf32>,
    %c0_107 = arith.constant 0 : index
    %c0_108 = arith.constant 0 : index
    %83 = vector.load %arg35[%c0_107, %c0_108] : memref<20x128xf32, #tpu.memory_space<vmem>>, vector<18x128xf32>
    %c1_109 = arith.constant 1 : index
    %c0_110 = arith.constant 0 : index
    %84 = vector.load %arg35[%c1_109, %c0_110] : memref<20x128xf32, #tpu.memory_space<vmem>>, vector<18x128xf32>
    %c2_111 = arith.constant 2 : index
    %c0_112 = arith.constant 0 : index
    %85 = vector.load %arg35[%c2_111, %c0_112] : memref<20x128xf32, #tpu.memory_space<vmem>>, vector<18x128xf32>
    %86 = tpu.concatenate %83, %84, %85 in 1 : vector<18x128xf32>, vector<18x128xf32>, vector<18x128xf32> -> vector<18x384xf32>
    %c0_113 = arith.constant 0 : index
    %c0_114 = arith.constant 0 : index
    %87 = vector.load %arg8[%c0_113, %c0_114] : memref<384x128xf32, #tpu.memory_space<vmem>>, vector<384x128xf32>
    %cst_115 = arith.constant dense<0.000000e+00> : vector<18x128xf32>
    %88 = tpu.matmul %86, %87, %cst_115 {dimension_numbers = #tpu.dot_dimension_numbers<[1], [0], [0], [1], [0, 0, 1, 1], [], []>} : vector<18x384xf32>, vector<384x128xf32>, vector<18x128xf32> -> vector<18x128xf32>
    %c0_116 = arith.constant 0 : index
    %c0_117 = arith.constant 0 : index
    %89 = vector.load %arg9[%c0_116, %c0_117] : memref<1x128xf32, #tpu.memory_space<vmem>>, vector<1x128xf32>
    %90 = vector.broadcast %89 : vector<1x128xf32> to vector<18x128xf32>
    %91 = arith.mulf %88, %90 : vector<18x128xf32>
    %c0_118 = arith.constant 0 : index
    %c0_119 = arith.constant 0 : index
    %92 = vector.load %arg10[%c0_118, %c0_119] : memref<1x128xf32, #tpu.memory_space<vmem>>, vector<1x128xf32>
    %93 = vector.broadcast %92 : vector<1x128xf32> to vector<18x128xf32>
    %94 = arith.addf %91, %93 : vector<18x128xf32>
    %cst_120 = arith.constant 0.000000e+00 : f32
    %95 = vector.broadcast %cst_120 : f32 to vector<18x128xf32>
    %96 = arith.maximumf %94, %95 : vector<18x128xf32>
    %97 = vector.extract_strided_slice %96 {offsets = [0, 0], sizes = [8, 128], strides = [1, 1]} : vector<18x128xf32> to vector<8x128xf32>
    %c1_121 = arith.constant 1 : index
    %c0_122 = arith.constant 0 : index
    %98 = vector.load %arg36[%c1_121, %c0_122] : memref<20x128xf32, #tpu.memory_space<vmem>>, vector<8x128xf32>
    tpu.vector_store %arg36[%c1_121, %c0_122], %97 {strides = array<i32>} : memref<20x128xf32, #tpu.memory_space<vmem>>, vector<8x128xf32>,
    %99 = vector.extract_strided_slice %96 {offsets = [10, 0], sizes = [8, 128], strides = [1, 1]} : vector<18x128xf32> to vector<8x128xf32>
    %c11_123 = arith.constant 11 : index
    %c0_124 = arith.constant 0 : index
    %100 = vector.load %arg36[%c11_123, %c0_124] : memref<20x128xf32, #tpu.memory_space<vmem>>, vector<8x128xf32>
    tpu.vector_store %arg36[%c11_123, %c0_124], %99 {strides = array<i32>} : memref<20x128xf32, #tpu.memory_space<vmem>>, vector<8x128xf32>,
    %c0_125 = arith.constant 0 : index
    %c0_126 = arith.constant 0 : index
    %101 = vector.load %arg36[%c0_125, %c0_126] : memref<20x128xf32, #tpu.memory_space<vmem>>, vector<18x128xf32>
    %c1_127 = arith.constant 1 : index
    %c0_128 = arith.constant 0 : index
    %102 = vector.load %arg36[%c1_127, %c0_128] : memref<20x128xf32, #tpu.memory_space<vmem>>, vector<18x128xf32>
    %c2_129 = arith.constant 2 : index
    %c0_130 = arith.constant 0 : index
    %103 = vector.load %arg36[%c2_129, %c0_130] : memref<20x128xf32, #tpu.memory_space<vmem>>, vector<18x128xf32>
    %104 = tpu.concatenate %101, %102, %103 in 1 : vector<18x128xf32>, vector<18x128xf32>, vector<18x128xf32> -> vector<18x384xf32>
    %c0_131 = arith.constant 0 : index
    %c0_132 = arith.constant 0 : index
    %105 = vector.load %arg14[%c0_131, %c0_132] : memref<8x18xf32, #tpu.memory_space<vmem>>, vector<8x18xf32>
    %cst_133 = arith.constant dense<0.000000e+00> : vector<8x384xf32>
    %106 = tpu.matmul %105, %104, %cst_133 {dimension_numbers = #tpu.dot_dimension_numbers<[1], [0], [0], [1], [0, 0, 1, 1], [], []>} : vector<8x18xf32>, vector<18x384xf32>, vector<8x384xf32> -> vector<8x384xf32>
    %c0_134 = arith.constant 0 : index
    %c0_135 = arith.constant 0 : index
    %107 = vector.load %arg11[%c0_134, %c0_135] : memref<384x128xf32, #tpu.memory_space<vmem>>, vector<384x128xf32>
    %cst_136 = arith.constant dense<0.000000e+00> : vector<8x128xf32>
    %108 = tpu.matmul %106, %107, %cst_136 {dimension_numbers = #tpu.dot_dimension_numbers<[1], [0], [0], [1], [0, 0, 1, 1], [], []>} : vector<8x384xf32>, vector<384x128xf32>, vector<8x128xf32> -> vector<8x128xf32>
    %c0_137 = arith.constant 0 : index
    %c0_138 = arith.constant 0 : index
    %109 = vector.load %arg12[%c0_137, %c0_138] : memref<1x128xf32, #tpu.memory_space<vmem>>, vector<1x128xf32>
    %110 = vector.broadcast %109 : vector<1x128xf32> to vector<8x128xf32>
    %111 = arith.mulf %108, %110 : vector<8x128xf32>
    %c0_139 = arith.constant 0 : index
    %c0_140 = arith.constant 0 : index
    %112 = vector.load %arg13[%c0_139, %c0_140] : memref<1x128xf32, #tpu.memory_space<vmem>>, vector<1x128xf32>
    %113 = vector.broadcast %112 : vector<1x128xf32> to vector<8x128xf32>
    %114 = arith.addf %111, %113 : vector<8x128xf32>
    %cst_141 = arith.constant 0.000000e+00 : f32
    %115 = vector.broadcast %cst_141 : f32 to vector<8x128xf32>
    %116 = arith.maximumf %114, %115 : vector<8x128xf32>
    %117 = vector.extract_strided_slice %116 {offsets = [0, 0], sizes = [4, 128], strides = [1, 1]} : vector<8x128xf32> to vector<4x128xf32>
    %c1_142 = arith.constant 1 : index
    %c0_143 = arith.constant 0 : index
    %118 = vector.load %arg37[%c1_142, %c0_143] : memref<12x128xf32, #tpu.memory_space<vmem>>, vector<4x128xf32>
    tpu.vector_store %arg37[%c1_142, %c0_143], %117 {strides = array<i32>} : memref<12x128xf32, #tpu.memory_space<vmem>>, vector<4x128xf32>,
    %119 = vector.extract_strided_slice %116 {offsets = [4, 0], sizes = [4, 128], strides = [1, 1]} : vector<8x128xf32> to vector<4x128xf32>
    %c7_144 = arith.constant 7 : index
    %c0_145 = arith.constant 0 : index
    %120 = vector.load %arg37[%c7_144, %c0_145] : memref<12x128xf32, #tpu.memory_space<vmem>>, vector<4x128xf32>
    tpu.vector_store %arg37[%c7_144, %c0_145], %119 {strides = array<i32>} : memref<12x128xf32, #tpu.memory_space<vmem>>, vector<4x128xf32>,
    %c0_146 = arith.constant 0 : index
    %c0_147 = arith.constant 0 : index
    %121 = vector.load %arg37[%c0_146, %c0_147] : memref<12x128xf32, #tpu.memory_space<vmem>>, vector<10x128xf32>
    %c1_148 = arith.constant 1 : index
    %c0_149 = arith.constant 0 : index
    %122 = vector.load %arg37[%c1_148, %c0_149] : memref<12x128xf32, #tpu.memory_space<vmem>>, vector<10x128xf32>
    %c2_150 = arith.constant 2 : index
    %c0_151 = arith.constant 0 : index
    %123 = vector.load %arg37[%c2_150, %c0_151] : memref<12x128xf32, #tpu.memory_space<vmem>>, vector<10x128xf32>
    %124 = tpu.concatenate %121, %122, %123 in 1 : vector<10x128xf32>, vector<10x128xf32>, vector<10x128xf32> -> vector<10x384xf32>
    %c0_152 = arith.constant 0 : index
    %c0_153 = arith.constant 0 : index
    %125 = vector.load %arg15[%c0_152, %c0_153] : memref<384x128xf32, #tpu.memory_space<vmem>>, vector<384x128xf32>
    %cst_154 = arith.constant dense<0.000000e+00> : vector<10x128xf32>
    %126 = tpu.matmul %124, %125, %cst_154 {dimension_numbers = #tpu.dot_dimension_numbers<[1], [0], [0], [1], [0, 0, 1, 1], [], []>} : vector<10x384xf32>, vector<384x128xf32>, vector<10x128xf32> -> vector<10x128xf32>
    %c0_155 = arith.constant 0 : index
    %c0_156 = arith.constant 0 : index
    %127 = vector.load %arg16[%c0_155, %c0_156] : memref<1x128xf32, #tpu.memory_space<vmem>>, vector<1x128xf32>
    %128 = vector.broadcast %127 : vector<1x128xf32> to vector<10x128xf32>
    %129 = arith.mulf %126, %128 : vector<10x128xf32>
    %c0_157 = arith.constant 0 : index
    %c0_158 = arith.constant 0 : index
    %130 = vector.load %arg17[%c0_157, %c0_158] : memref<1x128xf32, #tpu.memory_space<vmem>>, vector<1x128xf32>
    %131 = vector.broadcast %130 : vector<1x128xf32> to vector<10x128xf32>
    %132 = arith.addf %129, %131 : vector<10x128xf32>
    %cst_159 = arith.constant 0.000000e+00 : f32
    %133 = vector.broadcast %cst_159 : f32 to vector<10x128xf32>
    %134 = arith.maximumf %132, %133 : vector<10x128xf32>
    %135 = vector.extract_strided_slice %134 {offsets = [0, 0], sizes = [4, 128], strides = [1, 1]} : vector<10x128xf32> to vector<4x128xf32>
    %c1_160 = arith.constant 1 : index
    %c0_161 = arith.constant 0 : index
    %136 = vector.load %arg38[%c1_160, %c0_161] : memref<12x128xf32, #tpu.memory_space<vmem>>, vector<4x128xf32>
    tpu.vector_store %arg38[%c1_160, %c0_161], %135 {strides = array<i32>} : memref<12x128xf32, #tpu.memory_space<vmem>>, vector<4x128xf32>,
    %137 = vector.extract_strided_slice %134 {offsets = [6, 0], sizes = [4, 128], strides = [1, 1]} : vector<10x128xf32> to vector<4x128xf32>
    %c7_162 = arith.constant 7 : index
    %c0_163 = arith.constant 0 : index
    %138 = vector.load %arg38[%c7_162, %c0_163] : memref<12x128xf32, #tpu.memory_space<vmem>>, vector<4x128xf32>
    tpu.vector_store %arg38[%c7_162, %c0_163], %137 {strides = array<i32>} : memref<12x128xf32, #tpu.memory_space<vmem>>, vector<4x128xf32>,
    %c0_164 = arith.constant 0 : index
    %c0_165 = arith.constant 0 : index
    %139 = vector.load %arg38[%c0_164, %c0_165] : memref<12x128xf32, #tpu.memory_space<vmem>>, vector<10x128xf32>
    %c1_166 = arith.constant 1 : index
    %c0_167 = arith.constant 0 : index
    %140 = vector.load %arg38[%c1_166, %c0_167] : memref<12x128xf32, #tpu.memory_space<vmem>>, vector<10x128xf32>
    %c2_168 = arith.constant 2 : index
    %c0_169 = arith.constant 0 : index
    %141 = vector.load %arg38[%c2_168, %c0_169] : memref<12x128xf32, #tpu.memory_space<vmem>>, vector<10x128xf32>
    %142 = tpu.concatenate %139, %140, %141 in 1 : vector<10x128xf32>, vector<10x128xf32>, vector<10x128xf32> -> vector<10x384xf32>
    %c0_170 = arith.constant 0 : index
    %c0_171 = arith.constant 0 : index
    %143 = vector.load %arg18[%c0_170, %c0_171] : memref<384x128xf32, #tpu.memory_space<vmem>>, vector<384x128xf32>
    %cst_172 = arith.constant dense<0.000000e+00> : vector<10x128xf32>
    %144 = tpu.matmul %142, %143, %cst_172 {dimension_numbers = #tpu.dot_dimension_numbers<[1], [0], [0], [1], [0, 0, 1, 1], [], []>} : vector<10x384xf32>, vector<384x128xf32>, vector<10x128xf32> -> vector<10x128xf32>
    %c0_173 = arith.constant 0 : index
    %c0_174 = arith.constant 0 : index
    %145 = vector.load %arg19[%c0_173, %c0_174] : memref<1x128xf32, #tpu.memory_space<vmem>>, vector<1x128xf32>
    %146 = vector.broadcast %145 : vector<1x128xf32> to vector<10x128xf32>
    %147 = arith.mulf %144, %146 : vector<10x128xf32>
    %c0_175 = arith.constant 0 : index
    %c0_176 = arith.constant 0 : index
    %148 = vector.load %arg20[%c0_175, %c0_176] : memref<1x128xf32, #tpu.memory_space<vmem>>, vector<1x128xf32>
    %149 = vector.broadcast %148 : vector<1x128xf32> to vector<10x128xf32>
    %150 = arith.addf %147, %149 : vector<10x128xf32>
    %cst_177 = arith.constant 0.000000e+00 : f32
    %151 = vector.broadcast %cst_177 : f32 to vector<10x128xf32>
    %152 = arith.maximumf %150, %151 : vector<10x128xf32>
    %153 = vector.extract_strided_slice %152 {offsets = [0, 0], sizes = [4, 128], strides = [1, 1]} : vector<10x128xf32> to vector<4x128xf32>
    %c1_178 = arith.constant 1 : index
    %c0_179 = arith.constant 0 : index
    %154 = vector.load %arg39[%c1_178, %c0_179] : memref<12x128xf32, #tpu.memory_space<vmem>>, vector<4x128xf32>
    tpu.vector_store %arg39[%c1_178, %c0_179], %153 {strides = array<i32>} : memref<12x128xf32, #tpu.memory_space<vmem>>, vector<4x128xf32>,
    %155 = vector.extract_strided_slice %152 {offsets = [6, 0], sizes = [4, 128], strides = [1, 1]} : vector<10x128xf32> to vector<4x128xf32>
    %c7_180 = arith.constant 7 : index
    %c0_181 = arith.constant 0 : index
    %156 = vector.load %arg39[%c7_180, %c0_181] : memref<12x128xf32, #tpu.memory_space<vmem>>, vector<4x128xf32>
    tpu.vector_store %arg39[%c7_180, %c0_181], %155 {strides = array<i32>} : memref<12x128xf32, #tpu.memory_space<vmem>>, vector<4x128xf32>,
    %c0_182 = arith.constant 0 : index
    %c0_183 = arith.constant 0 : index
    %157 = vector.load %arg39[%c0_182, %c0_183] : memref<12x128xf32, #tpu.memory_space<vmem>>, vector<10x128xf32>
    %c1_184 = arith.constant 1 : index
    %c0_185 = arith.constant 0 : index
    %158 = vector.load %arg39[%c1_184, %c0_185] : memref<12x128xf32, #tpu.memory_space<vmem>>, vector<10x128xf32>
    %c2_186 = arith.constant 2 : index
    %c0_187 = arith.constant 0 : index
    %159 = vector.load %arg39[%c2_186, %c0_187] : memref<12x128xf32, #tpu.memory_space<vmem>>, vector<10x128xf32>
    %160 = tpu.concatenate %157, %158, %159 in 1 : vector<10x128xf32>, vector<10x128xf32>, vector<10x128xf32> -> vector<10x384xf32>
    %c0_188 = arith.constant 0 : index
    %c0_189 = arith.constant 0 : index
    %161 = vector.load %arg21[%c0_188, %c0_189] : memref<384x128xf32, #tpu.memory_space<vmem>>, vector<384x128xf32>
    %cst_190 = arith.constant dense<0.000000e+00> : vector<10x128xf32>
    %162 = tpu.matmul %160, %161, %cst_190 {dimension_numbers = #tpu.dot_dimension_numbers<[1], [0], [0], [1], [0, 0, 1, 1], [], []>} : vector<10x384xf32>, vector<384x128xf32>, vector<10x128xf32> -> vector<10x128xf32>
    %c0_191 = arith.constant 0 : index
    %c0_192 = arith.constant 0 : index
    %163 = vector.load %arg22[%c0_191, %c0_192] : memref<1x128xf32, #tpu.memory_space<vmem>>, vector<1x128xf32>
    %164 = vector.broadcast %163 : vector<1x128xf32> to vector<10x128xf32>
    %165 = arith.mulf %162, %164 : vector<10x128xf32>
    %c0_193 = arith.constant 0 : index
    %c0_194 = arith.constant 0 : index
    %166 = vector.load %arg23[%c0_193, %c0_194] : memref<1x128xf32, #tpu.memory_space<vmem>>, vector<1x128xf32>
    %167 = vector.broadcast %166 : vector<1x128xf32> to vector<10x128xf32>
    %168 = arith.addf %165, %167 : vector<10x128xf32>
    %cst_195 = arith.constant 0.000000e+00 : f32
    %169 = vector.broadcast %cst_195 : f32 to vector<10x128xf32>
    %170 = arith.maximumf %168, %169 : vector<10x128xf32>
    %171 = vector.extract_strided_slice %170 {offsets = [0, 0], sizes = [4, 128], strides = [1, 1]} : vector<10x128xf32> to vector<4x128xf32>
    %c1_196 = arith.constant 1 : index
    %c0_197 = arith.constant 0 : index
    %172 = vector.load %arg40[%c1_196, %c0_197] : memref<12x128xf32, #tpu.memory_space<vmem>>, vector<4x128xf32>
    tpu.vector_store %arg40[%c1_196, %c0_197], %171 {strides = array<i32>} : memref<12x128xf32, #tpu.memory_space<vmem>>, vector<4x128xf32>,
    %173 = vector.extract_strided_slice %170 {offsets = [6, 0], sizes = [4, 128], strides = [1, 1]} : vector<10x128xf32> to vector<4x128xf32>
    %c7_198 = arith.constant 7 : index
    %c0_199 = arith.constant 0 : index
    %174 = vector.load %arg40[%c7_198, %c0_199] : memref<12x128xf32, #tpu.memory_space<vmem>>, vector<4x128xf32>
    tpu.vector_store %arg40[%c7_198, %c0_199], %173 {strides = array<i32>} : memref<12x128xf32, #tpu.memory_space<vmem>>, vector<4x128xf32>,
    %c0_200 = arith.constant 0 : index
    %c0_201 = arith.constant 0 : index
    %175 = vector.load %arg40[%c0_200, %c0_201] : memref<12x128xf32, #tpu.memory_space<vmem>>, vector<10x128xf32>
    %c1_202 = arith.constant 1 : index
    %c0_203 = arith.constant 0 : index
    %176 = vector.load %arg40[%c1_202, %c0_203] : memref<12x128xf32, #tpu.memory_space<vmem>>, vector<10x128xf32>
    %c2_204 = arith.constant 2 : index
    %c0_205 = arith.constant 0 : index
    %177 = vector.load %arg40[%c2_204, %c0_205] : memref<12x128xf32, #tpu.memory_space<vmem>>, vector<10x128xf32>
    %178 = tpu.concatenate %175, %176, %177 in 1 : vector<10x128xf32>, vector<10x128xf32>, vector<10x128xf32> -> vector<10x384xf32>
    %c0_206 = arith.constant 0 : index
    %c0_207 = arith.constant 0 : index
    %179 = vector.load %arg27[%c0_206, %c0_207] : memref<4x10xf32, #tpu.memory_space<vmem>>, vector<4x10xf32>
    %cst_208 = arith.constant dense<0.000000e+00> : vector<4x384xf32>
    %180 = tpu.matmul %179, %178, %cst_208 {dimension_numbers = #tpu.dot_dimension_numbers<[1], [0], [0], [1], [0, 0, 1, 1], [], []>} : vector<4x10xf32>, vector<10x384xf32>, vector<4x384xf32> -> vector<4x384xf32>
    %c0_209 = arith.constant 0 : index
    %c0_210 = arith.constant 0 : index
    %181 = vector.load %arg24[%c0_209, %c0_210] : memref<384x128xf32, #tpu.memory_space<vmem>>, vector<384x128xf32>
    %cst_211 = arith.constant dense<0.000000e+00> : vector<4x128xf32>
    %182 = tpu.matmul %180, %181, %cst_211 {dimension_numbers = #tpu.dot_dimension_numbers<[1], [0], [0], [1], [0, 0, 1, 1], [], []>} : vector<4x384xf32>, vector<384x128xf32>, vector<4x128xf32> -> vector<4x128xf32>
    %c0_212 = arith.constant 0 : index
    %c0_213 = arith.constant 0 : index
    %183 = vector.load %arg25[%c0_212, %c0_213] : memref<1x128xf32, #tpu.memory_space<vmem>>, vector<1x128xf32>
    %184 = vector.broadcast %183 : vector<1x128xf32> to vector<4x128xf32>
    %185 = arith.mulf %182, %184 : vector<4x128xf32>
    %c0_214 = arith.constant 0 : index
    %c0_215 = arith.constant 0 : index
    %186 = vector.load %arg26[%c0_214, %c0_215] : memref<1x128xf32, #tpu.memory_space<vmem>>, vector<1x128xf32>
    %187 = vector.broadcast %186 : vector<1x128xf32> to vector<4x128xf32>
    %188 = arith.addf %185, %187 : vector<4x128xf32>
    %cst_216 = arith.constant 0.000000e+00 : f32
    %189 = vector.broadcast %cst_216 : f32 to vector<4x128xf32>
    %190 = arith.maximumf %188, %189 : vector<4x128xf32>
    %191 = vector.extract_strided_slice %190 {offsets = [0, 0], sizes = [2, 128], strides = [1, 1]} : vector<4x128xf32> to vector<2x128xf32>
    %c1_217 = arith.constant 1 : index
    %c0_218 = arith.constant 0 : index
    %192 = vector.load %arg41[%c1_217, %c0_218] : memref<8x128xf32, #tpu.memory_space<vmem>>, vector<2x128xf32>
    tpu.vector_store %arg41[%c1_217, %c0_218], %191 {strides = array<i32>} : memref<8x128xf32, #tpu.memory_space<vmem>>, vector<2x128xf32>,
    %193 = vector.extract_strided_slice %190 {offsets = [2, 0], sizes = [2, 128], strides = [1, 1]} : vector<4x128xf32> to vector<2x128xf32>
    %c5_219 = arith.constant 5 : index
    %c0_220 = arith.constant 0 : index
    %194 = vector.load %arg41[%c5_219, %c0_220] : memref<8x128xf32, #tpu.memory_space<vmem>>, vector<2x128xf32>
    tpu.vector_store %arg41[%c5_219, %c0_220], %193 {strides = array<i32>} : memref<8x128xf32, #tpu.memory_space<vmem>>, vector<2x128xf32>,
    %c0_221 = arith.constant 0 : index
    %c0_222 = arith.constant 0 : index
    %195 = vector.load %arg41[%c0_221, %c0_222] : memref<8x128xf32, #tpu.memory_space<vmem>>, vector<6x128xf32>
    %c1_223 = arith.constant 1 : index
    %c0_224 = arith.constant 0 : index
    %196 = vector.load %arg41[%c1_223, %c0_224] : memref<8x128xf32, #tpu.memory_space<vmem>>, vector<6x128xf32>
    %c2_225 = arith.constant 2 : index
    %c0_226 = arith.constant 0 : index
    %197 = vector.load %arg41[%c2_225, %c0_226] : memref<8x128xf32, #tpu.memory_space<vmem>>, vector<6x128xf32>
    %198 = tpu.concatenate %195, %196, %197 in 1 : vector<6x128xf32>, vector<6x128xf32>, vector<6x128xf32> -> vector<6x384xf32>
    %c0_227 = arith.constant 0 : index
    %c0_228 = arith.constant 0 : index
    %199 = vector.load %arg28[%c0_227, %c0_228] : memref<384x128xf32, #tpu.memory_space<vmem>>, vector<384x128xf32>
    %cst_229 = arith.constant dense<0.000000e+00> : vector<6x128xf32>
    %200 = tpu.matmul %198, %199, %cst_229 {dimension_numbers = #tpu.dot_dimension_numbers<[1], [0], [0], [1], [0, 0, 1, 1], [], []>} : vector<6x384xf32>, vector<384x128xf32>, vector<6x128xf32> -> vector<6x128xf32>
    %c0_230 = arith.constant 0 : index
    %c0_231 = arith.constant 0 : index
    %201 = vector.load %arg29[%c0_230, %c0_231] : memref<1x128xf32, #tpu.memory_space<vmem>>, vector<1x128xf32>
    %202 = vector.broadcast %201 : vector<1x128xf32> to vector<6x128xf32>
    %203 = arith.mulf %200, %202 : vector<6x128xf32>
    %c0_232 = arith.constant 0 : index
    %c0_233 = arith.constant 0 : index
    %204 = vector.load %arg30[%c0_232, %c0_233] : memref<1x128xf32, #tpu.memory_space<vmem>>, vector<1x128xf32>
    %205 = vector.broadcast %204 : vector<1x128xf32> to vector<6x128xf32>
    %206 = arith.addf %203, %205 : vector<6x128xf32>
    %cst_234 = arith.constant 0.000000e+00 : f32
    %207 = vector.broadcast %cst_234 : f32 to vector<6x128xf32>
    %208 = arith.maximumf %206, %207 : vector<6x128xf32>
    %209 = vector.extract_strided_slice %208 {offsets = [0, 0], sizes = [2, 128], strides = [1, 1]} : vector<6x128xf32> to vector<2x128xf32>
    %c1_235 = arith.constant 1 : index
    %c0_236 = arith.constant 0 : index
    %210 = vector.load %arg42[%c1_235, %c0_236] : memref<8x128xf32, #tpu.memory_space<vmem>>, vector<2x128xf32>
    tpu.vector_store %arg42[%c1_235, %c0_236], %209 {strides = array<i32>} : memref<8x128xf32, #tpu.memory_space<vmem>>, vector<2x128xf32>,
    %211 = vector.extract_strided_slice %208 {offsets = [4, 0], sizes = [2, 128], strides = [1, 1]} : vector<6x128xf32> to vector<2x128xf32>
    %c5_237 = arith.constant 5 : index
    %c0_238 = arith.constant 0 : index
    %212 = vector.load %arg42[%c5_237, %c0_238] : memref<8x128xf32, #tpu.memory_space<vmem>>, vector<2x128xf32>
    tpu.vector_store %arg42[%c5_237, %c0_238], %211 {strides = array<i32>} : memref<8x128xf32, #tpu.memory_space<vmem>>, vector<2x128xf32>,
    %c1_239 = arith.constant 1 : index
    %c0_240 = arith.constant 0 : index
    %213 = vector.load %arg42[%c1_239, %c0_240] : memref<8x128xf32, #tpu.memory_space<vmem>>, vector<2x128xf32>
    %cst_241 = arith.constant dense<0.000000e+00> : vector<128xf32>
    %214 = vector.multi_reduction <add>, %213, %cst_241 [0] : vector<2x128xf32> to vector<128xf32>
    %215 = vector.shape_cast %214 : vector<128xf32> to vector<1x128xf32>
    %c5_242 = arith.constant 5 : index
    %c0_243 = arith.constant 0 : index
    %216 = vector.load %arg42[%c5_242, %c0_243] : memref<8x128xf32, #tpu.memory_space<vmem>>, vector<2x128xf32>
    %cst_244 = arith.constant dense<0.000000e+00> : vector<128xf32>
    %217 = vector.multi_reduction <add>, %216, %cst_244 [0] : vector<2x128xf32> to vector<128xf32>
    %218 = vector.shape_cast %217 : vector<128xf32> to vector<1x128xf32>
    %219 = tpu.concatenate %215, %218 in 0 : vector<1x128xf32>, vector<1x128xf32> -> vector<2x128xf32>
    %c0_245 = arith.constant 0 : index
    %c0_246 = arith.constant 0 : index
    %220 = vector.load %arg31[%c0_245, %c0_246] : memref<128x10xf32, #tpu.memory_space<vmem>>, vector<128x10xf32>
    %cst_247 = arith.constant dense<0.000000e+00> : vector<2x10xf32>
    %221 = tpu.matmul %219, %220, %cst_247 {dimension_numbers = #tpu.dot_dimension_numbers<[1], [0], [0], [1], [0, 0, 1, 1], [], []>} : vector<2x128xf32>, vector<128x10xf32>, vector<2x10xf32> -> vector<2x10xf32>
    %c0_248 = arith.constant 0 : index
    %c0_249 = arith.constant 0 : index
    %222 = vector.load %arg32[%c0_248, %c0_249] : memref<1x10xf32, #tpu.memory_space<vmem>>, vector<1x10xf32>
    %223 = vector.broadcast %222 : vector<1x10xf32> to vector<2x10xf32>
    %224 = arith.addf %221, %223 : vector<2x10xf32>
    %c0_250 = arith.constant 0 : index
    %c0_251 = arith.constant 0 : index
    %225 = vector.load %arg33[%c0_250, %c0_251] : memref<2x10xf32, #tpu.memory_space<vmem>>, vector<2x10xf32>
    tpu.vector_store %arg33[%c0_250, %c0_251], %224 {strides = array<i32>} : memref<2x10xf32, #tpu.memory_space<vmem>>, vector<2x10xf32>,
    return
  }
}

</mosaic_0001>

<llo_original>
// kernel: _lambda_.1
$region0: #{_lambda_.1}
  #allocation0 [shape = 'u32[]', space=smem, size = 0x4, offset = 0x4, fixed_abs, tag = 'smem constant byte address 0x4 - core index']
  #allocation1 [shape = 'u32[144,128]{1,0:T(1,128)}', space=vmem, size = 0x12000, scoped, tag = 'internal scratch']
  #allocation2 [shape = 'f32[20,128]{1,0:T(8,128)}', space=vmem, size = 0x3000, scoped, tag = 'scratch operand']
  #allocation3 [shape = 'f32[20,128]{1,0:T(8,128)}', space=vmem, size = 0x3000, scoped, tag = 'scratch operand']
  #allocation4 [shape = 'f32[20,128]{1,0:T(8,128)}', space=vmem, size = 0x3000, scoped, tag = 'scratch operand']
  #allocation5 [shape = 'f32[12,128]{1,0:T(8,128)}', space=vmem, size = 0x2000, scoped, tag = 'scratch operand']
  #allocation6 [shape = 'f32[12,128]{1,0:T(8,128)}', space=vmem, size = 0x2000, scoped, tag = 'scratch operand']
  #allocation7 [shape = 'f32[12,128]{1,0:T(8,128)}', space=vmem, size = 0x2000, scoped, tag = 'scratch operand']
  #allocation8 [shape = 'f32[12,128]{1,0:T(8,128)}', space=vmem, size = 0x2000, scoped, tag = 'scratch operand']
  #allocation9 [shape = 'f32[8,128]{1,0:T(8,128)}', space=vmem, size = 0x1000, scoped, tag = 'scratch operand']
  #allocation10 [shape = 'f32[8,128]{1,0:T(8,128)}', space=vmem, size = 0x1000, scoped, tag = 'scratch operand']
  %s0 = inlined_call_operand.smem [shape: u32[34], index: -1, kind: input, shape index: {}]
  %s1 = sld [smem:[%s0]]
  %s2 = scalar_lea.smem %s0, 1
  %s3 = sld [smem:[%s2]]
  %s4 = scalar_lea.smem %s0, 2
  %s5 = sld [smem:[%s4]]
  %s6 = scalar_lea.smem %s0, 3
  %s7 = sld [smem:[%s6]]
  %s8 = scalar_lea.smem %s0, 4
  %s9 = sld [smem:[%s8]]
  %s10 = scalar_lea.smem %s0, 5
  %s11 = sld [smem:[%s10]]
  %s12 = scalar_lea.smem %s0, 6
  %s13 = sld [smem:[%s12]]
  %s14 = scalar_lea.smem %s0, 7
  %s15 = sld [smem:[%s14]]
  %s16 = scalar_lea.smem %s0, 8
  %s17 = sld [smem:[%s16]]
  %s18 = scalar_lea.smem %s0, 9
  %s19 = sld [smem:[%s18]]
  %s20 = scalar_lea.smem %s0, 10
  %s21 = sld [smem:[%s20]]
  %s22 = scalar_lea.smem %s0, 11
  %s23 = sld [smem:[%s22]]
  %s24 = scalar_lea.smem %s0, 12
  %s25 = sld [smem:[%s24]]
  %s26 = scalar_lea.smem %s0, 13
  %s27 = sld [smem:[%s26]]
  %s28 = scalar_lea.smem %s0, 14
  %s29 = sld [smem:[%s28]]
  %s30 = scalar_lea.smem %s0, 15
  %s31 = sld [smem:[%s30]]
  %s32 = scalar_lea.smem %s0, 16
  %s33 = sld [smem:[%s32]]
  %s34 = scalar_lea.smem %s0, 17
  %s35 = sld [smem:[%s34]]
  %s36 = scalar_lea.smem %s0, 18
  %s37 = sld [smem:[%s36]]
  %s38 = scalar_lea.smem %s0, 19
  %s39 = sld [smem:[%s38]]
  %s40 = scalar_lea.smem %s0, 20
  %s41 = sld [smem:[%s40]]
  %s42 = scalar_lea.smem %s0, 21
  %s43 = sld [smem:[%s42]]
  %s44 = scalar_lea.smem %s0, 22
  %s45 = sld [smem:[%s44]]
  %s46 = scalar_lea.smem %s0, 23
  %s47 = sld [smem:[%s46]]
  %s48 = scalar_lea.smem %s0, 24
  %s49 = sld [smem:[%s48]]
  %s50 = scalar_lea.smem %s0, 25
  %s51 = sld [smem:[%s50]]
  %s52 = scalar_lea.smem %s0, 26
  %s53 = sld [smem:[%s52]]
  %s54 = scalar_lea.smem %s0, 27
  %s55 = sld [smem:[%s54]]
  %s56 = scalar_lea.smem %s0, 28
  %s57 = sld [smem:[%s56]]
  %s58 = scalar_lea.smem %s0, 29
  %s59 = sld [smem:[%s58]]
  %s60 = scalar_lea.smem %s0, 30
  %s61 = sld [smem:[%s60]]
  %s62 = scalar_lea.smem %s0, 31
  %s63 = sld [smem:[%s62]]
  %s64 = scalar_lea.smem %s0, 32
  %s65 = sld [smem:[%s64]]
  %s66 = scalar_lea.smem %s0, 33
  %s67 = sld [smem:[%s66]]
  %s68 = sld [smem:[#allocation0]]
  $region170: #{_lambda_.1} parent=0
    _
  %s70 = ssub.s32 1, %s68
  %s71 = scalar_select 0, %s70, %s68
  $region1: #{_lambda_.1} parent=0
    #allocation11 [shape = 'u8[196608]{0}', space=vmem, size = 0x30000, scoped, tag = 'input window, operand 5, single buffered']
    #allocation12 [shape = 's32[1]{0}', space=sflag, size = 0x4, scoped, tag = 'scoped memory for _lambda_.1']
    #allocation13 [shape = 's32[1]{0}', space=sflag, size = 0x4, scoped, tag = 'scoped memory for _lambda_.1']
    #allocation14 [shape = 'u8[196608]{0}', space=vmem, size = 0x30000, scoped, tag = 'input window, operand 8, single buffered']
    #allocation15 [shape = 's32[1]{0}', space=sflag, size = 0x4, scoped, tag = 'scoped memory for _lambda_.1']
    #allocation16 [shape = 'u8[196608]{0}', space=vmem, size = 0x30000, scoped, tag = 'input window, operand 11, single buffered']
    #allocation17 [shape = 'u8[196608]{0}', space=vmem, size = 0x30000, scoped, tag = 'input window, operand 15, single buffered']
    #allocation18 [shape = 's32[1]{0}', space=sflag, size = 0x4, scoped, tag = 'scoped memory for _lambda_.1']
    #allocation19 [shape = 'u8[196608]{0}', space=vmem, size = 0x30000, scoped, tag = 'input window, operand 18, single buffered']
    #allocation20 [shape = 'u8[196608]{0}', space=vmem, size = 0x30000, scoped, tag = 'input window, operand 21, single buffered']
    #allocation21 [shape = 's32[1]{0}', space=sflag, size = 0x4, scoped, tag = 'scoped memory for _lambda_.1']
    #allocation22 [shape = 'u8[196608]{0}', space=vmem, size = 0x30000, scoped, tag = 'input window, operand 24, single buffered']
    #allocation23 [shape = 'u8[1024]{0}', space=vmem, size = 0x400, scoped, tag = 'output window, operand 0, single buffered']
    %72 = vsyncpa [#allocation12], 0
    %73 = vsyncpa [#allocation15], 0
    %74 = vsyncpa [#allocation18], 0
    %75 = vsyncpa [#allocation21], 0
    %76 = vsyncpa [#allocation13], 0
    // Predicated region
    $region2: #{_lambda_.1} parent=1 // pred_check
      _
    $region3: #{_lambda_.1} parent=1 // pred_check_branch
      %78 = sbr.rel (0) target = $region5
    $region4: #{_lambda_.1} parent=1 // pred_region
      _
    $region5: #{_lambda_.1} parent=1 // pred_fallthru
      _
    // Predicated region
    $region6: #{_lambda_.1} parent=1 // pred_check
      _
    $region7: #{_lambda_.1} parent=1 // pred_check_branch
      %80 = sbr.rel (0) target = $region9
    $region8: #{_lambda_.1} parent=1 // pred_region
      _
    $region9: #{_lambda_.1} parent=1 // pred_fallthru
      _
    // Predicated region
    $region10: #{_lambda_.1} parent=1 // pred_check
      _
    $region11: #{_lambda_.1} parent=1 // pred_check_branch
      %82 = sbr.rel (0) target = $region13
    $region12: #{_lambda_.1} parent=1 // pred_region
      _
    $region13: #{_lambda_.1} parent=1 // pred_fallthru
      _
    // Predicated region
    $region14: #{_lambda_.1} parent=1 // pred_check
      _
    $region15: #{_lambda_.1} parent=1 // pred_check_branch
      %84 = sbr.rel (0) target = $region17
    $region16: #{_lambda_.1} parent=1 // pred_region
      _
    $region17: #{_lambda_.1} parent=1 // pred_fallthru
      _
    // Predicated region
    $region18: #{_lambda_.1} parent=1 // pred_check
      _
    $region19: #{_lambda_.1} parent=1 // pred_check_branch
      %86 = sbr.rel (0) target = $region21
    $region20: #{_lambda_.1} parent=1 // pred_region
      _
    $region21: #{_lambda_.1} parent=1 // pred_fallthru
      _
    // Predicated region
    $region22: #{_lambda_.1} parent=1 // pred_check
      _
    $region23: #{_lambda_.1} parent=1 // pred_check_branch
      %88 = sbr.rel (0) target = $region25
    $region24: #{_lambda_.1} parent=1 // pred_region
      %s90 = ssub.s32 6144, 6144
      %91 = vsyncadd [#allocation12], %s90
      %s92 = sshll.u32 [#allocation11], 4
      %s93 = int_to_ptr.vmem [resolvable:$true] %s92
      %98 = dma.hbm_to_vmem [thread:$0]  %s11, 6144, %s93, [#allocation12], 128, 128, 8
    $region25: #{_lambda_.1} parent=1 // pred_fallthru
      _
    // Predicated region
    $region26: #{_lambda_.1} parent=1 // pred_check
      _
    $region27: #{_lambda_.1} parent=1 // pred_check_branch
      %100 = sbr.rel (0) target = $region29
    $region28: #{_lambda_.1} parent=1 // pred_region
      _
    $region29: #{_lambda_.1} parent=1 // pred_fallthru
      _
    // Predicated region
    $region30: #{_lambda_.1} parent=1 // pred_check
      _
    $region31: #{_lambda_.1} parent=1 // pred_check_branch
      %102 = sbr.rel (0) target = $region33
    $region32: #{_lambda_.1} parent=1 // pred_region
      _
    $region33: #{_lambda_.1} parent=1 // pred_fallthru
      _
    // Predicated region
    $region34: #{_lambda_.1} parent=1 // pred_check
      _
    $region35: #{_lambda_.1} parent=1 // pred_check_branch
      %104 = sbr.rel (0) target = $region37
    $region36: #{_lambda_.1} parent=1 // pred_region
      %s106 = ssub.s32 6144, 6144
      %107 = vsyncadd [#allocation15], %s106
      %s108 = sshll.u32 [#allocation14], 4
      %s109 = int_to_ptr.vmem [resolvable:$true] %s108
      %114 = dma.hbm_to_vmem [thread:$0]  %s17, 6144, %s109, [#allocation15], 128, 128, 8
    $region37: #{_lambda_.1} parent=1 // pred_fallthru
      _
    // Predicated region
    $region38: #{_lambda_.1} parent=1 // pred_check
      _
    $region39: #{_lambda_.1} parent=1 // pred_check_branch
      %116 = sbr.rel (0) target = $region41
    $region40: #{_lambda_.1} parent=1 // pred_region
      _
    $region41: #{_lambda_.1} parent=1 // pred_fallthru
      _
    // Predicated region
    $region42: #{_lambda_.1} parent=1 // pred_check
      _
    $region43: #{_lambda_.1} parent=1 // pred_check_branch
      %118 = sbr.rel (0) target = $region45
    $region44: #{_lambda_.1} parent=1 // pred_region
      _
    $region45: #{_lambda_.1} parent=1 // pred_fallthru
      _
    // Predicated region
    $region46: #{_lambda_.1} parent=1 // pred_check
      _
    $region47: #{_lambda_.1} parent=1 // pred_check_branch
      %120 = sbr.rel (0) target = $region49
    $region48: #{_lambda_.1} parent=1 // pred_region
      %s122 = ssub.s32 6144, 6144
      %123 = vsyncadd [#allocation15], %s122
      %s124 = sshll.u32 [#allocation16], 4
      %s125 = int_to_ptr.vmem [resolvable:$true] %s124
      %130 = dma.hbm_to_vmem [thread:$0]  %s23, 6144, %s125, [#allocation15], 128, 128, 8
    $region49: #{_lambda_.1} parent=1 // pred_fallthru
      _
    // Predicated region
    $region50: #{_lambda_.1} parent=1 // pred_check
      _
    $region51: #{_lambda_.1} parent=1 // pred_check_branch
      %132 = sbr.rel (0) target = $region53
    $region52: #{_lambda_.1} parent=1 // pred_region
      _
    $region53: #{_lambda_.1} parent=1 // pred_fallthru
      _
    // Predicated region
    $region54: #{_lambda_.1} parent=1 // pred_check
      _
    $region55: #{_lambda_.1} parent=1 // pred_check_branch
      %134 = sbr.rel (0) target = $region57
    $region56: #{_lambda_.1} parent=1 // pred_region
      _
    $region57: #{_lambda_.1} parent=1 // pred_fallthru
      _
    // Predicated region
    $region58: #{_lambda_.1} parent=1 // pred_check
      _
    $region59: #{_lambda_.1} parent=1 // pred_check_branch
      %136 = sbr.rel (0) target = $region61
    $region60: #{_lambda_.1} parent=1 // pred_region
      _
    $region61: #{_lambda_.1} parent=1 // pred_fallthru
      _
    // Predicated region
    $region62: #{_lambda_.1} parent=1 // pred_check
      _
    $region63: #{_lambda_.1} parent=1 // pred_check_branch
      %138 = sbr.rel (0) target = $region65
    $region64: #{_lambda_.1} parent=1 // pred_region
      %s140 = ssub.s32 6144, 6144
      %141 = vsyncadd [#allocation18], %s140
      %s142 = sshll.u32 [#allocation17], 4
      %s143 = int_to_ptr.vmem [resolvable:$true] %s142
      %148 = dma.hbm_to_vmem [thread:$0]  %s31, 6144, %s143, [#allocation18], 128, 128, 8
    $region65: #{_lambda_.1} parent=1 // pred_fallthru
      _
    // Predicated region
    $region66: #{_lambda_.1} parent=1 // pred_check
      _
    $region67: #{_lambda_.1} parent=1 // pred_check_branch
      %150 = sbr.rel (0) target = $region69
    $region68: #{_lambda_.1} parent=1 // pred_region
      _
    $region69: #{_lambda_.1} parent=1 // pred_fallthru
      _
    // Predicated region
    $region70: #{_lambda_.1} parent=1 // pred_check
      _
    $region71: #{_lambda_.1} parent=1 // pred_check_branch
      %152 = sbr.rel (0) target = $region73
    $region72: #{_lambda_.1} parent=1 // pred_region
      _
    $region73: #{_lambda_.1} parent=1 // pred_fallthru
      _
    // Predicated region
    $region74: #{_lambda_.1} parent=1 // pred_check
      _
    $region75: #{_lambda_.1} parent=1 // pred_check_branch
      %154 = sbr.rel (0) target = $region77
    $region76: #{_lambda_.1} parent=1 // pred_region
      %s156 = ssub.s32 6144, 6144
      %157 = vsyncadd [#allocation18], %s156
      %s158 = sshll.u32 [#allocation19], 4
      %s159 = int_to_ptr.vmem [resolvable:$true] %s158
      %164 = dma.hbm_to_vmem [thread:$0]  %s37, 6144, %s159, [#allocation18], 128, 128, 8
    $region77: #{_lambda_.1} parent=1 // pred_fallthru
      _
    // Predicated region
    $region78: #{_lambda_.1} parent=1 // pred_check
      _
    $region79: #{_lambda_.1} parent=1 // pred_check_branch
      %166 = sbr.rel (0) target = $region81
    $region80: #{_lambda_.1} parent=1 // pred_region
      _
    $region81: #{_lambda_.1} parent=1 // pred_fallthru
      _
    // Predicated region
    $region82: #{_lambda_.1} parent=1 // pred_check
      _
    $region83: #{_lambda_.1} parent=1 // pred_check_branch
      %168 = sbr.rel (0) target = $region85
    $region84: #{_lambda_.1} parent=1 // pred_region
      _
    $region85: #{_lambda_.1} parent=1 // pred_fallthru
      _
    // Predicated region
    $region86: #{_lambda_.1} parent=1 // pred_check
      _
    $region87: #{_lambda_.1} parent=1 // pred_check_branch
      %170 = sbr.rel (0) target = $region89
    $region88: #{_lambda_.1} parent=1 // pred_region
      %s172 = ssub.s32 6144, 6144
      %173 = vsyncadd [#allocation21], %s172
      %s174 = sshll.u32 [#allocation20], 4
      %s175 = int_to_ptr.vmem [resolvable:$true] %s174
      %180 = dma.hbm_to_vmem [thread:$0]  %s43, 6144, %s175, [#allocation21], 128, 128, 8
    $region89: #{_lambda_.1} parent=1 // pred_fallthru
      _
    // Predicated region
    $region90: #{_lambda_.1} parent=1 // pred_check
      _
    $region91: #{_lambda_.1} parent=1 // pred_check_branch
      %182 = sbr.rel (0) target = $region93
    $region92: #{_lambda_.1} parent=1 // pred_region
      _
    $region93: #{_lambda_.1} parent=1 // pred_fallthru
      _
    // Predicated region
    $region94: #{_lambda_.1} parent=1 // pred_check
      _
    $region95: #{_lambda_.1} parent=1 // pred_check_branch
      %184 = sbr.rel (0) target = $region97
    $region96: #{_lambda_.1} parent=1 // pred_region
      _
    $region97: #{_lambda_.1} parent=1 // pred_fallthru
      _
    // Predicated region
    $region98: #{_lambda_.1} parent=1 // pred_check
      _
    $region99: #{_lambda_.1} parent=1 // pred_check_branch
      %186 = sbr.rel (0) target = $region101
    $region100: #{_lambda_.1} parent=1 // pred_region
      %s188 = ssub.s32 6144, 6144
      %189 = vsyncadd [#allocation21], %s188
      %s190 = sshll.u32 [#allocation22], 4
      %s191 = int_to_ptr.vmem [resolvable:$true] %s190
      %196 = dma.hbm_to_vmem [thread:$0]  %s49, 6144, %s191, [#allocation21], 128, 128, 8
    $region101: #{_lambda_.1} parent=1 // pred_fallthru
      _
    // Predicated region
    $region102: #{_lambda_.1} parent=1 // pred_check
      _
    $region103: #{_lambda_.1} parent=1 // pred_check_branch
      %198 = sbr.rel (0) target = $region105
    $region104: #{_lambda_.1} parent=1 // pred_region
      _
    $region105: #{_lambda_.1} parent=1 // pred_fallthru
      _
    // Predicated region
    $region106: #{_lambda_.1} parent=1 // pred_check
      _
    $region107: #{_lambda_.1} parent=1 // pred_check_branch
      %200 = sbr.rel (0) target = $region109
    $region108: #{_lambda_.1} parent=1 // pred_region
      _
    $region109: #{_lambda_.1} parent=1 // pred_fallthru
      _
    // Predicated region
    $region110: #{_lambda_.1} parent=1 // pred_check
      _
    $region111: #{_lambda_.1} parent=1 // pred_check_branch
      %202 = sbr.rel (0) target = $region113
    $region112: #{_lambda_.1} parent=1 // pred_region
      _
    $region113: #{_lambda_.1} parent=1 // pred_fallthru
      _
    // Predicated region
    $region114: #{_lambda_.1} parent=1 // pred_check
      _
    $region115: #{_lambda_.1} parent=1 // pred_check_branch
      %204 = sbr.rel (0) target = $region117
    $region116: #{_lambda_.1} parent=1 // pred_region
      _
    $region117: #{_lambda_.1} parent=1 // pred_fallthru
      _
    // Predicated region
    $region118: #{_lambda_.1} parent=1 // pred_check
      _
    $region119: #{_lambda_.1} parent=1 // pred_check_branch
      %206 = sbr.rel (0) target = $region121
    $region120: #{_lambda_.1} parent=1 // pred_region
      _
    $region121: #{_lambda_.1} parent=1 // pred_fallthru
      _
    // Predicated region
    $region122: #{_lambda_.1} parent=1 // pred_check
      _
    $region123: #{_lambda_.1} parent=1 // pred_check_branch
      %208 = sbr.rel (0) target = $region125
    $region124: #{_lambda_.1} parent=1 // pred_region
      _
    $region125: #{_lambda_.1} parent=1 // pred_fallthru
      _
    // Predicated region
    $region126: #{_lambda_.1} parent=1 // pred_check
      _
    $region127: #{_lambda_.1} parent=1 // pred_check_branch
      %210 = sbr.rel (0) target = $region129
    $region128: #{_lambda_.1} parent=1 // pred_region
      _
    $region129: #{_lambda_.1} parent=1 // pred_fallthru
      _
    // Predicated region
    $region130: #{_lambda_.1} parent=1 // pred_check
      _
    $region131: #{_lambda_.1} parent=1 // pred_check_branch
      %212 = sbr.rel (0) target = $region133
    $region132: #{_lambda_.1} parent=1 // pred_region
      _
    $region133: #{_lambda_.1} parent=1 // pred_fallthru
      _
    // Predicated region
    $region134: #{_lambda_.1} parent=1 // pred_check
      _
    $region135: #{_lambda_.1} parent=1 // pred_check_branch
      %214 = sbr.rel (0) target = $region137
    $region136: #{_lambda_.1} parent=1 // pred_region
      %215 = dma.done [#allocation12], 6144
    $region137: #{_lambda_.1} parent=1 // pred_fallthru
      _
    // Predicated region
    $region138: #{_lambda_.1} parent=1 // pred_check
      _
    $region139: #{_lambda_.1} parent=1 // pred_check_branch
      %217 = sbr.rel (0) target = $region141
    $region140: #{_lambda_.1} parent=1 // pred_region
      %218 = dma.done [#allocation15], 6144
    $region141: #{_lambda_.1} parent=1 // pred_fallthru
      _
    // Predicated region
    $region142: #{_lambda_.1} parent=1 // pred_check
      _
    $region143: #{_lambda_.1} parent=1 // pred_check_branch
      %220 = sbr.rel (0) target = $region145
    $region144: #{_lambda_.1} parent=1 // pred_region
      %221 = dma.done [#allocation15], 6144
    $region145: #{_lambda_.1} parent=1 // pred_fallthru
      _
    // Predicated region
    $region146: #{_lambda_.1} parent=1 // pred_check
      _
    $region147: #{_lambda_.1} parent=1 // pred_check_branch
      %223 = sbr.rel (0) target = $region149
    $region148: #{_lambda_.1} parent=1 // pred_region
      %224 = dma.done [#allocation18], 6144
    $region149: #{_lambda_.1} parent=1 // pred_fallthru
      _
    // Predicated region
    $region150: #{_lambda_.1} parent=1 // pred_check
      _
    $region151: #{_lambda_.1} parent=1 // pred_check_branch
      %226 = sbr.rel (0) target = $region153
    $region152: #{_lambda_.1} parent=1 // pred_region
      %227 = dma.done [#allocation18], 6144
    $region153: #{_lambda_.1} parent=1 // pred_fallthru
      _
    // Predicated region
    $region154: #{_lambda_.1} parent=1 // pred_check
      _
    $region155: #{_lambda_.1} parent=1 // pred_check_branch
      %229 = sbr.rel (0) target = $region157
    $region156: #{_lambda_.1} parent=1 // pred_region
      %230 = dma.done [#allocation21], 6144
    $region157: #{_lambda_.1} parent=1 // pred_fallthru
      _
    // Predicated region
    $region158: #{_lambda_.1} parent=1 // pred_check
      _
    $region159: #{_lambda_.1} parent=1 // pred_check_branch
      %232 = sbr.rel (0) target = $region161
    $region160: #{_lambda_.1} parent=1 // pred_region
      %233 = dma.done [#allocation21], 6144
    $region161: #{_lambda_.1} parent=1 // pred_fallthru
      _
    %234 = vst [vmem:[#allocation2] sm:$0x1] 0.0
    %235 = vst [vmem:[#allocation2 + $0x9] sm:$0x1] 0.0
    %236 = vst [vmem:[#allocation2 + $0xa] sm:$0x1] 0.0
    %237 = vst [vmem:[#allocation2 + $0x13] sm:$0x1] 0.0
    %238 = vst [vmem:[#allocation3] sm:$0x1] 0.0
    %239 = vst [vmem:[#allocation3 + $0x9] sm:$0x1] 0.0
    %240 = vst [vmem:[#allocation3 + $0xa] sm:$0x1] 0.0
    %241 = vst [vmem:[#allocation3 + $0x13] sm:$0x1] 0.0
    %242 = vst [vmem:[#allocation4] sm:$0x1] 0.0
    %243 = vst [vmem:[#allocation4 + $0x9] sm:$0x1] 0.0
    %244 = vst [vmem:[#allocation4 + $0xa] sm:$0x1] 0.0
    %245 = vst [vmem:[#allocation4 + $0x13] sm:$0x1] 0.0
    %246 = vst [vmem:[#allocation5] sm:$0x1] 0.0
    %247 = vst [vmem:[#allocation5 + $0x5] sm:$0x1] 0.0
    %248 = vst [vmem:[#allocation5 + $0x6] sm:$0x1] 0.0
    %249 = vst [vmem:[#allocation5 + $0xb] sm:$0x1] 0.0
    %250 = vst [vmem:[#allocation6] sm:$0x1] 0.0
    %251 = vst [vmem:[#allocation6 + $0x5] sm:$0x1] 0.0
    %252 = vst [vmem:[#allocation6 + $0x6] sm:$0x1] 0.0
    %253 = vst [vmem:[#allocation6 + $0xb] sm:$0x1] 0.0
    %254 = vst [vmem:[#allocation7] sm:$0x1] 0.0
    %255 = vst [vmem:[#allocation7 + $0x5] sm:$0x1] 0.0
    %256 = vst [vmem:[#allocation7 + $0x6] sm:$0x1] 0.0
    %257 = vst [vmem:[#allocation7 + $0xb] sm:$0x1] 0.0
    %258 = vst [vmem:[#allocation8] sm:$0x1] 0.0
    %259 = vst [vmem:[#allocation8 + $0x5] sm:$0x1] 0.0
    %260 = vst [vmem:[#allocation8 + $0x6] sm:$0x1] 0.0
    %261 = vst [vmem:[#allocation8 + $0xb] sm:$0x1] 0.0
    %262 = vst [vmem:[#allocation9] sm:$0x1] 0.0
    %263 = vst [vmem:[#allocation9 + $0x3] sm:$0x1] 0.0
    %264 = vst [vmem:[#allocation9 + $0x4] sm:$0x1] 0.0
    %265 = vst [vmem:[#allocation9 + $0x7] sm:$0x1] 0.0
    %266 = vst [vmem:[#allocation10] sm:$0x1] 0.0
    %267 = vst [vmem:[#allocation10 + $0x3] sm:$0x1] 0.0
    %268 = vst [vmem:[#allocation10 + $0x4] sm:$0x1] 0.0
    %269 = vst [vmem:[#allocation10 + $0x7] sm:$0x1] 0.0
    %v270 = vld [vmem:[%s1] sm:$0xff]
    %v271 = vld [vmem:[%s1 + $0x8] sm:$0xff]
    %v272 = vld [vmem:[%s1 + $0x10] sm:$0xff]
    %v273 = vld [vmem:[%s1 + $0x18] sm:$0xff]
    %v274 = vld [vmem:[%s1 + $0x20] sm:$0x3]
    %v275 = vld [vmem:[%s1 + $0x1] sm:$0xff]
    %v276 = vld [vmem:[%s1 + $0x9] sm:$0xff]
    %v277 = vld [vmem:[%s1 + $0x11] sm:$0xff]
    %v278 = vld [vmem:[%s1 + $0x19] sm:$0xff]
    %v279 = vld [vmem:[%s1 + $0x21] sm:$0x3]
    %v280 = vld [vmem:[%s1 + $0x2] sm:$0xff]
    %v281 = vld [vmem:[%s1 + $0xa] sm:$0xff]
    %v282 = vld [vmem:[%s1 + $0x12] sm:$0xff]
    %v283 = vld [vmem:[%s1 + $0x1a] sm:$0xff]
    %v284 = vld [vmem:[%s1 + $0x22] sm:$0x3]
    %290 = vrot.lane.b32.xlu0 %v275, 48
    %v291 = vpop.permute.xlu0 %290
    %292 = vrot.lane.b32.xlu0 %v276, 48
    %v293 = vpop.permute.xlu0 %292
    %294 = vrot.lane.b32.xlu0 %v277, 48
    %v295 = vpop.permute.xlu0 %294
    %296 = vrot.lane.b32.xlu0 %v278, 48
    %v297 = vpop.permute.xlu0 %296
    %298 = vrot.lane.b32.xlu0 %v279, 48
    %v299 = vpop.permute.xlu0 %298
    %310 = vrot.lane.b32.xlu0 %v280, 96
    %v311 = vpop.permute.xlu0 %310
    %312 = vrot.lane.b32.xlu0 %v281, 96
    %v313 = vpop.permute.xlu0 %312
    %314 = vrot.lane.b32.xlu0 %v282, 96
    %v315 = vpop.permute.xlu0 %314
    %316 = vrot.lane.b32.xlu0 %v283, 96
    %v317 = vpop.permute.xlu0 %316
    %318 = vrot.lane.b32.xlu0 %v284, 96
    %v319 = vpop.permute.xlu0 %318
    %vm325 = vcmask 392192
    %v326 = vsel %vm325, %v270, %v291
    %v327 = vsel %vm325, %v271, %v293
    %v328 = vsel %vm325, %v272, %v295
    %v329 = vsel %vm325, %v273, %v297
    %v330 = vsel %vm325, %v274, %v299
    %vm331 = vcmask 785408
    %v332 = vsel %vm331, %v326, %v311
    %v333 = vsel %vm331, %v327, %v313
    %v334 = vsel %vm331, %v328, %v315
    %v335 = vsel %vm331, %v329, %v317
    %v336 = vsel %vm331, %v330, %v319
    %v337 = vld [vmem:[%s9] sm:$0xff]
    %v338 = vld [vmem:[%s9 + $0x8] sm:$0xff]
    %vm339 = vcmask 277504
    %v341 = vsel %vm339, %v337, 0
    %v344 = vsel %vm339, %v338, 0
    %vm346 = vcmask 1041408
    %v348 = vsel %vm346, %v336, 0
    %v350 = vsel %vm346, %v319, 0
    %352 = vmatprep.subr.mxu0 %v311
    %353 = vmatpush1.msra.mxu0 %v332
    %354 = vmatprep.subr.mxu0 %v313
    %355 = vmatpush1.msra.mxu0 %v333
    %356 = vmatprep.subr.mxu0 %v315
    %357 = vmatpush1.msra.mxu0 %v334
    %358 = vmatprep.subr.mxu0 %v317
    %359 = vmatpush1.msra.mxu0 %v335
    %360 = vmatprep.subr.mxu0 %v350
    %361 = vmatpush1.msra.mxu0 %v348
    %362 = vmatprep.subr.mxu0 0.0
    %363 = vmatpush1.msra.mxu0 0.0
    %364 = vmatprep.subr.mxu0 0.0
    %365 = vmatpush1.msra.mxu0 0.0
    %366 = vmatprep.subr.mxu0 0.0
    %367 = vmatpush1.msra.mxu0 0.0
    %368 = vmatprep.subr.mxu0 0.0
    %369 = vmatpush1.msra.mxu0 0.0
    %370 = vmatprep.subr.mxu0 0.0
    %371 = vmatpush1.msra.mxu0 0.0
    %372 = vmatprep.subr.mxu0 0.0
    %373 = vmatpush1.msra.mxu0 0.0
    %374 = vmatprep.subr.mxu0 0.0
    %375 = vmatpush1.msra.mxu0 0.0
    %376 = vmatprep.subr.mxu0 0.0
    %377 = vmatpush1.msra.mxu0 0.0
    %378 = vmatprep.subr.mxu0 0.0
    %379 = vmatpush1.msra.mxu0 0.0
    %380 = vmatprep.subr.mxu0 0.0
    %381 = vmatpush1.msra.mxu0 0.0
    %382 = vmatprep.subr.mxu0 0.0
    %383 = vmatpush1.msra.mxu0 0.0
    %384 = vmatprep.subr.mxu0 0.0
    %385 = vmatpush1.msra.mxu0 0.0
    %386 = vmatprep.subr.mxu0 0.0
    %387 = vmatpush1.msra.mxu0 0.0
    %388 = vmatprep.subr.mxu0 0.0
    %389 = vmatpush1.msra.mxu0 0.0
    %390 = vmatprep.subr.mxu0 0.0
    %391 = vmatpush1.msra.mxu0 0.0
    %392 = vmatprep.subr.mxu0 0.0
    %393 = vmatpush1.msra.mxu0 0.0
    %394 = vmatprep.subr.mxu0 0.0
    %395 = vmatpush1.msra.mxu0 0.0
    %396 = vmatprep.subr.mxu0 0.0
    %397 = vmatpush1.msra.mxu0 0.0
    %398 = vmatprep.subr.mxu0 0.0
    %399 = vmatpush1.msra.mxu0 0.0
    %400 = vmatprep.subr.mxu0 0.0
    %401 = vmatpush1.msra.mxu0 0.0
    %402 = vmatprep.subr.mxu0 0.0
    %403 = vmatpush1.msra.mxu0 0.0
    %404 = vmatprep.subr.mxu0 0.0
    %405 = vmatpush1.msra.mxu0 0.0
    %406 = vmatprep.subr.mxu0 0.0
    %407 = vmatpush1.msra.mxu0 0.0
    %408 = vmatprep.subr.mxu0 0.0
    %409 = vmatpush1.msra.mxu0 0.0
    %410 = vmatprep.subr.mxu0 0.0
    %411 = vmatpush1.msra.mxu0 0.0
    %412 = vmatprep.subr.mxu0 0.0
    %413 = vmatpush1.msra.mxu0 0.0
    %414 = vmatprep.subr.mxu0 0.0
    %415 = vmatpush1.msra.mxu0 0.0
    %416 = vmatprep.mubr.f32.mxu0 0.0
    %417 = vmatmul.mubr.f32.gmra.mrb[0].mxu0 %v341
    %v418 = vpop.f32.mrb[0].mxu0
    %v419 = vadd.f32 0.0, %v418
    %v420 = vpop.f32.mrb[0].mxu0
    %v421 = vadd.f32 0.0, %v420
    %422 = vmatprep.mubr.f32.mxu0 0.0
    %423 = vmatmul.mubr.f32.gmra.mrb[0].mxu0 %v344
    %v424 = vpop.f32.mrb[0].mxu0
    %v425 = vadd.f32 0.0, %v424
    %v426 = vpop.f32.mrb[0].mxu0
    %v427 = vadd.f32 0.0, %v426
    %428 = vdwg.mxu0
    %v429 = vld [vmem:[%s3] sm:$0xff]
    %v430 = vld [vmem:[%s3 + $0x8] sm:$0xff]
    %v431 = vld [vmem:[%s3 + $0x10] sm:$0xff]
    %v432 = vld [vmem:[%s3 + $0x18] sm:$0xff]
    %v433 = vld [vmem:[%s3 + $0x20] sm:$0xff]
    %v434 = vld [vmem:[%s3 + $0x28] sm:$0xff]
    %v435 = vld [vmem:[%s3 + $0x30] sm:$0xff]
    %v436 = vld [vmem:[%s3 + $0x38] sm:$0xff]
    %v437 = vld [vmem:[%s3 + $0x40] sm:$0xff]
    %v438 = vld [vmem:[%s3 + $0x48] sm:$0xff]
    %v439 = vld [vmem:[%s3 + $0x50] sm:$0xff]
    %v440 = vld [vmem:[%s3 + $0x58] sm:$0xff]
    %v441 = vld [vmem:[%s3 + $0x60] sm:$0xff]
    %v442 = vld [vmem:[%s3 + $0x68] sm:$0xff]
    %v443 = vld [vmem:[%s3 + $0x70] sm:$0xff]
    %v444 = vld [vmem:[%s3 + $0x78] sm:$0xff]
    %v445 = vld [vmem:[%s3 + $0x80] sm:$0xff]
    %v446 = vld [vmem:[%s3 + $0x88] sm:$0xff]
    %vm447 = vcmask 130048
    %v449 = vsel %vm447, %v421, 0
    %v452 = vsel %vm447, %v427, 0
    %454 = vmatprep.subr.mxu0 0.0
    %455 = vmatpush1.msra.mxu0 %v429
    %456 = vmatprep.subr.mxu0 0.0
    %457 = vmatpush1.msra.mxu0 %v430
    %458 = vmatprep.subr.mxu0 0.0
    %459 = vmatpush1.msra.mxu0 %v431
    %460 = vmatprep.subr.mxu0 0.0
    %461 = vmatpush1.msra.mxu0 %v432
    %462 = vmatprep.subr.mxu0 0.0
    %463 = vmatpush1.msra.mxu0 %v433
    %464 = vmatprep.subr.mxu0 0.0
    %465 = vmatpush1.msra.mxu0 %v434
    %466 = vmatprep.subr.mxu0 0.0
    %467 = vmatpush1.msra.mxu0 %v435
    %468 = vmatprep.subr.mxu0 0.0
    %469 = vmatpush1.msra.mxu0 %v436
    %470 = vmatprep.subr.mxu0 0.0
    %471 = vmatpush1.msra.mxu0 %v437
    %472 = vmatprep.subr.mxu0 0.0
    %473 = vmatpush1.msra.mxu0 %v438
    %474 = vmatprep.subr.mxu0 0.0
    %475 = vmatpush1.msra.mxu0 %v439
    %476 = vmatprep.subr.mxu0 0.0
    %477 = vmatpush1.msra.mxu0 %v440
    %478 = vmatprep.subr.mxu0 0.0
    %479 = vmatpush1.msra.mxu0 %v441
    %480 = vmatprep.subr.mxu0 0.0
    %481 = vmatpush1.msra.mxu0 %v442
    %482 = vmatprep.subr.mxu0 0.0
    %483 = vmatpush1.msra.mxu0 %v443
    %484 = vmatprep.subr.mxu0 0.0
    %485 = vmatpush1.msra.mxu0 %v444
    %486 = vmatprep.subr.mxu0 0.0
    %487 = vmatpush1.msra.mxu0 %v445
    %488 = vmatprep.subr.mxu0 0.0
    %489 = vmatpush1.msra.mxu0 %v446
    %490 = vmatprep.subr.mxu0 0.0
    %491 = vmatpush1.msra.mxu0 0.0
    %492 = vmatprep.subr.mxu0 0.0
    %493 = vmatpush1.msra.mxu0 0.0
    %494 = vmatprep.subr.mxu0 0.0
    %495 = vmatpush1.msra.mxu0 0.0
    %496 = vmatprep.subr.mxu0 0.0
    %497 = vmatpush1.msra.mxu0 0.0
    %498 = vmatprep.subr.mxu0 0.0
    %499 = vmatpush1.msra.mxu0 0.0
    %500 = vmatprep.subr.mxu0 0.0
    %501 = vmatpush1.msra.mxu0 0.0
    %502 = vmatprep.subr.mxu0 0.0
    %503 = vmatpush1.msra.mxu0 0.0
    %504 = vmatprep.subr.mxu0 0.0
    %505 = vmatpush1.msra.mxu0 0.0
    %506 = vmatprep.subr.mxu0 0.0
    %507 = vmatpush1.msra.mxu0 0.0
    %508 = vmatprep.subr.mxu0 0.0
    %509 = vmatpush1.msra.mxu0 0.0
    %510 = vmatprep.subr.mxu0 0.0
    %511 = vmatpush1.msra.mxu0 0.0
    %512 = vmatprep.subr.mxu0 0.0
    %513 = vmatpush1.msra.mxu0 0.0
    %514 = vmatprep.subr.mxu0 0.0
    %515 = vmatpush1.msra.mxu0 0.0
    %516 = vmatprep.subr.mxu0 0.0
    %517 = vmatpush1.msra.mxu0 0.0
    %518 = vmatprep.mubr.f32.mxu0 %v449
    %519 = vmatmul.mubr.f32.gmra.mrb[0].mxu0 %v419
    %v520 = vpop.f32.mrb[0].mxu0
    %v521 = vadd.f32 0.0, %v520
    %v522 = vpop.f32.mrb[0].mxu0
    %523 = vmatprep.mubr.f32.mxu0 %v452
    %524 = vmatmul.mubr.f32.gmra.mrb[0].mxu0 %v425
    %v525 = vpop.f32.mrb[0].mxu0
    %v526 = vadd.f32 0.0, %v525
    %v527 = vpop.f32.mrb[0].mxu0
    %528 = vdwg.mxu0
    %v529 = vld [vmem:[%s5] sm:$0x1]
    %v531 = vlaneseq
    %v532 = vshrl.u32 %v531, 7
    %v533 = vsub.s32 0, %v532
    %v534 = vrot.slane %v529, %v533
    %v536 = vmul.f32 %v521, %v534
    %v537 = vmul.f32 %v526, %v534
    %v538 = vld [vmem:[%s7] sm:$0x1]
    %v540 = vlaneseq
    %v541 = vshrl.u32 %v540, 7
    %v542 = vsub.s32 0, %v541
    %v543 = vrot.slane %v538, %v542
    %v545 = vadd.f32 %v536, %v543
    %v546 = vadd.f32 %v537, %v543
    %v547 = vmax.f32 %v545, 0.0
    %v548 = vmax.f32 %v546, 0.0
    %549 = vst [vmem:[#allocation2 + $0x1] sm:$0xff] %v547
    %550 = vst [vmem:[#allocation2 + $0xb] sm:$0xff] %v548
    %v551 = vld [vmem:[#allocation2] sm:$0xff]
    %v552 = vld [vmem:[#allocation2 + $0x8] sm:$0xff]
    %v553 = vld [vmem:[#allocation2 + $0x10] sm:$0x3]
    %v554 = vld [vmem:[#allocation2 + $0x1] sm:$0xff]
    %v555 = vld [vmem:[#allocation2 + $0x9] sm:$0xff]
    %v556 = vld [vmem:[#allocation2 + $0x11] sm:$0x3]
    %v557 = vld [vmem:[#allocation2 + $0x2] sm:$0xff]
    %v558 = vld [vmem:[#allocation2 + $0xa] sm:$0xff]
    %v559 = vld [vmem:[#allocation2 + $0x12] sm:$0x3]
    %v560 = vld [vmem:[#allocation11] sm:$0xff]
    %v561 = vld [vmem:[#allocation11 + $0x8] sm:$0xff]
    %v562 = vld [vmem:[#allocation11 + $0x10] sm:$0xff]
    %v563 = vld [vmem:[#allocation11 + $0x18] sm:$0xff]
    %v564 = vld [vmem:[#allocation11 + $0x20] sm:$0xff]
    %v565 = vld [vmem:[#allocation11 + $0x28] sm:$0xff]
    %v566 = vld [vmem:[#allocation11 + $0x30] sm:$0xff]
    %v567 = vld [vmem:[#allocation11 + $0x38] sm:$0xff]
    %v568 = vld [vmem:[#allocation11 + $0x40] sm:$0xff]
    %v569 = vld [vmem:[#allocation11 + $0x48] sm:$0xff]
    %v570 = vld [vmem:[#allocation11 + $0x50] sm:$0xff]
    %v571 = vld [vmem:[#allocation11 + $0x58] sm:$0xff]
    %v572 = vld [vmem:[#allocation11 + $0x60] sm:$0xff]
    %v573 = vld [vmem:[#allocation11 + $0x68] sm:$0xff]
    %v574 = vld [vmem:[#allocation11 + $0x70] sm:$0xff]
    %v575 = vld [vmem:[#allocation11 + $0x78] sm:$0xff]
    %v576 = vld [vmem:[#allocation11 + $0x80] sm:$0xff]
    %v577 = vld [vmem:[#allocation11 + $0x88] sm:$0xff]
    %v578 = vld [vmem:[#allocation11 + $0x90] sm:$0xff]
    %v579 = vld [vmem:[#allocation11 + $0x98] sm:$0xff]
    %v580 = vld [vmem:[#allocation11 + $0xa0] sm:$0xff]
    %v581 = vld [vmem:[#allocation11 + $0xa8] sm:$0xff]
    %v582 = vld [vmem:[#allocation11 + $0xb0] sm:$0xff]
    %v583 = vld [vmem:[#allocation11 + $0xb8] sm:$0xff]
    %v584 = vld [vmem:[#allocation11 + $0xc0] sm:$0xff]
    %v585 = vld [vmem:[#allocation11 + $0xc8] sm:$0xff]
    %v586 = vld [vmem:[#allocation11 + $0xd0] sm:$0xff]
    %v587 = vld [vmem:[#allocation11 + $0xd8] sm:$0xff]
    %v588 = vld [vmem:[#allocation11 + $0xe0] sm:$0xff]
    %v589 = vld [vmem:[#allocation11 + $0xe8] sm:$0xff]
    %v590 = vld [vmem:[#allocation11 + $0xf0] sm:$0xff]
    %v591 = vld [vmem:[#allocation11 + $0xf8] sm:$0xff]
    %v592 = vld [vmem:[#allocation11 + $0x100] sm:$0xff]
    %v593 = vld [vmem:[#allocation11 + $0x108] sm:$0xff]
    %v594 = vld [vmem:[#allocation11 + $0x110] sm:$0xff]
    %v595 = vld [vmem:[#allocation11 + $0x118] sm:$0xff]
    %v596 = vld [vmem:[#allocation11 + $0x120] sm:$0xff]
    %v597 = vld [vmem:[#allocation11 + $0x128] sm:$0xff]
    %v598 = vld [vmem:[#allocation11 + $0x130] sm:$0xff]
    %v599 = vld [vmem:[#allocation11 + $0x138] sm:$0xff]
    %v600 = vld [vmem:[#allocation11 + $0x140] sm:$0xff]
    %v601 = vld [vmem:[#allocation11 + $0x148] sm:$0xff]
    %v602 = vld [vmem:[#allocation11 + $0x150] sm:$0xff]
    %v603 = vld [vmem:[#allocation11 + $0x158] sm:$0xff]
    %v604 = vld [vmem:[#allocation11 + $0x160] sm:$0xff]
    %v605 = vld [vmem:[#allocation11 + $0x168] sm:$0xff]
    %v606 = vld [vmem:[#allocation11 + $0x170] sm:$0xff]
    %v607 = vld [vmem:[#allocation11 + $0x178] sm:$0xff]
    %608 = vmatprep.subr.mxu0 0.0
    %609 = vmatpush1.msra.mxu0 %v560
    %610 = vmatprep.subr.mxu0 0.0
    %611 = vmatpush1.msra.mxu0 %v561
    %612 = vmatprep.subr.mxu0 0.0
    %613 = vmatpush1.msra.mxu0 %v562
    %614 = vmatprep.subr.mxu0 0.0
    %615 = vmatpush1.msra.mxu0 %v563
    %616 = vmatprep.subr.mxu0 0.0
    %617 = vmatpush1.msra.mxu0 %v564
    %618 = vmatprep.subr.mxu0 0.0
    %619 = vmatpush1.msra.mxu0 %v565
    %620 = vmatprep.subr.mxu0 0.0
    %621 = vmatpush1.msra.mxu0 %v566
    %622 = vmatprep.subr.mxu0 0.0
    %623 = vmatpush1.msra.mxu0 %v567
    %624 = vmatprep.subr.mxu0 0.0
    %625 = vmatpush1.msra.mxu0 %v568
    %626 = vmatprep.subr.mxu0 0.0
    %627 = vmatpush1.msra.mxu0 %v569
    %628 = vmatprep.subr.mxu0 0.0
    %629 = vmatpush1.msra.mxu0 %v570
    %630 = vmatprep.subr.mxu0 0.0
    %631 = vmatpush1.msra.mxu0 %v571
    %632 = vmatprep.subr.mxu0 0.0
    %633 = vmatpush1.msra.mxu0 %v572
    %634 = vmatprep.subr.mxu0 0.0
    %635 = vmatpush1.msra.mxu0 %v573
    %636 = vmatprep.subr.mxu0 0.0
    %637 = vmatpush1.msra.mxu0 %v574
    %638 = vmatprep.subr.mxu0 0.0
    %639 = vmatpush1.msra.mxu0 %v575
    %640 = vmatprep.subr.mxu0 0.0
    %641 = vmatpush1.msra.mxu0 %v576
    %642 = vmatprep.subr.mxu0 0.0
    %643 = vmatpush1.msra.mxu0 %v577
    %644 = vmatprep.subr.mxu0 0.0
    %645 = vmatpush1.msra.mxu0 %v578
    %646 = vmatprep.subr.mxu0 0.0
    %647 = vmatpush1.msra.mxu0 %v579
    %648 = vmatprep.subr.mxu0 0.0
    %649 = vmatpush1.msra.mxu0 %v580
    %650 = vmatprep.subr.mxu0 0.0
    %651 = vmatpush1.msra.mxu0 %v581
    %652 = vmatprep.subr.mxu0 0.0
    %653 = vmatpush1.msra.mxu0 %v582
    %654 = vmatprep.subr.mxu0 0.0
    %655 = vmatpush1.msra.mxu0 %v583
    %656 = vmatprep.subr.mxu0 0.0
    %657 = vmatpush1.msra.mxu0 %v584
    %658 = vmatprep.subr.mxu0 0.0
    %659 = vmatpush1.msra.mxu0 %v585
    %660 = vmatprep.subr.mxu0 0.0
    %661 = vmatpush1.msra.mxu0 %v586
    %662 = vmatprep.subr.mxu0 0.0
    %663 = vmatpush1.msra.mxu0 %v587
    %664 = vmatprep.subr.mxu0 0.0
    %665 = vmatpush1.msra.mxu0 %v588
    %666 = vmatprep.subr.mxu0 0.0
    %667 = vmatpush1.msra.mxu0 %v589
    %668 = vmatprep.subr.mxu0 0.0
    %669 = vmatpush1.msra.mxu0 %v590
    %670 = vmatprep.subr.mxu0 0.0
    %671 = vmatpush1.msra.mxu0 %v591
    %672 = vmatprep.mubr.f32.mxu0 %v554
    %673 = vmatmul.mubr.f32.gmra.mrb[0].mxu0 %v551
    %v674 = vpop.f32.mrb[0].mxu0
    %v675 = vadd.f32 0.0, %v674
    %v676 = vpop.f32.mrb[0].mxu0
    %677 = vmatprep.mubr.f32.mxu0 %v555
    %678 = vmatmul.mubr.f32.gmra.mrb[0].mxu0 %v552
    %v679 = vpop.f32.mrb[0].mxu0
    %v680 = vadd.f32 0.0, %v679
    %v681 = vpop.f32.mrb[0].mxu0
    %682 = vmatprep.mubr.f32.mxu0 %v556
    %683 = vmatmul.mubr.f32.gmra.mrb[0].mxu0 %v553
    %v684 = vpop.f32.mrb[0].mxu0
    %v685 = vadd.f32 0.0, %v684
    %v686 = vpop.f32.mrb[0].mxu0
    %687 = vdwg.mxu0
    %688 = vmatprep.subr.mxu0 0.0
    %689 = vmatpush1.msra.mxu0 %v592
    %690 = vmatprep.subr.mxu0 0.0
    %691 = vmatpush1.msra.mxu0 %v593
    %692 = vmatprep.subr.mxu0 0.0
    %693 = vmatpush1.msra.mxu0 %v594
    %694 = vmatprep.subr.mxu0 0.0
    %695 = vmatpush1.msra.mxu0 %v595
    %696 = vmatprep.subr.mxu0 0.0
    %697 = vmatpush1.msra.mxu0 %v596
    %698 = vmatprep.subr.mxu0 0.0
    %699 = vmatpush1.msra.mxu0 %v597
    %700 = vmatprep.subr.mxu0 0.0
    %701 = vmatpush1.msra.mxu0 %v598
    %702 = vmatprep.subr.mxu0 0.0
    %703 = vmatpush1.msra.mxu0 %v599
    %704 = vmatprep.subr.mxu0 0.0
    %705 = vmatpush1.msra.mxu0 %v600
    %706 = vmatprep.subr.mxu0 0.0
    %707 = vmatpush1.msra.mxu0 %v601
    %708 = vmatprep.subr.mxu0 0.0
    %709 = vmatpush1.msra.mxu0 %v602
    %710 = vmatprep.subr.mxu0 0.0
    %711 = vmatpush1.msra.mxu0 %v603
    %712 = vmatprep.subr.mxu0 0.0
    %713 = vmatpush1.msra.mxu0 %v604
    %714 = vmatprep.subr.mxu0 0.0
    %715 = vmatpush1.msra.mxu0 %v605
    %716 = vmatprep.subr.mxu0 0.0
    %717 = vmatpush1.msra.mxu0 %v606
    %718 = vmatprep.subr.mxu0 0.0
    %719 = vmatpush1.msra.mxu0 %v607
    %720 = vmatprep.subr.mxu0 0.0
    %721 = vmatpush1.msra.mxu0 0.0
    %722 = vmatprep.subr.mxu0 0.0
    %723 = vmatpush1.msra.mxu0 0.0
    %724 = vmatprep.subr.mxu0 0.0
    %725 = vmatpush1.msra.mxu0 0.0
    %726 = vmatprep.subr.mxu0 0.0
    %727 = vmatpush1.msra.mxu0 0.0
    %728 = vmatprep.subr.mxu0 0.0
    %729 = vmatpush1.msra.mxu0 0.0
    %730 = vmatprep.subr.mxu0 0.0
    %731 = vmatpush1.msra.mxu0 0.0
    %732 = vmatprep.subr.mxu0 0.0
    %733 = vmatpush1.msra.mxu0 0.0
    %734 = vmatprep.subr.mxu0 0.0
    %735 = vmatpush1.msra.mxu0 0.0
    %736 = vmatprep.subr.mxu0 0.0
    %737 = vmatpush1.msra.mxu0 0.0
    %738 = vmatprep.subr.mxu0 0.0
    %739 = vmatpush1.msra.mxu0 0.0
    %740 = vmatprep.subr.mxu0 0.0
    %741 = vmatpush1.msra.mxu0 0.0
    %742 = vmatprep.subr.mxu0 0.0
    %743 = vmatpush1.msra.mxu0 0.0
    %744 = vmatprep.subr.mxu0 0.0
    %745 = vmatpush1.msra.mxu0 0.0
    %746 = vmatprep.subr.mxu0 0.0
    %747 = vmatpush1.msra.mxu0 0.0
    %748 = vmatprep.subr.mxu0 0.0
    %749 = vmatpush1.msra.mxu0 0.0
    %750 = vmatprep.subr.mxu0 0.0
    %751 = vmatpush1.msra.mxu0 0.0
    %752 = vmatprep.mubr.f32.mxu0 0.0
    %753 = vmatmul.mubr.f32.gmra.mrb[0].mxu0 %v557
    %v754 = vpop.f32.mrb[0].mxu0
    %v755 = vadd.f32 %v675, %v754
    %v756 = vpop.f32.mrb[0].mxu0
    %757 = vmatprep.mubr.f32.mxu0 0.0
    %758 = vmatmul.mubr.f32.gmra.mrb[0].mxu0 %v558
    %v759 = vpop.f32.mrb[0].mxu0
    %v760 = vadd.f32 %v680, %v759
    %v761 = vpop.f32.mrb[0].mxu0
    %762 = vmatprep.mubr.f32.mxu0 0.0
    %763 = vmatmul.mubr.f32.gmra.mrb[0].mxu0 %v559
    %v764 = vpop.f32.mrb[0].mxu0
    %v765 = vadd.f32 %v685, %v764
    %v766 = vpop.f32.mrb[0].mxu0
    %767 = vdwg.mxu0
    %v768 = vld [vmem:[%s13] sm:$0x1]
    %v770 = vlaneseq
    %v771 = vshrl.u32 %v770, 7
    %v772 = vsub.s32 0, %v771
    %v773 = vrot.slane %v768, %v772
    %v775 = vmul.f32 %v755, %v773
    %v776 = vmul.f32 %v760, %v773
    %v777 = vmul.f32 %v765, %v773
    %v778 = vld [vmem:[%s15] sm:$0x1]
    %v780 = vlaneseq
    %v781 = vshrl.u32 %v780, 7
    %v782 = vsub.s32 0, %v781
    %v783 = vrot.slane %v778, %v782
    %v785 = vadd.f32 %v775, %v783
    %v786 = vadd.f32 %v776, %v783
    %v787 = vadd.f32 %v777, %v783
    %v788 = vmax.f32 %v785, 0.0
    %v789 = vmax.f32 %v786, 0.0
    %v790 = vmax.f32 %v787, 0.0
    %791 = vst [vmem:[#allocation3 + $0x1] sm:$0xff] %v788
    %792 = vst [vmem:[#allocation3 + $0x9] sm:$0xfc] %v789
    %793 = vst [vmem:[#allocation3 + $0x11] sm:$0x3] %v790
    %v794 = vld [vmem:[#allocation3] sm:$0xff]
    %v795 = vld [vmem:[#allocation3 + $0x8] sm:$0xff]
    %v796 = vld [vmem:[#allocation3 + $0x10] sm:$0x3]
    %v797 = vld [vmem:[#allocation3 + $0x1] sm:$0xff]
    %v798 = vld [vmem:[#allocation3 + $0x9] sm:$0xff]
    %v799 = vld [vmem:[#allocation3 + $0x11] sm:$0x3]
    %v800 = vld [vmem:[#allocation3 + $0x2] sm:$0xff]
    %v801 = vld [vmem:[#allocation3 + $0xa] sm:$0xff]
    %v802 = vld [vmem:[#allocation3 + $0x12] sm:$0x3]
    %v803 = vld [vmem:[#allocation14] sm:$0xff]
    %v804 = vld [vmem:[#allocation14 + $0x8] sm:$0xff]
    %v805 = vld [vmem:[#allocation14 + $0x10] sm:$0xff]
    %v806 = vld [vmem:[#allocation14 + $0x18] sm:$0xff]
    %v807 = vld [vmem:[#allocation14 + $0x20] sm:$0xff]
    %v808 = vld [vmem:[#allocation14 + $0x28] sm:$0xff]
    %v809 = vld [vmem:[#allocation14 + $0x30] sm:$0xff]
    %v810 = vld [vmem:[#allocation14 + $0x38] sm:$0xff]
    %v811 = vld [vmem:[#allocation14 + $0x40] sm:$0xff]
    %v812 = vld [vmem:[#allocation14 + $0x48] sm:$0xff]
    %v813 = vld [vmem:[#allocation14 + $0x50] sm:$0xff]
    %v814 = vld [vmem:[#allocation14 + $0x58] sm:$0xff]
    %v815 = vld [vmem:[#allocation14 + $0x60] sm:$0xff]
    %v816 = vld [vmem:[#allocation14 + $0x68] sm:$0xff]
    %v817 = vld [vmem:[#allocation14 + $0x70] sm:$0xff]
    %v818 = vld [vmem:[#allocation14 + $0x78] sm:$0xff]
    %v819 = vld [vmem:[#allocation14 + $0x80] sm:$0xff]
    %v820 = vld [vmem:[#allocation14 + $0x88] sm:$0xff]
    %v821 = vld [vmem:[#allocation14 + $0x90] sm:$0xff]
    %v822 = vld [vmem:[#allocation14 + $0x98] sm:$0xff]
    %v823 = vld [vmem:[#allocation14 + $0xa0] sm:$0xff]
    %v824 = vld [vmem:[#allocation14 + $0xa8] sm:$0xff]
    %v825 = vld [vmem:[#allocation14 + $0xb0] sm:$0xff]
    %v826 = vld [vmem:[#allocation14 + $0xb8] sm:$0xff]
    %v827 = vld [vmem:[#allocation14 + $0xc0] sm:$0xff]
    %v828 = vld [vmem:[#allocation14 + $0xc8] sm:$0xff]
    %v829 = vld [vmem:[#allocation14 + $0xd0] sm:$0xff]
    %v830 = vld [vmem:[#allocation14 + $0xd8] sm:$0xff]
    %v831 = vld [vmem:[#allocation14 + $0xe0] sm:$0xff]
    %v832 = vld [vmem:[#allocation14 + $0xe8] sm:$0xff]
    %v833 = vld [vmem:[#allocation14 + $0xf0] sm:$0xff]
    %v834 = vld [vmem:[#allocation14 + $0xf8] sm:$0xff]
    %v835 = vld [vmem:[#allocation14 + $0x100] sm:$0xff]
    %v836 = vld [vmem:[#allocation14 + $0x108] sm:$0xff]
    %v837 = vld [vmem:[#allocation14 + $0x110] sm:$0xff]
    %v838 = vld [vmem:[#allocation14 + $0x118] sm:$0xff]
    %v839 = vld [vmem:[#allocation14 + $0x120] sm:$0xff]
    %v840 = vld [vmem:[#allocation14 + $0x128] sm:$0xff]
    %v841 = vld [vmem:[#allocation14 + $0x130] sm:$0xff]
    %v842 = vld [vmem:[#allocation14 + $0x138] sm:$0xff]
    %v843 = vld [vmem:[#allocation14 + $0x140] sm:$0xff]
    %v844 = vld [vmem:[#allocation14 + $0x148] sm:$0xff]
    %v845 = vld [vmem:[#allocation14 + $0x150] sm:$0xff]
    %v846 = vld [vmem:[#allocation14 + $0x158] sm:$0xff]
    %v847 = vld [vmem:[#allocation14 + $0x160] sm:$0xff]
    %v848 = vld [vmem:[#allocation14 + $0x168] sm:$0xff]
    %v849 = vld [vmem:[#allocation14 + $0x170] sm:$0xff]
    %v850 = vld [vmem:[#allocation14 + $0x178] sm:$0xff]
    %851 = vmatprep.subr.mxu0 0.0
    %852 = vmatpush1.msra.mxu0 %v803
    %853 = vmatprep.subr.mxu0 0.0
    %854 = vmatpush1.msra.mxu0 %v804
    %855 = vmatprep.subr.mxu0 0.0
    %856 = vmatpush1.msra.mxu0 %v805
    %857 = vmatprep.subr.mxu0 0.0
    %858 = vmatpush1.msra.mxu0 %v806
    %859 = vmatprep.subr.mxu0 0.0
    %860 = vmatpush1.msra.mxu0 %v807
    %861 = vmatprep.subr.mxu0 0.0
    %862 = vmatpush1.msra.mxu0 %v808
    %863 = vmatprep.subr.mxu0 0.0
    %864 = vmatpush1.msra.mxu0 %v809
    %865 = vmatprep.subr.mxu0 0.0
    %866 = vmatpush1.msra.mxu0 %v810
    %867 = vmatprep.subr.mxu0 0.0
    %868 = vmatpush1.msra.mxu0 %v811
    %869 = vmatprep.subr.mxu0 0.0
    %870 = vmatpush1.msra.mxu0 %v812
    %871 = vmatprep.subr.mxu0 0.0
    %872 = vmatpush1.msra.mxu0 %v813
    %873 = vmatprep.subr.mxu0 0.0
    %874 = vmatpush1.msra.mxu0 %v814
    %875 = vmatprep.subr.mxu0 0.0
    %876 = vmatpush1.msra.mxu0 %v815
    %877 = vmatprep.subr.mxu0 0.0
    %878 = vmatpush1.msra.mxu0 %v816
    %879 = vmatprep.subr.mxu0 0.0
    %880 = vmatpush1.msra.mxu0 %v817
    %881 = vmatprep.subr.mxu0 0.0
    %882 = vmatpush1.msra.mxu0 %v818
    %883 = vmatprep.subr.mxu0 0.0
    %884 = vmatpush1.msra.mxu0 %v819
    %885 = vmatprep.subr.mxu0 0.0
    %886 = vmatpush1.msra.mxu0 %v820
    %887 = vmatprep.subr.mxu0 0.0
    %888 = vmatpush1.msra.mxu0 %v821
    %889 = vmatprep.subr.mxu0 0.0
    %890 = vmatpush1.msra.mxu0 %v822
    %891 = vmatprep.subr.mxu0 0.0
    %892 = vmatpush1.msra.mxu0 %v823
    %893 = vmatprep.subr.mxu0 0.0
    %894 = vmatpush1.msra.mxu0 %v824
    %895 = vmatprep.subr.mxu0 0.0
    %896 = vmatpush1.msra.mxu0 %v825
    %897 = vmatprep.subr.mxu0 0.0
    %898 = vmatpush1.msra.mxu0 %v826
    %899 = vmatprep.subr.mxu0 0.0
    %900 = vmatpush1.msra.mxu0 %v827
    %901 = vmatprep.subr.mxu0 0.0
    %902 = vmatpush1.msra.mxu0 %v828
    %903 = vmatprep.subr.mxu0 0.0
    %904 = vmatpush1.msra.mxu0 %v829
    %905 = vmatprep.subr.mxu0 0.0
    %906 = vmatpush1.msra.mxu0 %v830
    %907 = vmatprep.subr.mxu0 0.0
    %908 = vmatpush1.msra.mxu0 %v831
    %909 = vmatprep.subr.mxu0 0.0
    %910 = vmatpush1.msra.mxu0 %v832
    %911 = vmatprep.subr.mxu0 0.0
    %912 = vmatpush1.msra.mxu0 %v833
    %913 = vmatprep.subr.mxu0 0.0
    %914 = vmatpush1.msra.mxu0 %v834
    %915 = vmatprep.mubr.f32.mxu0 %v797
    %916 = vmatmul.mubr.f32.gmra.mrb[0].mxu0 %v794
    %v917 = vpop.f32.mrb[0].mxu0
    %v918 = vadd.f32 0.0, %v917
    %v919 = vpop.f32.mrb[0].mxu0
    %920 = vmatprep.mubr.f32.mxu0 %v798
    %921 = vmatmul.mubr.f32.gmra.mrb[0].mxu0 %v795
    %v922 = vpop.f32.mrb[0].mxu0
    %v923 = vadd.f32 0.0, %v922
    %v924 = vpop.f32.mrb[0].mxu0
    %925 = vmatprep.mubr.f32.mxu0 %v799
    %926 = vmatmul.mubr.f32.gmra.mrb[0].mxu0 %v796
    %v927 = vpop.f32.mrb[0].mxu0
    %v928 = vadd.f32 0.0, %v927
    %v929 = vpop.f32.mrb[0].mxu0
    %930 = vdwg.mxu0
    %931 = vmatprep.subr.mxu0 0.0
    %932 = vmatpush1.msra.mxu0 %v835
    %933 = vmatprep.subr.mxu0 0.0
    %934 = vmatpush1.msra.mxu0 %v836
    %935 = vmatprep.subr.mxu0 0.0
    %936 = vmatpush1.msra.mxu0 %v837
    %937 = vmatprep.subr.mxu0 0.0
    %938 = vmatpush1.msra.mxu0 %v838
    %939 = vmatprep.subr.mxu0 0.0
    %940 = vmatpush1.msra.mxu0 %v839
    %941 = vmatprep.subr.mxu0 0.0
    %942 = vmatpush1.msra.mxu0 %v840
    %943 = vmatprep.subr.mxu0 0.0
    %944 = vmatpush1.msra.mxu0 %v841
    %945 = vmatprep.subr.mxu0 0.0
    %946 = vmatpush1.msra.mxu0 %v842
    %947 = vmatprep.subr.mxu0 0.0
    %948 = vmatpush1.msra.mxu0 %v843
    %949 = vmatprep.subr.mxu0 0.0
    %950 = vmatpush1.msra.mxu0 %v844
    %951 = vmatprep.subr.mxu0 0.0
    %952 = vmatpush1.msra.mxu0 %v845
    %953 = vmatprep.subr.mxu0 0.0
    %954 = vmatpush1.msra.mxu0 %v846
    %955 = vmatprep.subr.mxu0 0.0
    %956 = vmatpush1.msra.mxu0 %v847
    %957 = vmatprep.subr.mxu0 0.0
    %958 = vmatpush1.msra.mxu0 %v848
    %959 = vmatprep.subr.mxu0 0.0
    %960 = vmatpush1.msra.mxu0 %v849
    %961 = vmatprep.subr.mxu0 0.0
    %962 = vmatpush1.msra.mxu0 %v850
    %963 = vmatprep.subr.mxu0 0.0
    %964 = vmatpush1.msra.mxu0 0.0
    %965 = vmatprep.subr.mxu0 0.0
    %966 = vmatpush1.msra.mxu0 0.0
    %967 = vmatprep.subr.mxu0 0.0
    %968 = vmatpush1.msra.mxu0 0.0
    %969 = vmatprep.subr.mxu0 0.0
    %970 = vmatpush1.msra.mxu0 0.0
    %971 = vmatprep.subr.mxu0 0.0
    %972 = vmatpush1.msra.mxu0 0.0
    %973 = vmatprep.subr.mxu0 0.0
    %974 = vmatpush1.msra.mxu0 0.0
    %975 = vmatprep.subr.mxu0 0.0
    %976 = vmatpush1.msra.mxu0 0.0
    %977 = vmatprep.subr.mxu0 0.0
    %978 = vmatpush1.msra.mxu0 0.0
    %979 = vmatprep.subr.mxu0 0.0
    %980 = vmatpush1.msra.mxu0 0.0
    %981 = vmatprep.subr.mxu0 0.0
    %982 = vmatpush1.msra.mxu0 0.0
    %983 = vmatprep.subr.mxu0 0.0
    %984 = vmatpush1.msra.mxu0 0.0
    %985 = vmatprep.subr.mxu0 0.0
    %986 = vmatpush1.msra.mxu0 0.0
    %987 = vmatprep.subr.mxu0 0.0
    %988 = vmatpush1.msra.mxu0 0.0
    %989 = vmatprep.subr.mxu0 0.0
    %990 = vmatpush1.msra.mxu0 0.0
    %991 = vmatprep.subr.mxu0 0.0
    %992 = vmatpush1.msra.mxu0 0.0
    %993 = vmatprep.subr.mxu0 0.0
    %994 = vmatpush1.msra.mxu0 0.0
    %995 = vmatprep.mubr.f32.mxu0 0.0
    %996 = vmatmul.mubr.f32.gmra.mrb[0].mxu0 %v800
    %v997 = vpop.f32.mrb[0].mxu0
    %v998 = vadd.f32 %v918, %v997
    %v999 = vpop.f32.mrb[0].mxu0
    %1000 = vmatprep.mubr.f32.mxu0 0.0
    %1001 = vmatmul.mubr.f32.gmra.mrb[0].mxu0 %v801
    %v1002 = vpop.f32.mrb[0].mxu0
    %v1003 = vadd.f32 %v923, %v1002
    %v1004 = vpop.f32.mrb[0].mxu0
    %1005 = vmatprep.mubr.f32.mxu0 0.0
    %1006 = vmatmul.mubr.f32.gmra.mrb[0].mxu0 %v802
    %v1007 = vpop.f32.mrb[0].mxu0
    %v1008 = vadd.f32 %v928, %v1007
    %v1009 = vpop.f32.mrb[0].mxu0
    %1010 = vdwg.mxu0
    %v1011 = vld [vmem:[%s19] sm:$0x1]
    %v1013 = vlaneseq
    %v1014 = vshrl.u32 %v1013, 7
    %v1015 = vsub.s32 0, %v1014
    %v1016 = vrot.slane %v1011, %v1015
    %v1018 = vmul.f32 %v998, %v1016
    %v1019 = vmul.f32 %v1003, %v1016
    %v1020 = vmul.f32 %v1008, %v1016
    %v1021 = vld [vmem:[%s21] sm:$0x1]
    %v1023 = vlaneseq
    %v1024 = vshrl.u32 %v1023, 7
    %v1025 = vsub.s32 0, %v1024
    %v1026 = vrot.slane %v1021, %v1025
    %v1028 = vadd.f32 %v1018, %v1026
    %v1029 = vadd.f32 %v1019, %v1026
    %v1030 = vadd.f32 %v1020, %v1026
    %v1031 = vmax.f32 %v1028, 0.0
    %v1032 = vmax.f32 %v1029, 0.0
    %v1033 = vmax.f32 %v1030, 0.0
    %1034 = vst [vmem:[#allocation4 + $0x1] sm:$0xff] %v1031
    %1035 = vst [vmem:[#allocation4 + $0x9] sm:$0xfc] %v1032
    %1036 = vst [vmem:[#allocation4 + $0x11] sm:$0x3] %v1033
    %v1037 = vld [vmem:[#allocation4] sm:$0xff]
    %v1038 = vld [vmem:[#allocation4 + $0x8] sm:$0xff]
    %v1039 = vld [vmem:[#allocation4 + $0x10] sm:$0x3]
    %v1040 = vld [vmem:[#allocation4 + $0x1] sm:$0xff]
    %v1041 = vld [vmem:[#allocation4 + $0x9] sm:$0xff]
    %v1042 = vld [vmem:[#allocation4 + $0x11] sm:$0x3]
    %v1043 = vld [vmem:[#allocation4 + $0x2] sm:$0xff]
    %v1044 = vld [vmem:[#allocation4 + $0xa] sm:$0xff]
    %v1045 = vld [vmem:[#allocation4 + $0x12] sm:$0x3]
    %v1046 = vld [vmem:[%s29] sm:$0xff]
    %vm1047 = vcmask 146432
    %v1049 = vsel %vm1047, %v1046, 0
    %v1052 = vsel %vm346, %v1039, 0
    %v1055 = vsel %vm346, %v1042, 0
    %v1058 = vsel %vm346, %v1045, 0
    %1060 = vmatprep.subr.mxu0 %v1040
    %1061 = vmatpush1.msra.mxu0 %v1037
    %1062 = vmatprep.subr.mxu0 %v1041
    %1063 = vmatpush1.msra.mxu0 %v1038
    %1064 = vmatprep.subr.mxu0 %v1055
    %1065 = vmatpush1.msra.mxu0 %v1052
    %1066 = vmatprep.subr.mxu0 0.0
    %1067 = vmatpush1.msra.mxu0 0.0
    %1068 = vmatprep.subr.mxu0 0.0
    %1069 = vmatpush1.msra.mxu0 0.0
    %1070 = vmatprep.subr.mxu0 0.0
    %1071 = vmatpush1.msra.mxu0 0.0
    %1072 = vmatprep.subr.mxu0 0.0
    %1073 = vmatpush1.msra.mxu0 0.0
    %1074 = vmatprep.subr.mxu0 0.0
    %1075 = vmatpush1.msra.mxu0 0.0
    %1076 = vmatprep.subr.mxu0 0.0
    %1077 = vmatpush1.msra.mxu0 0.0
    %1078 = vmatprep.subr.mxu0 0.0
    %1079 = vmatpush1.msra.mxu0 0.0
    %1080 = vmatprep.subr.mxu0 0.0
    %1081 = vmatpush1.msra.mxu0 0.0
    %1082 = vmatprep.subr.mxu0 0.0
    %1083 = vmatpush1.msra.mxu0 0.0
    %1084 = vmatprep.subr.mxu0 0.0
    %1085 = vmatpush1.msra.mxu0 0.0
    %1086 = vmatprep.subr.mxu0 0.0
    %1087 = vmatpush1.msra.mxu0 0.0
    %1088 = vmatprep.subr.mxu0 0.0
    %1089 = vmatpush1.msra.mxu0 0.0
    %1090 = vmatprep.subr.mxu0 0.0
    %1091 = vmatpush1.msra.mxu0 0.0
    %1092 = vmatprep.subr.mxu0 0.0
    %1093 = vmatpush1.msra.mxu0 0.0
    %1094 = vmatprep.subr.mxu0 0.0
    %1095 = vmatpush1.msra.mxu0 0.0
    %1096 = vmatprep.subr.mxu0 0.0
    %1097 = vmatpush1.msra.mxu0 0.0
    %1098 = vmatprep.subr.mxu0 0.0
    %1099 = vmatpush1.msra.mxu0 0.0
    %1100 = vmatprep.subr.mxu0 0.0
    %1101 = vmatpush1.msra.mxu0 0.0
    %1102 = vmatprep.subr.mxu0 0.0
    %1103 = vmatpush1.msra.mxu0 0.0
    %1104 = vmatprep.subr.mxu0 0.0
    %1105 = vmatpush1.msra.mxu0 0.0
    %1106 = vmatprep.subr.mxu0 0.0
    %1107 = vmatpush1.msra.mxu0 0.0
    %1108 = vmatprep.subr.mxu0 0.0
    %1109 = vmatpush1.msra.mxu0 0.0
    %1110 = vmatprep.subr.mxu0 0.0
    %1111 = vmatpush1.msra.mxu0 0.0
    %1112 = vmatprep.subr.mxu0 0.0
    %1113 = vmatpush1.msra.mxu0 0.0
    %1114 = vmatprep.subr.mxu0 0.0
    %1115 = vmatpush1.msra.mxu0 0.0
    %1116 = vmatprep.subr.mxu0 0.0
    %1117 = vmatpush1.msra.mxu0 0.0
    %1118 = vmatprep.subr.mxu0 0.0
    %1119 = vmatpush1.msra.mxu0 0.0
    %1120 = vmatprep.subr.mxu0 0.0
    %1121 = vmatpush1.msra.mxu0 0.0
    %1122 = vmatprep.subr.mxu0 0.0
    %1123 = vmatpush1.msra.mxu0 0.0
    %1124 = vmatprep.mubr.f32.mxu0 0.0
    %1125 = vmatmul.mubr.f32.gmra.mrb[0].mxu0 %v1049
    %v1126 = vpop.f32.mrb[0].mxu0
    %v1127 = vadd.f32 0.0, %v1126
    %v1128 = vpop.f32.mrb[0].mxu0
    %v1129 = vadd.f32 0.0, %v1128
    %1130 = vdwg.mxu0
    %1131 = vmatprep.subr.mxu0 0.0
    %1132 = vmatpush1.msra.mxu0 %v1043
    %1133 = vmatprep.subr.mxu0 0.0
    %1134 = vmatpush1.msra.mxu0 %v1044
    %1135 = vmatprep.subr.mxu0 0.0
    %1136 = vmatpush1.msra.mxu0 %v1058
    %1137 = vmatprep.subr.mxu0 0.0
    %1138 = vmatpush1.msra.mxu0 0.0
    %1139 = vmatprep.subr.mxu0 0.0
    %1140 = vmatpush1.msra.mxu0 0.0
    %1141 = vmatprep.subr.mxu0 0.0
    %1142 = vmatpush1.msra.mxu0 0.0
    %1143 = vmatprep.subr.mxu0 0.0
    %1144 = vmatpush1.msra.mxu0 0.0
    %1145 = vmatprep.subr.mxu0 0.0
    %1146 = vmatpush1.msra.mxu0 0.0
    %1147 = vmatprep.subr.mxu0 0.0
    %1148 = vmatpush1.msra.mxu0 0.0
    %1149 = vmatprep.subr.mxu0 0.0
    %1150 = vmatpush1.msra.mxu0 0.0
    %1151 = vmatprep.subr.mxu0 0.0
    %1152 = vmatpush1.msra.mxu0 0.0
    %1153 = vmatprep.subr.mxu0 0.0
    %1154 = vmatpush1.msra.mxu0 0.0
    %1155 = vmatprep.subr.mxu0 0.0
    %1156 = vmatpush1.msra.mxu0 0.0
    %1157 = vmatprep.subr.mxu0 0.0
    %1158 = vmatpush1.msra.mxu0 0.0
    %1159 = vmatprep.subr.mxu0 0.0
    %1160 = vmatpush1.msra.mxu0 0.0
    %1161 = vmatprep.subr.mxu0 0.0
    %1162 = vmatpush1.msra.mxu0 0.0
    %1163 = vmatprep.subr.mxu0 0.0
    %1164 = vmatpush1.msra.mxu0 0.0
    %1165 = vmatprep.subr.mxu0 0.0
    %1166 = vmatpush1.msra.mxu0 0.0
    %1167 = vmatprep.subr.mxu0 0.0
    %1168 = vmatpush1.msra.mxu0 0.0
    %1169 = vmatprep.subr.mxu0 0.0
    %1170 = vmatpush1.msra.mxu0 0.0
    %1171 = vmatprep.subr.mxu0 0.0
    %1172 = vmatpush1.msra.mxu0 0.0
    %1173 = vmatprep.subr.mxu0 0.0
    %1174 = vmatpush1.msra.mxu0 0.0
    %1175 = vmatprep.subr.mxu0 0.0
    %1176 = vmatpush1.msra.mxu0 0.0
    %1177 = vmatprep.subr.mxu0 0.0
    %1178 = vmatpush1.msra.mxu0 0.0
    %1179 = vmatprep.subr.mxu0 0.0
    %1180 = vmatpush1.msra.mxu0 0.0
    %1181 = vmatprep.subr.mxu0 0.0
    %1182 = vmatpush1.msra.mxu0 0.0
    %1183 = vmatprep.subr.mxu0 0.0
    %1184 = vmatpush1.msra.mxu0 0.0
    %1185 = vmatprep.subr.mxu0 0.0
    %1186 = vmatpush1.msra.mxu0 0.0
    %1187 = vmatprep.subr.mxu0 0.0
    %1188 = vmatpush1.msra.mxu0 0.0
    %1189 = vmatprep.subr.mxu0 0.0
    %1190 = vmatpush1.msra.mxu0 0.0
    %1191 = vmatprep.subr.mxu0 0.0
    %1192 = vmatpush1.msra.mxu0 0.0
    %1193 = vmatprep.subr.mxu0 0.0
    %1194 = vmatpush1.msra.mxu0 0.0
    %1195 = vmatprep.mubr.f32.mxu0 0.0
    %1196 = vmatmul.mubr.f32.gmra.mrb[0].mxu0 %v1049
    %v1197 = vpop.f32.mrb[0].mxu0
    %v1198 = vadd.f32 0.0, %v1197
    %v1199 = vpop.f32.mrb[0].mxu0
    %1200 = vdwg.mxu0
    %v1201 = vld [vmem:[#allocation16] sm:$0xff]
    %v1202 = vld [vmem:[#allocation16 + $0x8] sm:$0xff]
    %v1203 = vld [vmem:[#allocation16 + $0x10] sm:$0xff]
    %v1204 = vld [vmem:[#allocation16 + $0x18] sm:$0xff]
    %v1205 = vld [vmem:[#allocation16 + $0x20] sm:$0xff]
    %v1206 = vld [vmem:[#allocation16 + $0x28] sm:$0xff]
    %v1207 = vld [vmem:[#allocation16 + $0x30] sm:$0xff]
    %v1208 = vld [vmem:[#allocation16 + $0x38] sm:$0xff]
    %v1209 = vld [vmem:[#allocation16 + $0x40] sm:$0xff]
    %v1210 = vld [vmem:[#allocation16 + $0x48] sm:$0xff]
    %v1211 = vld [vmem:[#allocation16 + $0x50] sm:$0xff]
    %v1212 = vld [vmem:[#allocation16 + $0x58] sm:$0xff]
    %v1213 = vld [vmem:[#allocation16 + $0x60] sm:$0xff]
    %v1214 = vld [vmem:[#allocation16 + $0x68] sm:$0xff]
    %v1215 = vld [vmem:[#allocation16 + $0x70] sm:$0xff]
    %v1216 = vld [vmem:[#allocation16 + $0x78] sm:$0xff]
    %v1217 = vld [vmem:[#allocation16 + $0x80] sm:$0xff]
    %v1218 = vld [vmem:[#allocation16 + $0x88] sm:$0xff]
    %v1219 = vld [vmem:[#allocation16 + $0x90] sm:$0xff]
    %v1220 = vld [vmem:[#allocation16 + $0x98] sm:$0xff]
    %v1221 = vld [vmem:[#allocation16 + $0xa0] sm:$0xff]
    %v1222 = vld [vmem:[#allocation16 + $0xa8] sm:$0xff]
    %v1223 = vld [vmem:[#allocation16 + $0xb0] sm:$0xff]
    %v1224 = vld [vmem:[#allocation16 + $0xb8] sm:$0xff]
    %v1225 = vld [vmem:[#allocation16 + $0xc0] sm:$0xff]
    %v1226 = vld [vmem:[#allocation16 + $0xc8] sm:$0xff]
    %v1227 = vld [vmem:[#allocation16 + $0xd0] sm:$0xff]
    %v1228 = vld [vmem:[#allocation16 + $0xd8] sm:$0xff]
    %v1229 = vld [vmem:[#allocation16 + $0xe0] sm:$0xff]
    %v1230 = vld [vmem:[#allocation16 + $0xe8] sm:$0xff]
    %v1231 = vld [vmem:[#allocation16 + $0xf0] sm:$0xff]
    %v1232 = vld [vmem:[#allocation16 + $0xf8] sm:$0xff]
    %v1233 = vld [vmem:[#allocation16 + $0x100] sm:$0xff]
    %v1234 = vld [vmem:[#allocation16 + $0x108] sm:$0xff]
    %v1235 = vld [vmem:[#allocation16 + $0x110] sm:$0xff]
    %v1236 = vld [vmem:[#allocation16 + $0x118] sm:$0xff]
    %v1237 = vld [vmem:[#allocation16 + $0x120] sm:$0xff]
    %v1238 = vld [vmem:[#allocation16 + $0x128] sm:$0xff]
    %v1239 = vld [vmem:[#allocation16 + $0x130] sm:$0xff]
    %v1240 = vld [vmem:[#allocation16 + $0x138] sm:$0xff]
    %v1241 = vld [vmem:[#allocation16 + $0x140] sm:$0xff]
    %v1242 = vld [vmem:[#allocation16 + $0x148] sm:$0xff]
    %v1243 = vld [vmem:[#allocation16 + $0x150] sm:$0xff]
    %v1244 = vld [vmem:[#allocation16 + $0x158] sm:$0xff]
    %v1245 = vld [vmem:[#allocation16 + $0x160] sm:$0xff]
    %v1246 = vld [vmem:[#allocation16 + $0x168] sm:$0xff]
    %v1247 = vld [vmem:[#allocation16 + $0x170] sm:$0xff]
    %v1248 = vld [vmem:[#allocation16 + $0x178] sm:$0xff]
    %1249 = vmatprep.subr.mxu0 0.0
    %1250 = vmatpush1.msra.mxu0 %v1201
    %1251 = vmatprep.subr.mxu0 0.0
    %1252 = vmatpush1.msra.mxu0 %v1202
    %1253 = vmatprep.subr.mxu0 0.0
    %1254 = vmatpush1.msra.mxu0 %v1203
    %1255 = vmatprep.subr.mxu0 0.0
    %1256 = vmatpush1.msra.mxu0 %v1204
    %1257 = vmatprep.subr.mxu0 0.0
    %1258 = vmatpush1.msra.mxu0 %v1205
    %1259 = vmatprep.subr.mxu0 0.0
    %1260 = vmatpush1.msra.mxu0 %v1206
    %1261 = vmatprep.subr.mxu0 0.0
    %1262 = vmatpush1.msra.mxu0 %v1207
    %1263 = vmatprep.subr.mxu0 0.0
    %1264 = vmatpush1.msra.mxu0 %v1208
    %1265 = vmatprep.subr.mxu0 0.0
    %1266 = vmatpush1.msra.mxu0 %v1209
    %1267 = vmatprep.subr.mxu0 0.0
    %1268 = vmatpush1.msra.mxu0 %v1210
    %1269 = vmatprep.subr.mxu0 0.0
    %1270 = vmatpush1.msra.mxu0 %v1211
    %1271 = vmatprep.subr.mxu0 0.0
    %1272 = vmatpush1.msra.mxu0 %v1212
    %1273 = vmatprep.subr.mxu0 0.0
    %1274 = vmatpush1.msra.mxu0 %v1213
    %1275 = vmatprep.subr.mxu0 0.0
    %1276 = vmatpush1.msra.mxu0 %v1214
    %1277 = vmatprep.subr.mxu0 0.0
    %1278 = vmatpush1.msra.mxu0 %v1215
    %1279 = vmatprep.subr.mxu0 0.0
    %1280 = vmatpush1.msra.mxu0 %v1216
    %1281 = vmatprep.subr.mxu0 0.0
    %1282 = vmatpush1.msra.mxu0 %v1217
    %1283 = vmatprep.subr.mxu0 0.0
    %1284 = vmatpush1.msra.mxu0 %v1218
    %1285 = vmatprep.subr.mxu0 0.0
    %1286 = vmatpush1.msra.mxu0 %v1219
    %1287 = vmatprep.subr.mxu0 0.0
    %1288 = vmatpush1.msra.mxu0 %v1220
    %1289 = vmatprep.subr.mxu0 0.0
    %1290 = vmatpush1.msra.mxu0 %v1221
    %1291 = vmatprep.subr.mxu0 0.0
    %1292 = vmatpush1.msra.mxu0 %v1222
    %1293 = vmatprep.subr.mxu0 0.0
    %1294 = vmatpush1.msra.mxu0 %v1223
    %1295 = vmatprep.subr.mxu0 0.0
    %1296 = vmatpush1.msra.mxu0 %v1224
    %1297 = vmatprep.subr.mxu0 0.0
    %1298 = vmatpush1.msra.mxu0 %v1225
    %1299 = vmatprep.subr.mxu0 0.0
    %1300 = vmatpush1.msra.mxu0 %v1226
    %1301 = vmatprep.subr.mxu0 0.0
    %1302 = vmatpush1.msra.mxu0 %v1227
    %1303 = vmatprep.subr.mxu0 0.0
    %1304 = vmatpush1.msra.mxu0 %v1228
    %1305 = vmatprep.subr.mxu0 0.0
    %1306 = vmatpush1.msra.mxu0 %v1229
    %1307 = vmatprep.subr.mxu0 0.0
    %1308 = vmatpush1.msra.mxu0 %v1230
    %1309 = vmatprep.subr.mxu0 0.0
    %1310 = vmatpush1.msra.mxu0 %v1231
    %1311 = vmatprep.subr.mxu0 0.0
    %1312 = vmatpush1.msra.mxu0 %v1232
    %1313 = vmatprep.mubr.f32.mxu0 %v1129
    %1314 = vmatmul.mubr.f32.gmra.mrb[0].mxu0 %v1127
    %v1315 = vpop.f32.mrb[0].mxu0
    %v1316 = vadd.f32 0.0, %v1315
    %v1317 = vpop.f32.mrb[0].mxu0
    %1318 = vdwg.mxu0
    %1319 = vmatprep.subr.mxu0 0.0
    %1320 = vmatpush1.msra.mxu0 %v1233
    %1321 = vmatprep.subr.mxu0 0.0
    %1322 = vmatpush1.msra.mxu0 %v1234
    %1323 = vmatprep.subr.mxu0 0.0
    %1324 = vmatpush1.msra.mxu0 %v1235
    %1325 = vmatprep.subr.mxu0 0.0
    %1326 = vmatpush1.msra.mxu0 %v1236
    %1327 = vmatprep.subr.mxu0 0.0
    %1328 = vmatpush1.msra.mxu0 %v1237
    %1329 = vmatprep.subr.mxu0 0.0
    %1330 = vmatpush1.msra.mxu0 %v1238
    %1331 = vmatprep.subr.mxu0 0.0
    %1332 = vmatpush1.msra.mxu0 %v1239
    %1333 = vmatprep.subr.mxu0 0.0
    %1334 = vmatpush1.msra.mxu0 %v1240
    %1335 = vmatprep.subr.mxu0 0.0
    %1336 = vmatpush1.msra.mxu0 %v1241
    %1337 = vmatprep.subr.mxu0 0.0
    %1338 = vmatpush1.msra.mxu0 %v1242
    %1339 = vmatprep.subr.mxu0 0.0
    %1340 = vmatpush1.msra.mxu0 %v1243
    %1341 = vmatprep.subr.mxu0 0.0
    %1342 = vmatpush1.msra.mxu0 %v1244
    %1343 = vmatprep.subr.mxu0 0.0
    %1344 = vmatpush1.msra.mxu0 %v1245
    %1345 = vmatprep.subr.mxu0 0.0
    %1346 = vmatpush1.msra.mxu0 %v1246
    %1347 = vmatprep.subr.mxu0 0.0
    %1348 = vmatpush1.msra.mxu0 %v1247
    %1349 = vmatprep.subr.mxu0 0.0
    %1350 = vmatpush1.msra.mxu0 %v1248
    %1351 = vmatprep.subr.mxu0 0.0
    %1352 = vmatpush1.msra.mxu0 0.0
    %1353 = vmatprep.subr.mxu0 0.0
    %1354 = vmatpush1.msra.mxu0 0.0
    %1355 = vmatprep.subr.mxu0 0.0
    %1356 = vmatpush1.msra.mxu0 0.0
    %1357 = vmatprep.subr.mxu0 0.0
    %1358 = vmatpush1.msra.mxu0 0.0
    %1359 = vmatprep.subr.mxu0 0.0
    %1360 = vmatpush1.msra.mxu0 0.0
    %1361 = vmatprep.subr.mxu0 0.0
    %1362 = vmatpush1.msra.mxu0 0.0
    %1363 = vmatprep.subr.mxu0 0.0
    %1364 = vmatpush1.msra.mxu0 0.0
    %1365 = vmatprep.subr.mxu0 0.0
    %1366 = vmatpush1.msra.mxu0 0.0
    %1367 = vmatprep.subr.mxu0 0.0
    %1368 = vmatpush1.msra.mxu0 0.0
    %1369 = vmatprep.subr.mxu0 0.0
    %1370 = vmatpush1.msra.mxu0 0.0
    %1371 = vmatprep.subr.mxu0 0.0
    %1372 = vmatpush1.msra.mxu0 0.0
    %1373 = vmatprep.subr.mxu0 0.0
    %1374 = vmatpush1.msra.mxu0 0.0
    %1375 = vmatprep.subr.mxu0 0.0
    %1376 = vmatpush1.msra.mxu0 0.0
    %1377 = vmatprep.subr.mxu0 0.0
    %1378 = vmatpush1.msra.mxu0 0.0
    %1379 = vmatprep.subr.mxu0 0.0
    %1380 = vmatpush1.msra.mxu0 0.0
    %1381 = vmatprep.subr.mxu0 0.0
    %1382 = vmatpush1.msra.mxu0 0.0
    %1383 = vmatprep.mubr.f32.mxu0 0.0
    %1384 = vmatmul.mubr.f32.gmra.mrb[0].mxu0 %v1198
    %v1385 = vpop.f32.mrb[0].mxu0
    %v1386 = vadd.f32 %v1316, %v1385
    %v1387 = vpop.f32.mrb[0].mxu0
    %1388 = vdwg.mxu0
    %v1389 = vld [vmem:[%s25] sm:$0x1]
    %v1391 = vlaneseq
    %v1392 = vshrl.u32 %v1391, 7
    %v1393 = vsub.s32 0, %v1392
    %v1394 = vrot.slane %v1389, %v1393
    %v1396 = vmul.f32 %v1386, %v1394
    %v1397 = vld [vmem:[%s27] sm:$0x1]
    %v1399 = vlaneseq
    %v1400 = vshrl.u32 %v1399, 7
    %v1401 = vsub.s32 0, %v1400
    %v1402 = vrot.slane %v1397, %v1401
    %v1404 = vadd.f32 %v1396, %v1402
    %v1405 = vmax.f32 %v1404, 0.0
    %1406 = vst [vmem:[#allocation5 + $0x1] sm:$0xf] %v1405
    %1407 = vst [vmem:[#allocation5 + $0x3] sm:$0xf0] %v1405
    %v1408 = vld [vmem:[#allocation5] sm:$0xff]
    %v1409 = vld [vmem:[#allocation5 + $0x8] sm:$0x3]
    %v1410 = vld [vmem:[#allocation5 + $0x1] sm:$0xff]
    %v1411 = vld [vmem:[#allocation5 + $0x9] sm:$0x3]
    %v1412 = vld [vmem:[#allocation5 + $0x2] sm:$0xff]
    %v1413 = vld [vmem:[#allocation5 + $0xa] sm:$0x3]
    %v1414 = vld [vmem:[#allocation17] sm:$0xff]
    %v1415 = vld [vmem:[#allocation17 + $0x8] sm:$0xff]
    %v1416 = vld [vmem:[#allocation17 + $0x10] sm:$0xff]
    %v1417 = vld [vmem:[#allocation17 + $0x18] sm:$0xff]
    %v1418 = vld [vmem:[#allocation17 + $0x20] sm:$0xff]
    %v1419 = vld [vmem:[#allocation17 + $0x28] sm:$0xff]
    %v1420 = vld [vmem:[#allocation17 + $0x30] sm:$0xff]
    %v1421 = vld [vmem:[#allocation17 + $0x38] sm:$0xff]
    %v1422 = vld [vmem:[#allocation17 + $0x40] sm:$0xff]
    %v1423 = vld [vmem:[#allocation17 + $0x48] sm:$0xff]
    %v1424 = vld [vmem:[#allocation17 + $0x50] sm:$0xff]
    %v1425 = vld [vmem:[#allocation17 + $0x58] sm:$0xff]
    %v1426 = vld [vmem:[#allocation17 + $0x60] sm:$0xff]
    %v1427 = vld [vmem:[#allocation17 + $0x68] sm:$0xff]
    %v1428 = vld [vmem:[#allocation17 + $0x70] sm:$0xff]
    %v1429 = vld [vmem:[#allocation17 + $0x78] sm:$0xff]
    %v1430 = vld [vmem:[#allocation17 + $0x80] sm:$0xff]
    %v1431 = vld [vmem:[#allocation17 + $0x88] sm:$0xff]
    %v1432 = vld [vmem:[#allocation17 + $0x90] sm:$0xff]
    %v1433 = vld [vmem:[#allocation17 + $0x98] sm:$0xff]
    %v1434 = vld [vmem:[#allocation17 + $0xa0] sm:$0xff]
    %v1435 = vld [vmem:[#allocation17 + $0xa8] sm:$0xff]
    %v1436 = vld [vmem:[#allocation17 + $0xb0] sm:$0xff]
    %v1437 = vld [vmem:[#allocation17 + $0xb8] sm:$0xff]
    %v1438 = vld [vmem:[#allocation17 + $0xc0] sm:$0xff]
    %v1439 = vld [vmem:[#allocation17 + $0xc8] sm:$0xff]
    %v1440 = vld [vmem:[#allocation17 + $0xd0] sm:$0xff]
    %v1441 = vld [vmem:[#allocation17 + $0xd8] sm:$0xff]
    %v1442 = vld [vmem:[#allocation17 + $0xe0] sm:$0xff]
    %v1443 = vld [vmem:[#allocation17 + $0xe8] sm:$0xff]
    %v1444 = vld [vmem:[#allocation17 + $0xf0] sm:$0xff]
    %v1445 = vld [vmem:[#allocation17 + $0xf8] sm:$0xff]
    %v1446 = vld [vmem:[#allocation17 + $0x100] sm:$0xff]
    %v1447 = vld [vmem:[#allocation17 + $0x108] sm:$0xff]
    %v1448 = vld [vmem:[#allocation17 + $0x110] sm:$0xff]
    %v1449 = vld [vmem:[#allocation17 + $0x118] sm:$0xff]
    %v1450 = vld [vmem:[#allocation17 + $0x120] sm:$0xff]
    %v1451 = vld [vmem:[#allocation17 + $0x128] sm:$0xff]
    %v1452 = vld [vmem:[#allocation17 + $0x130] sm:$0xff]
    %v1453 = vld [vmem:[#allocation17 + $0x138] sm:$0xff]
    %v1454 = vld [vmem:[#allocation17 + $0x140] sm:$0xff]
    %v1455 = vld [vmem:[#allocation17 + $0x148] sm:$0xff]
    %v1456 = vld [vmem:[#allocation17 + $0x150] sm:$0xff]
    %v1457 = vld [vmem:[#allocation17 + $0x158] sm:$0xff]
    %v1458 = vld [vmem:[#allocation17 + $0x160] sm:$0xff]
    %v1459 = vld [vmem:[#allocation17 + $0x168] sm:$0xff]
    %v1460 = vld [vmem:[#allocation17 + $0x170] sm:$0xff]
    %v1461 = vld [vmem:[#allocation17 + $0x178] sm:$0xff]
    %1462 = vmatprep.subr.mxu0 0.0
    %1463 = vmatpush1.msra.mxu0 %v1414
    %1464 = vmatprep.subr.mxu0 0.0
    %1465 = vmatpush1.msra.mxu0 %v1415
    %1466 = vmatprep.subr.mxu0 0.0
    %1467 = vmatpush1.msra.mxu0 %v1416
    %1468 = vmatprep.subr.mxu0 0.0
    %1469 = vmatpush1.msra.mxu0 %v1417
    %1470 = vmatprep.subr.mxu0 0.0
    %1471 = vmatpush1.msra.mxu0 %v1418
    %1472 = vmatprep.subr.mxu0 0.0
    %1473 = vmatpush1.msra.mxu0 %v1419
    %1474 = vmatprep.subr.mxu0 0.0
    %1475 = vmatpush1.msra.mxu0 %v1420
    %1476 = vmatprep.subr.mxu0 0.0
    %1477 = vmatpush1.msra.mxu0 %v1421
    %1478 = vmatprep.subr.mxu0 0.0
    %1479 = vmatpush1.msra.mxu0 %v1422
    %1480 = vmatprep.subr.mxu0 0.0
    %1481 = vmatpush1.msra.mxu0 %v1423
    %1482 = vmatprep.subr.mxu0 0.0
    %1483 = vmatpush1.msra.mxu0 %v1424
    %1484 = vmatprep.subr.mxu0 0.0
    %1485 = vmatpush1.msra.mxu0 %v1425
    %1486 = vmatprep.subr.mxu0 0.0
    %1487 = vmatpush1.msra.mxu0 %v1426
    %1488 = vmatprep.subr.mxu0 0.0
    %1489 = vmatpush1.msra.mxu0 %v1427
    %1490 = vmatprep.subr.mxu0 0.0
    %1491 = vmatpush1.msra.mxu0 %v1428
    %1492 = vmatprep.subr.mxu0 0.0
    %1493 = vmatpush1.msra.mxu0 %v1429
    %1494 = vmatprep.subr.mxu0 0.0
    %1495 = vmatpush1.msra.mxu0 %v1430
    %1496 = vmatprep.subr.mxu0 0.0
    %1497 = vmatpush1.msra.mxu0 %v1431
    %1498 = vmatprep.subr.mxu0 0.0
    %1499 = vmatpush1.msra.mxu0 %v1432
    %1500 = vmatprep.subr.mxu0 0.0
    %1501 = vmatpush1.msra.mxu0 %v1433
    %1502 = vmatprep.subr.mxu0 0.0
    %1503 = vmatpush1.msra.mxu0 %v1434
    %1504 = vmatprep.subr.mxu0 0.0
    %1505 = vmatpush1.msra.mxu0 %v1435
    %1506 = vmatprep.subr.mxu0 0.0
    %1507 = vmatpush1.msra.mxu0 %v1436
    %1508 = vmatprep.subr.mxu0 0.0
    %1509 = vmatpush1.msra.mxu0 %v1437
    %1510 = vmatprep.subr.mxu0 0.0
    %1511 = vmatpush1.msra.mxu0 %v1438
    %1512 = vmatprep.subr.mxu0 0.0
    %1513 = vmatpush1.msra.mxu0 %v1439
    %1514 = vmatprep.subr.mxu0 0.0
    %1515 = vmatpush1.msra.mxu0 %v1440
    %1516 = vmatprep.subr.mxu0 0.0
    %1517 = vmatpush1.msra.mxu0 %v1441
    %1518 = vmatprep.subr.mxu0 0.0
    %1519 = vmatpush1.msra.mxu0 %v1442
    %1520 = vmatprep.subr.mxu0 0.0
    %1521 = vmatpush1.msra.mxu0 %v1443
    %1522 = vmatprep.subr.mxu0 0.0
    %1523 = vmatpush1.msra.mxu0 %v1444
    %1524 = vmatprep.subr.mxu0 0.0
    %1525 = vmatpush1.msra.mxu0 %v1445
    %1526 = vmatprep.mubr.f32.mxu0 %v1410
    %1527 = vmatmul.mubr.f32.gmra.mrb[0].mxu0 %v1408
    %v1528 = vpop.f32.mrb[0].mxu0
    %v1529 = vadd.f32 0.0, %v1528
    %v1530 = vpop.f32.mrb[0].mxu0
    %1531 = vmatprep.mubr.f32.mxu0 %v1411
    %1532 = vmatmul.mubr.f32.gmra.mrb[0].mxu0 %v1409
    %v1533 = vpop.f32.mrb[0].mxu0
    %v1534 = vadd.f32 0.0, %v1533
    %v1535 = vpop.f32.mrb[0].mxu0
    %1536 = vdwg.mxu0
    %1537 = vmatprep.subr.mxu0 0.0
    %1538 = vmatpush1.msra.mxu0 %v1446
    %1539 = vmatprep.subr.mxu0 0.0
    %1540 = vmatpush1.msra.mxu0 %v1447
    %1541 = vmatprep.subr.mxu0 0.0
    %1542 = vmatpush1.msra.mxu0 %v1448
    %1543 = vmatprep.subr.mxu0 0.0
    %1544 = vmatpush1.msra.mxu0 %v1449
    %1545 = vmatprep.subr.mxu0 0.0
    %1546 = vmatpush1.msra.mxu0 %v1450
    %1547 = vmatprep.subr.mxu0 0.0
    %1548 = vmatpush1.msra.mxu0 %v1451
    %1549 = vmatprep.subr.mxu0 0.0
    %1550 = vmatpush1.msra.mxu0 %v1452
    %1551 = vmatprep.subr.mxu0 0.0
    %1552 = vmatpush1.msra.mxu0 %v1453
    %1553 = vmatprep.subr.mxu0 0.0
    %1554 = vmatpush1.msra.mxu0 %v1454
    %1555 = vmatprep.subr.mxu0 0.0
    %1556 = vmatpush1.msra.mxu0 %v1455
    %1557 = vmatprep.subr.mxu0 0.0
    %1558 = vmatpush1.msra.mxu0 %v1456
    %1559 = vmatprep.subr.mxu0 0.0
    %1560 = vmatpush1.msra.mxu0 %v1457
    %1561 = vmatprep.subr.mxu0 0.0
    %1562 = vmatpush1.msra.mxu0 %v1458
    %1563 = vmatprep.subr.mxu0 0.0
    %1564 = vmatpush1.msra.mxu0 %v1459
    %1565 = vmatprep.subr.mxu0 0.0
    %1566 = vmatpush1.msra.mxu0 %v1460
    %1567 = vmatprep.subr.mxu0 0.0
    %1568 = vmatpush1.msra.mxu0 %v1461
    %1569 = vmatprep.subr.mxu0 0.0
    %1570 = vmatpush1.msra.mxu0 0.0
    %1571 = vmatprep.subr.mxu0 0.0
    %1572 = vmatpush1.msra.mxu0 0.0
    %1573 = vmatprep.subr.mxu0 0.0
    %1574 = vmatpush1.msra.mxu0 0.0
    %1575 = vmatprep.subr.mxu0 0.0
    %1576 = vmatpush1.msra.mxu0 0.0
    %1577 = vmatprep.subr.mxu0 0.0
    %1578 = vmatpush1.msra.mxu0 0.0
    %1579 = vmatprep.subr.mxu0 0.0
    %1580 = vmatpush1.msra.mxu0 0.0
    %1581 = vmatprep.subr.mxu0 0.0
    %1582 = vmatpush1.msra.mxu0 0.0
    %1583 = vmatprep.subr.mxu0 0.0
    %1584 = vmatpush1.msra.mxu0 0.0
    %1585 = vmatprep.subr.mxu0 0.0
    %1586 = vmatpush1.msra.mxu0 0.0
    %1587 = vmatprep.subr.mxu0 0.0
    %1588 = vmatpush1.msra.mxu0 0.0
    %1589 = vmatprep.subr.mxu0 0.0
    %1590 = vmatpush1.msra.mxu0 0.0
    %1591 = vmatprep.subr.mxu0 0.0
    %1592 = vmatpush1.msra.mxu0 0.0
    %1593 = vmatprep.subr.mxu0 0.0
    %1594 = vmatpush1.msra.mxu0 0.0
    %1595 = vmatprep.subr.mxu0 0.0
    %1596 = vmatpush1.msra.mxu0 0.0
    %1597 = vmatprep.subr.mxu0 0.0
    %1598 = vmatpush1.msra.mxu0 0.0
    %1599 = vmatprep.subr.mxu0 0.0
    %1600 = vmatpush1.msra.mxu0 0.0
    %1601 = vmatprep.mubr.f32.mxu0 0.0
    %1602 = vmatmul.mubr.f32.gmra.mrb[0].mxu0 %v1412
    %v1603 = vpop.f32.mrb[0].mxu0
    %v1604 = vadd.f32 %v1529, %v1603
    %v1605 = vpop.f32.mrb[0].mxu0
    %1606 = vmatprep.mubr.f32.mxu0 0.0
    %1607 = vmatmul.mubr.f32.gmra.mrb[0].mxu0 %v1413
    %v1608 = vpop.f32.mrb[0].mxu0
    %v1609 = vadd.f32 %v1534, %v1608
    %v1610 = vpop.f32.mrb[0].mxu0
    %1611 = vdwg.mxu0
    %v1612 = vld [vmem:[%s33] sm:$0x1]
    %v1614 = vlaneseq
    %v1615 = vshrl.u32 %v1614, 7
    %v1616 = vsub.s32 0, %v1615
    %v1617 = vrot.slane %v1612, %v1616
    %v1619 = vmul.f32 %v1604, %v1617
    %v1620 = vmul.f32 %v1609, %v1617
    %v1621 = vld [vmem:[%s35] sm:$0x1]
    %v1623 = vlaneseq
    %v1624 = vshrl.u32 %v1623, 7
    %v1625 = vsub.s32 0, %v1624
    %v1626 = vrot.slane %v1621, %v1625
    %v1628 = vadd.f32 %v1619, %v1626
    %v1629 = vadd.f32 %v1620, %v1626
    %v1630 = vmax.f32 %v1628, 0.0
    %v1631 = vmax.f32 %v1629, 0.0
    %1632 = vst [vmem:[#allocation6 + $0x1] sm:$0xf] %v1630
    %1633 = vst [vmem:[#allocation6 + $0x1] sm:$0xc0] %v1630
    %1634 = vst [vmem:[#allocation6 + $0x9] sm:$0x3] %v1631
    %v1635 = vld [vmem:[#allocation6] sm:$0xff]
    %v1636 = vld [vmem:[#allocation6 + $0x8] sm:$0x3]
    %v1637 = vld [vmem:[#allocation6 + $0x1] sm:$0xff]
    %v1638 = vld [vmem:[#allocation6 + $0x9] sm:$0x3]
    %v1639 = vld [vmem:[#allocation6 + $0x2] sm:$0xff]
    %v1640 = vld [vmem:[#allocation6 + $0xa] sm:$0x3]
    %v1641 = vld [vmem:[#allocation19] sm:$0xff]
    %v1642 = vld [vmem:[#allocation19 + $0x8] sm:$0xff]
    %v1643 = vld [vmem:[#allocation19 + $0x10] sm:$0xff]
    %v1644 = vld [vmem:[#allocation19 + $0x18] sm:$0xff]
    %v1645 = vld [vmem:[#allocation19 + $0x20] sm:$0xff]
    %v1646 = vld [vmem:[#allocation19 + $0x28] sm:$0xff]
    %v1647 = vld [vmem:[#allocation19 + $0x30] sm:$0xff]
    %v1648 = vld [vmem:[#allocation19 + $0x38] sm:$0xff]
    %v1649 = vld [vmem:[#allocation19 + $0x40] sm:$0xff]
    %v1650 = vld [vmem:[#allocation19 + $0x48] sm:$0xff]
    %v1651 = vld [vmem:[#allocation19 + $0x50] sm:$0xff]
    %v1652 = vld [vmem:[#allocation19 + $0x58] sm:$0xff]
    %v1653 = vld [vmem:[#allocation19 + $0x60] sm:$0xff]
    %v1654 = vld [vmem:[#allocation19 + $0x68] sm:$0xff]
    %v1655 = vld [vmem:[#allocation19 + $0x70] sm:$0xff]
    %v1656 = vld [vmem:[#allocation19 + $0x78] sm:$0xff]
    %v1657 = vld [vmem:[#allocation19 + $0x80] sm:$0xff]
    %v1658 = vld [vmem:[#allocation19 + $0x88] sm:$0xff]
    %v1659 = vld [vmem:[#allocation19 + $0x90] sm:$0xff]
    %v1660 = vld [vmem:[#allocation19 + $0x98] sm:$0xff]
    %v1661 = vld [vmem:[#allocation19 + $0xa0] sm:$0xff]
    %v1662 = vld [vmem:[#allocation19 + $0xa8] sm:$0xff]
    %v1663 = vld [vmem:[#allocation19 + $0xb0] sm:$0xff]
    %v1664 = vld [vmem:[#allocation19 + $0xb8] sm:$0xff]
    %v1665 = vld [vmem:[#allocation19 + $0xc0] sm:$0xff]
    %v1666 = vld [vmem:[#allocation19 + $0xc8] sm:$0xff]
    %v1667 = vld [vmem:[#allocation19 + $0xd0] sm:$0xff]
    %v1668 = vld [vmem:[#allocation19 + $0xd8] sm:$0xff]
    %v1669 = vld [vmem:[#allocation19 + $0xe0] sm:$0xff]
    %v1670 = vld [vmem:[#allocation19 + $0xe8] sm:$0xff]
    %v1671 = vld [vmem:[#allocation19 + $0xf0] sm:$0xff]
    %v1672 = vld [vmem:[#allocation19 + $0xf8] sm:$0xff]
    %v1673 = vld [vmem:[#allocation19 + $0x100] sm:$0xff]
    %v1674 = vld [vmem:[#allocation19 + $0x108] sm:$0xff]
    %v1675 = vld [vmem:[#allocation19 + $0x110] sm:$0xff]
    %v1676 = vld [vmem:[#allocation19 + $0x118] sm:$0xff]
    %v1677 = vld [vmem:[#allocation19 + $0x120] sm:$0xff]
    %v1678 = vld [vmem:[#allocation19 + $0x128] sm:$0xff]
    %v1679 = vld [vmem:[#allocation19 + $0x130] sm:$0xff]
    %v1680 = vld [vmem:[#allocation19 + $0x138] sm:$0xff]
    %v1681 = vld [vmem:[#allocation19 + $0x140] sm:$0xff]
    %v1682 = vld [vmem:[#allocation19 + $0x148] sm:$0xff]
    %v1683 = vld [vmem:[#allocation19 + $0x150] sm:$0xff]
    %v1684 = vld [vmem:[#allocation19 + $0x158] sm:$0xff]
    %v1685 = vld [vmem:[#allocation19 + $0x160] sm:$0xff]
    %v1686 = vld [vmem:[#allocation19 + $0x168] sm:$0xff]
    %v1687 = vld [vmem:[#allocation19 + $0x170] sm:$0xff]
    %v1688 = vld [vmem:[#allocation19 + $0x178] sm:$0xff]
    %1689 = vmatprep.subr.mxu0 0.0
    %1690 = vmatpush1.msra.mxu0 %v1641
    %1691 = vmatprep.subr.mxu0 0.0
    %1692 = vmatpush1.msra.mxu0 %v1642
    %1693 = vmatprep.subr.mxu0 0.0
    %1694 = vmatpush1.msra.mxu0 %v1643
    %1695 = vmatprep.subr.mxu0 0.0
    %1696 = vmatpush1.msra.mxu0 %v1644
    %1697 = vmatprep.subr.mxu0 0.0
    %1698 = vmatpush1.msra.mxu0 %v1645
    %1699 = vmatprep.subr.mxu0 0.0
    %1700 = vmatpush1.msra.mxu0 %v1646
    %1701 = vmatprep.subr.mxu0 0.0
    %1702 = vmatpush1.msra.mxu0 %v1647
    %1703 = vmatprep.subr.mxu0 0.0
    %1704 = vmatpush1.msra.mxu0 %v1648
    %1705 = vmatprep.subr.mxu0 0.0
    %1706 = vmatpush1.msra.mxu0 %v1649
    %1707 = vmatprep.subr.mxu0 0.0
    %1708 = vmatpush1.msra.mxu0 %v1650
    %1709 = vmatprep.subr.mxu0 0.0
    %1710 = vmatpush1.msra.mxu0 %v1651
    %1711 = vmatprep.subr.mxu0 0.0
    %1712 = vmatpush1.msra.mxu0 %v1652
    %1713 = vmatprep.subr.mxu0 0.0
    %1714 = vmatpush1.msra.mxu0 %v1653
    %1715 = vmatprep.subr.mxu0 0.0
    %1716 = vmatpush1.msra.mxu0 %v1654
    %1717 = vmatprep.subr.mxu0 0.0
    %1718 = vmatpush1.msra.mxu0 %v1655
    %1719 = vmatprep.subr.mxu0 0.0
    %1720 = vmatpush1.msra.mxu0 %v1656
    %1721 = vmatprep.subr.mxu0 0.0
    %1722 = vmatpush1.msra.mxu0 %v1657
    %1723 = vmatprep.subr.mxu0 0.0
    %1724 = vmatpush1.msra.mxu0 %v1658
    %1725 = vmatprep.subr.mxu0 0.0
    %1726 = vmatpush1.msra.mxu0 %v1659
    %1727 = vmatprep.subr.mxu0 0.0
    %1728 = vmatpush1.msra.mxu0 %v1660
    %1729 = vmatprep.subr.mxu0 0.0
    %1730 = vmatpush1.msra.mxu0 %v1661
    %1731 = vmatprep.subr.mxu0 0.0
    %1732 = vmatpush1.msra.mxu0 %v1662
    %1733 = vmatprep.subr.mxu0 0.0
    %1734 = vmatpush1.msra.mxu0 %v1663
    %1735 = vmatprep.subr.mxu0 0.0
    %1736 = vmatpush1.msra.mxu0 %v1664
    %1737 = vmatprep.subr.mxu0 0.0
    %1738 = vmatpush1.msra.mxu0 %v1665
    %1739 = vmatprep.subr.mxu0 0.0
    %1740 = vmatpush1.msra.mxu0 %v1666
    %1741 = vmatprep.subr.mxu0 0.0
    %1742 = vmatpush1.msra.mxu0 %v1667
    %1743 = vmatprep.subr.mxu0 0.0
    %1744 = vmatpush1.msra.mxu0 %v1668
    %1745 = vmatprep.subr.mxu0 0.0
    %1746 = vmatpush1.msra.mxu0 %v1669
    %1747 = vmatprep.subr.mxu0 0.0
    %1748 = vmatpush1.msra.mxu0 %v1670
    %1749 = vmatprep.subr.mxu0 0.0
    %1750 = vmatpush1.msra.mxu0 %v1671
    %1751 = vmatprep.subr.mxu0 0.0
    %1752 = vmatpush1.msra.mxu0 %v1672
    %1753 = vmatprep.mubr.f32.mxu0 %v1637
    %1754 = vmatmul.mubr.f32.gmra.mrb[0].mxu0 %v1635
    %v1755 = vpop.f32.mrb[0].mxu0
    %v1756 = vadd.f32 0.0, %v1755
    %v1757 = vpop.f32.mrb[0].mxu0
    %1758 = vmatprep.mubr.f32.mxu0 %v1638
    %1759 = vmatmul.mubr.f32.gmra.mrb[0].mxu0 %v1636
    %v1760 = vpop.f32.mrb[0].mxu0
    %v1761 = vadd.f32 0.0, %v1760
    %v1762 = vpop.f32.mrb[0].mxu0
    %1763 = vdwg.mxu0
    %1764 = vmatprep.subr.mxu0 0.0
    %1765 = vmatpush1.msra.mxu0 %v1673
    %1766 = vmatprep.subr.mxu0 0.0
    %1767 = vmatpush1.msra.mxu0 %v1674
    %1768 = vmatprep.subr.mxu0 0.0
    %1769 = vmatpush1.msra.mxu0 %v1675
    %1770 = vmatprep.subr.mxu0 0.0
    %1771 = vmatpush1.msra.mxu0 %v1676
    %1772 = vmatprep.subr.mxu0 0.0
    %1773 = vmatpush1.msra.mxu0 %v1677
    %1774 = vmatprep.subr.mxu0 0.0
    %1775 = vmatpush1.msra.mxu0 %v1678
    %1776 = vmatprep.subr.mxu0 0.0
    %1777 = vmatpush1.msra.mxu0 %v1679
    %1778 = vmatprep.subr.mxu0 0.0
    %1779 = vmatpush1.msra.mxu0 %v1680
    %1780 = vmatprep.subr.mxu0 0.0
    %1781 = vmatpush1.msra.mxu0 %v1681
    %1782 = vmatprep.subr.mxu0 0.0
    %1783 = vmatpush1.msra.mxu0 %v1682
    %1784 = vmatprep.subr.mxu0 0.0
    %1785 = vmatpush1.msra.mxu0 %v1683
    %1786 = vmatprep.subr.mxu0 0.0
    %1787 = vmatpush1.msra.mxu0 %v1684
    %1788 = vmatprep.subr.mxu0 0.0
    %1789 = vmatpush1.msra.mxu0 %v1685
    %1790 = vmatprep.subr.mxu0 0.0
    %1791 = vmatpush1.msra.mxu0 %v1686
    %1792 = vmatprep.subr.mxu0 0.0
    %1793 = vmatpush1.msra.mxu0 %v1687
    %1794 = vmatprep.subr.mxu0 0.0
    %1795 = vmatpush1.msra.mxu0 %v1688
    %1796 = vmatprep.subr.mxu0 0.0
    %1797 = vmatpush1.msra.mxu0 0.0
    %1798 = vmatprep.subr.mxu0 0.0
    %1799 = vmatpush1.msra.mxu0 0.0
    %1800 = vmatprep.subr.mxu0 0.0
    %1801 = vmatpush1.msra.mxu0 0.0
    %1802 = vmatprep.subr.mxu0 0.0
    %1803 = vmatpush1.msra.mxu0 0.0
    %1804 = vmatprep.subr.mxu0 0.0
    %1805 = vmatpush1.msra.mxu0 0.0
    %1806 = vmatprep.subr.mxu0 0.0
    %1807 = vmatpush1.msra.mxu0 0.0
    %1808 = vmatprep.subr.mxu0 0.0
    %1809 = vmatpush1.msra.mxu0 0.0
    %1810 = vmatprep.subr.mxu0 0.0
    %1811 = vmatpush1.msra.mxu0 0.0
    %1812 = vmatprep.subr.mxu0 0.0
    %1813 = vmatpush1.msra.mxu0 0.0
    %1814 = vmatprep.subr.mxu0 0.0
    %1815 = vmatpush1.msra.mxu0 0.0
    %1816 = vmatprep.subr.mxu0 0.0
    %1817 = vmatpush1.msra.mxu0 0.0
    %1818 = vmatprep.subr.mxu0 0.0
    %1819 = vmatpush1.msra.mxu0 0.0
    %1820 = vmatprep.subr.mxu0 0.0
    %1821 = vmatpush1.msra.mxu0 0.0
    %1822 = vmatprep.subr.mxu0 0.0
    %1823 = vmatpush1.msra.mxu0 0.0
    %1824 = vmatprep.subr.mxu0 0.0
    %1825 = vmatpush1.msra.mxu0 0.0
    %1826 = vmatprep.subr.mxu0 0.0
    %1827 = vmatpush1.msra.mxu0 0.0
    %1828 = vmatprep.mubr.f32.mxu0 0.0
    %1829 = vmatmul.mubr.f32.gmra.mrb[0].mxu0 %v1639
    %v1830 = vpop.f32.mrb[0].mxu0
    %v1831 = vadd.f32 %v1756, %v1830
    %v1832 = vpop.f32.mrb[0].mxu0
    %1833 = vmatprep.mubr.f32.mxu0 0.0
    %1834 = vmatmul.mubr.f32.gmra.mrb[0].mxu0 %v1640
    %v1835 = vpop.f32.mrb[0].mxu0
    %v1836 = vadd.f32 %v1761, %v1835
    %v1837 = vpop.f32.mrb[0].mxu0
    %1838 = vdwg.mxu0
    %v1839 = vld [vmem:[%s39] sm:$0x1]
    %v1841 = vlaneseq
    %v1842 = vshrl.u32 %v1841, 7
    %v1843 = vsub.s32 0, %v1842
    %v1844 = vrot.slane %v1839, %v1843
    %v1846 = vmul.f32 %v1831, %v1844
    %v1847 = vmul.f32 %v1836, %v1844
    %v1848 = vld [vmem:[%s41] sm:$0x1]
    %v1850 = vlaneseq
    %v1851 = vshrl.u32 %v1850, 7
    %v1852 = vsub.s32 0, %v1851
    %v1853 = vrot.slane %v1848, %v1852
    %v1855 = vadd.f32 %v1846, %v1853
    %v1856 = vadd.f32 %v1847, %v1853
    %v1857 = vmax.f32 %v1855, 0.0
    %v1858 = vmax.f32 %v1856, 0.0
    %1859 = vst [vmem:[#allocation7 + $0x1] sm:$0xf] %v1857
    %1860 = vst [vmem:[#allocation7 + $0x1] sm:$0xc0] %v1857
    %1861 = vst [vmem:[#allocation7 + $0x9] sm:$0x3] %v1858
    %v1862 = vld [vmem:[#allocation7] sm:$0xff]
    %v1863 = vld [vmem:[#allocation7 + $0x8] sm:$0x3]
    %v1864 = vld [vmem:[#allocation7 + $0x1] sm:$0xff]
    %v1865 = vld [vmem:[#allocation7 + $0x9] sm:$0x3]
    %v1866 = vld [vmem:[#allocation7 + $0x2] sm:$0xff]
    %v1867 = vld [vmem:[#allocation7 + $0xa] sm:$0x3]
    %v1868 = vld [vmem:[#allocation20] sm:$0xff]
    %v1869 = vld [vmem:[#allocation20 + $0x8] sm:$0xff]
    %v1870 = vld [vmem:[#allocation20 + $0x10] sm:$0xff]
    %v1871 = vld [vmem:[#allocation20 + $0x18] sm:$0xff]
    %v1872 = vld [vmem:[#allocation20 + $0x20] sm:$0xff]
    %v1873 = vld [vmem:[#allocation20 + $0x28] sm:$0xff]
    %v1874 = vld [vmem:[#allocation20 + $0x30] sm:$0xff]
    %v1875 = vld [vmem:[#allocation20 + $0x38] sm:$0xff]
    %v1876 = vld [vmem:[#allocation20 + $0x40] sm:$0xff]
    %v1877 = vld [vmem:[#allocation20 + $0x48] sm:$0xff]
    %v1878 = vld [vmem:[#allocation20 + $0x50] sm:$0xff]
    %v1879 = vld [vmem:[#allocation20 + $0x58] sm:$0xff]
    %v1880 = vld [vmem:[#allocation20 + $0x60] sm:$0xff]
    %v1881 = vld [vmem:[#allocation20 + $0x68] sm:$0xff]
    %v1882 = vld [vmem:[#allocation20 + $0x70] sm:$0xff]
    %v1883 = vld [vmem:[#allocation20 + $0x78] sm:$0xff]
    %v1884 = vld [vmem:[#allocation20 + $0x80] sm:$0xff]
    %v1885 = vld [vmem:[#allocation20 + $0x88] sm:$0xff]
    %v1886 = vld [vmem:[#allocation20 + $0x90] sm:$0xff]
    %v1887 = vld [vmem:[#allocation20 + $0x98] sm:$0xff]
    %v1888 = vld [vmem:[#allocation20 + $0xa0] sm:$0xff]
    %v1889 = vld [vmem:[#allocation20 + $0xa8] sm:$0xff]
    %v1890 = vld [vmem:[#allocation20 + $0xb0] sm:$0xff]
    %v1891 = vld [vmem:[#allocation20 + $0xb8] sm:$0xff]
    %v1892 = vld [vmem:[#allocation20 + $0xc0] sm:$0xff]
    %v1893 = vld [vmem:[#allocation20 + $0xc8] sm:$0xff]
    %v1894 = vld [vmem:[#allocation20 + $0xd0] sm:$0xff]
    %v1895 = vld [vmem:[#allocation20 + $0xd8] sm:$0xff]
    %v1896 = vld [vmem:[#allocation20 + $0xe0] sm:$0xff]
    %v1897 = vld [vmem:[#allocation20 + $0xe8] sm:$0xff]
    %v1898 = vld [vmem:[#allocation20 + $0xf0] sm:$0xff]
    %v1899 = vld [vmem:[#allocation20 + $0xf8] sm:$0xff]
    %v1900 = vld [vmem:[#allocation20 + $0x100] sm:$0xff]
    %v1901 = vld [vmem:[#allocation20 + $0x108] sm:$0xff]
    %v1902 = vld [vmem:[#allocation20 + $0x110] sm:$0xff]
    %v1903 = vld [vmem:[#allocation20 + $0x118] sm:$0xff]
    %v1904 = vld [vmem:[#allocation20 + $0x120] sm:$0xff]
    %v1905 = vld [vmem:[#allocation20 + $0x128] sm:$0xff]
    %v1906 = vld [vmem:[#allocation20 + $0x130] sm:$0xff]
    %v1907 = vld [vmem:[#allocation20 + $0x138] sm:$0xff]
    %v1908 = vld [vmem:[#allocation20 + $0x140] sm:$0xff]
    %v1909 = vld [vmem:[#allocation20 + $0x148] sm:$0xff]
    %v1910 = vld [vmem:[#allocation20 + $0x150] sm:$0xff]
    %v1911 = vld [vmem:[#allocation20 + $0x158] sm:$0xff]
    %v1912 = vld [vmem:[#allocation20 + $0x160] sm:$0xff]
    %v1913 = vld [vmem:[#allocation20 + $0x168] sm:$0xff]
    %v1914 = vld [vmem:[#allocation20 + $0x170] sm:$0xff]
    %v1915 = vld [vmem:[#allocation20 + $0x178] sm:$0xff]
    %1916 = vmatprep.subr.mxu0 0.0
    %1917 = vmatpush1.msra.mxu0 %v1868
    %1918 = vmatprep.subr.mxu0 0.0
    %1919 = vmatpush1.msra.mxu0 %v1869
    %1920 = vmatprep.subr.mxu0 0.0
    %1921 = vmatpush1.msra.mxu0 %v1870
    %1922 = vmatprep.subr.mxu0 0.0
    %1923 = vmatpush1.msra.mxu0 %v1871
    %1924 = vmatprep.subr.mxu0 0.0
    %1925 = vmatpush1.msra.mxu0 %v1872
    %1926 = vmatprep.subr.mxu0 0.0
    %1927 = vmatpush1.msra.mxu0 %v1873
    %1928 = vmatprep.subr.mxu0 0.0
    %1929 = vmatpush1.msra.mxu0 %v1874
    %1930 = vmatprep.subr.mxu0 0.0
    %1931 = vmatpush1.msra.mxu0 %v1875
    %1932 = vmatprep.subr.mxu0 0.0
    %1933 = vmatpush1.msra.mxu0 %v1876
    %1934 = vmatprep.subr.mxu0 0.0
    %1935 = vmatpush1.msra.mxu0 %v1877
    %1936 = vmatprep.subr.mxu0 0.0
    %1937 = vmatpush1.msra.mxu0 %v1878
    %1938 = vmatprep.subr.mxu0 0.0
    %1939 = vmatpush1.msra.mxu0 %v1879
    %1940 = vmatprep.subr.mxu0 0.0
    %1941 = vmatpush1.msra.mxu0 %v1880
    %1942 = vmatprep.subr.mxu0 0.0
    %1943 = vmatpush1.msra.mxu0 %v1881
    %1944 = vmatprep.subr.mxu0 0.0
    %1945 = vmatpush1.msra.mxu0 %v1882
    %1946 = vmatprep.subr.mxu0 0.0
    %1947 = vmatpush1.msra.mxu0 %v1883
    %1948 = vmatprep.subr.mxu0 0.0
    %1949 = vmatpush1.msra.mxu0 %v1884
    %1950 = vmatprep.subr.mxu0 0.0
    %1951 = vmatpush1.msra.mxu0 %v1885
    %1952 = vmatprep.subr.mxu0 0.0
    %1953 = vmatpush1.msra.mxu0 %v1886
    %1954 = vmatprep.subr.mxu0 0.0
    %1955 = vmatpush1.msra.mxu0 %v1887
    %1956 = vmatprep.subr.mxu0 0.0
    %1957 = vmatpush1.msra.mxu0 %v1888
    %1958 = vmatprep.subr.mxu0 0.0
    %1959 = vmatpush1.msra.mxu0 %v1889
    %1960 = vmatprep.subr.mxu0 0.0
    %1961 = vmatpush1.msra.mxu0 %v1890
    %1962 = vmatprep.subr.mxu0 0.0
    %1963 = vmatpush1.msra.mxu0 %v1891
    %1964 = vmatprep.subr.mxu0 0.0
    %1965 = vmatpush1.msra.mxu0 %v1892
    %1966 = vmatprep.subr.mxu0 0.0
    %1967 = vmatpush1.msra.mxu0 %v1893
    %1968 = vmatprep.subr.mxu0 0.0
    %1969 = vmatpush1.msra.mxu0 %v1894
    %1970 = vmatprep.subr.mxu0 0.0
    %1971 = vmatpush1.msra.mxu0 %v1895
    %1972 = vmatprep.subr.mxu0 0.0
    %1973 = vmatpush1.msra.mxu0 %v1896
    %1974 = vmatprep.subr.mxu0 0.0
    %1975 = vmatpush1.msra.mxu0 %v1897
    %1976 = vmatprep.subr.mxu0 0.0
    %1977 = vmatpush1.msra.mxu0 %v1898
    %1978 = vmatprep.subr.mxu0 0.0
    %1979 = vmatpush1.msra.mxu0 %v1899
    %1980 = vmatprep.mubr.f32.mxu0 %v1864
    %1981 = vmatmul.mubr.f32.gmra.mrb[0].mxu0 %v1862
    %v1982 = vpop.f32.mrb[0].mxu0
    %v1983 = vadd.f32 0.0, %v1982
    %v1984 = vpop.f32.mrb[0].mxu0
    %1985 = vmatprep.mubr.f32.mxu0 %v1865
    %1986 = vmatmul.mubr.f32.gmra.mrb[0].mxu0 %v1863
    %v1987 = vpop.f32.mrb[0].mxu0
    %v1988 = vadd.f32 0.0, %v1987
    %v1989 = vpop.f32.mrb[0].mxu0
    %1990 = vdwg.mxu0
    %1991 = vmatprep.subr.mxu0 0.0
    %1992 = vmatpush1.msra.mxu0 %v1900
    %1993 = vmatprep.subr.mxu0 0.0
    %1994 = vmatpush1.msra.mxu0 %v1901
    %1995 = vmatprep.subr.mxu0 0.0
    %1996 = vmatpush1.msra.mxu0 %v1902
    %1997 = vmatprep.subr.mxu0 0.0
    %1998 = vmatpush1.msra.mxu0 %v1903
    %1999 = vmatprep.subr.mxu0 0.0
    %2000 = vmatpush1.msra.mxu0 %v1904
    %2001 = vmatprep.subr.mxu0 0.0
    %2002 = vmatpush1.msra.mxu0 %v1905
    %2003 = vmatprep.subr.mxu0 0.0
    %2004 = vmatpush1.msra.mxu0 %v1906
    %2005 = vmatprep.subr.mxu0 0.0
    %2006 = vmatpush1.msra.mxu0 %v1907
    %2007 = vmatprep.subr.mxu0 0.0
    %2008 = vmatpush1.msra.mxu0 %v1908
    %2009 = vmatprep.subr.mxu0 0.0
    %2010 = vmatpush1.msra.mxu0 %v1909
    %2011 = vmatprep.subr.mxu0 0.0
    %2012 = vmatpush1.msra.mxu0 %v1910
    %2013 = vmatprep.subr.mxu0 0.0
    %2014 = vmatpush1.msra.mxu0 %v1911
    %2015 = vmatprep.subr.mxu0 0.0
    %2016 = vmatpush1.msra.mxu0 %v1912
    %2017 = vmatprep.subr.mxu0 0.0
    %2018 = vmatpush1.msra.mxu0 %v1913
    %2019 = vmatprep.subr.mxu0 0.0
    %2020 = vmatpush1.msra.mxu0 %v1914
    %2021 = vmatprep.subr.mxu0 0.0
    %2022 = vmatpush1.msra.mxu0 %v1915
    %2023 = vmatprep.subr.mxu0 0.0
    %2024 = vmatpush1.msra.mxu0 0.0
    %2025 = vmatprep.subr.mxu0 0.0
    %2026 = vmatpush1.msra.mxu0 0.0
    %2027 = vmatprep.subr.mxu0 0.0
    %2028 = vmatpush1.msra.mxu0 0.0
    %2029 = vmatprep.subr.mxu0 0.0
    %2030 = vmatpush1.msra.mxu0 0.0
    %2031 = vmatprep.subr.mxu0 0.0
    %2032 = vmatpush1.msra.mxu0 0.0
    %2033 = vmatprep.subr.mxu0 0.0
    %2034 = vmatpush1.msra.mxu0 0.0
    %2035 = vmatprep.subr.mxu0 0.0
    %2036 = vmatpush1.msra.mxu0 0.0
    %2037 = vmatprep.subr.mxu0 0.0
    %2038 = vmatpush1.msra.mxu0 0.0
    %2039 = vmatprep.subr.mxu0 0.0
    %2040 = vmatpush1.msra.mxu0 0.0
    %2041 = vmatprep.subr.mxu0 0.0
    %2042 = vmatpush1.msra.mxu0 0.0
    %2043 = vmatprep.subr.mxu0 0.0
    %2044 = vmatpush1.msra.mxu0 0.0
    %2045 = vmatprep.subr.mxu0 0.0
    %2046 = vmatpush1.msra.mxu0 0.0
    %2047 = vmatprep.subr.mxu0 0.0
    %2048 = vmatpush1.msra.mxu0 0.0
    %2049 = vmatprep.subr.mxu0 0.0
    %2050 = vmatpush1.msra.mxu0 0.0
    %2051 = vmatprep.subr.mxu0 0.0
    %2052 = vmatpush1.msra.mxu0 0.0
    %2053 = vmatprep.subr.mxu0 0.0
    %2054 = vmatpush1.msra.mxu0 0.0
    %2055 = vmatprep.mubr.f32.mxu0 0.0
    %2056 = vmatmul.mubr.f32.gmra.mrb[0].mxu0 %v1866
    %v2057 = vpop.f32.mrb[0].mxu0
    %v2058 = vadd.f32 %v1983, %v2057
    %v2059 = vpop.f32.mrb[0].mxu0
    %2060 = vmatprep.mubr.f32.mxu0 0.0
    %2061 = vmatmul.mubr.f32.gmra.mrb[0].mxu0 %v1867
    %v2062 = vpop.f32.mrb[0].mxu0
    %v2063 = vadd.f32 %v1988, %v2062
    %v2064 = vpop.f32.mrb[0].mxu0
    %2065 = vdwg.mxu0
    %v2066 = vld [vmem:[%s45] sm:$0x1]
    %v2068 = vlaneseq
    %v2069 = vshrl.u32 %v2068, 7
    %v2070 = vsub.s32 0, %v2069
    %v2071 = vrot.slane %v2066, %v2070
    %v2073 = vmul.f32 %v2058, %v2071
    %v2074 = vmul.f32 %v2063, %v2071
    %v2075 = vld [vmem:[%s47] sm:$0x1]
    %v2077 = vlaneseq
    %v2078 = vshrl.u32 %v2077, 7
    %v2079 = vsub.s32 0, %v2078
    %v2080 = vrot.slane %v2075, %v2079
    %v2082 = vadd.f32 %v2073, %v2080
    %v2083 = vadd.f32 %v2074, %v2080
    %v2084 = vmax.f32 %v2082, 0.0
    %v2085 = vmax.f32 %v2083, 0.0
    %2086 = vst [vmem:[#allocation8 + $0x1] sm:$0xf] %v2084
    %2087 = vst [vmem:[#allocation8 + $0x1] sm:$0xc0] %v2084
    %2088 = vst [vmem:[#allocation8 + $0x9] sm:$0x3] %v2085
    %v2089 = vld [vmem:[#allocation8] sm:$0xff]
    %v2090 = vld [vmem:[#allocation8 + $0x8] sm:$0x3]
    %v2091 = vld [vmem:[#allocation8 + $0x1] sm:$0xff]
    %v2092 = vld [vmem:[#allocation8 + $0x9] sm:$0x3]
    %v2093 = vld [vmem:[#allocation8 + $0x2] sm:$0xff]
    %v2094 = vld [vmem:[#allocation8 + $0xa] sm:$0x3]
    %v2095 = vld [vmem:[%s55] sm:$0xf]
    %vm2096 = vcmask 80896
    %v2098 = vsel %vm2096, %v2095, 0
    %v2101 = vsel %vm346, %v2090, 0
    %v2104 = vsel %vm346, %v2092, 0
    %v2107 = vsel %vm346, %v2094, 0
    %2109 = vmatprep.subr.mxu0 %v2091
    %2110 = vmatpush1.msra.mxu0 %v2089
    %2111 = vmatprep.subr.mxu0 %v2104
    %2112 = vmatpush1.msra.mxu0 %v2101
    %2113 = vmatprep.subr.mxu0 0.0
    %2114 = vmatpush1.msra.mxu0 0.0
    %2115 = vmatprep.subr.mxu0 0.0
    %2116 = vmatpush1.msra.mxu0 0.0
    %2117 = vmatprep.subr.mxu0 0.0
    %2118 = vmatpush1.msra.mxu0 0.0
    %2119 = vmatprep.subr.mxu0 0.0
    %2120 = vmatpush1.msra.mxu0 0.0
    %2121 = vmatprep.subr.mxu0 0.0
    %2122 = vmatpush1.msra.mxu0 0.0
    %2123 = vmatprep.subr.mxu0 0.0
    %2124 = vmatpush1.msra.mxu0 0.0
    %2125 = vmatprep.subr.mxu0 0.0
    %2126 = vmatpush1.msra.mxu0 0.0
    %2127 = vmatprep.subr.mxu0 0.0
    %2128 = vmatpush1.msra.mxu0 0.0
    %2129 = vmatprep.subr.mxu0 0.0
    %2130 = vmatpush1.msra.mxu0 0.0
    %2131 = vmatprep.subr.mxu0 0.0
    %2132 = vmatpush1.msra.mxu0 0.0
    %2133 = vmatprep.subr.mxu0 0.0
    %2134 = vmatpush1.msra.mxu0 0.0
    %2135 = vmatprep.subr.mxu0 0.0
    %2136 = vmatpush1.msra.mxu0 0.0
    %2137 = vmatprep.subr.mxu0 0.0
    %2138 = vmatpush1.msra.mxu0 0.0
    %2139 = vmatprep.subr.mxu0 0.0
    %2140 = vmatpush1.msra.mxu0 0.0
    %2141 = vmatprep.subr.mxu0 0.0
    %2142 = vmatpush1.msra.mxu0 0.0
    %2143 = vmatprep.subr.mxu0 0.0
    %2144 = vmatpush1.msra.mxu0 0.0
    %2145 = vmatprep.subr.mxu0 0.0
    %2146 = vmatpush1.msra.mxu0 0.0
    %2147 = vmatprep.subr.mxu0 0.0
    %2148 = vmatpush1.msra.mxu0 0.0
    %2149 = vmatprep.subr.mxu0 0.0
    %2150 = vmatpush1.msra.mxu0 0.0
    %2151 = vmatprep.subr.mxu0 0.0
    %2152 = vmatpush1.msra.mxu0 0.0
    %2153 = vmatprep.subr.mxu0 0.0
    %2154 = vmatpush1.msra.mxu0 0.0
    %2155 = vmatprep.subr.mxu0 0.0
    %2156 = vmatpush1.msra.mxu0 0.0
    %2157 = vmatprep.subr.mxu0 0.0
    %2158 = vmatpush1.msra.mxu0 0.0
    %2159 = vmatprep.subr.mxu0 0.0
    %2160 = vmatpush1.msra.mxu0 0.0
    %2161 = vmatprep.subr.mxu0 0.0
    %2162 = vmatpush1.msra.mxu0 0.0
    %2163 = vmatprep.subr.mxu0 0.0
    %2164 = vmatpush1.msra.mxu0 0.0
    %2165 = vmatprep.subr.mxu0 0.0
    %2166 = vmatpush1.msra.mxu0 0.0
    %2167 = vmatprep.subr.mxu0 0.0
    %2168 = vmatpush1.msra.mxu0 0.0
    %2169 = vmatprep.subr.mxu0 0.0
    %2170 = vmatpush1.msra.mxu0 0.0
    %2171 = vmatprep.subr.mxu0 0.0
    %2172 = vmatpush1.msra.mxu0 0.0
    %2173 = vmatprep.mubr.f32.mxu0 0.0
    %2174 = vmatmul.mubr.f32.gmra.mrb[0].mxu0 %v2098
    %v2175 = vpop.f32.mrb[0].mxu0
    %v2176 = vadd.f32 0.0, %v2175
    %v2177 = vpop.f32.mrb[0].mxu0
    %v2178 = vadd.f32 0.0, %v2177
    %2179 = vdwg.mxu0
    %2180 = vmatprep.subr.mxu0 0.0
    %2181 = vmatpush1.msra.mxu0 %v2093
    %2182 = vmatprep.subr.mxu0 0.0
    %2183 = vmatpush1.msra.mxu0 %v2107
    %2184 = vmatprep.subr.mxu0 0.0
    %2185 = vmatpush1.msra.mxu0 0.0
    %2186 = vmatprep.subr.mxu0 0.0
    %2187 = vmatpush1.msra.mxu0 0.0
    %2188 = vmatprep.subr.mxu0 0.0
    %2189 = vmatpush1.msra.mxu0 0.0
    %2190 = vmatprep.subr.mxu0 0.0
    %2191 = vmatpush1.msra.mxu0 0.0
    %2192 = vmatprep.subr.mxu0 0.0
    %2193 = vmatpush1.msra.mxu0 0.0
    %2194 = vmatprep.subr.mxu0 0.0
    %2195 = vmatpush1.msra.mxu0 0.0
    %2196 = vmatprep.subr.mxu0 0.0
    %2197 = vmatpush1.msra.mxu0 0.0
    %2198 = vmatprep.subr.mxu0 0.0
    %2199 = vmatpush1.msra.mxu0 0.0
    %2200 = vmatprep.subr.mxu0 0.0
    %2201 = vmatpush1.msra.mxu0 0.0
    %2202 = vmatprep.subr.mxu0 0.0
    %2203 = vmatpush1.msra.mxu0 0.0
    %2204 = vmatprep.subr.mxu0 0.0
    %2205 = vmatpush1.msra.mxu0 0.0
    %2206 = vmatprep.subr.mxu0 0.0
    %2207 = vmatpush1.msra.mxu0 0.0
    %2208 = vmatprep.subr.mxu0 0.0
    %2209 = vmatpush1.msra.mxu0 0.0
    %2210 = vmatprep.subr.mxu0 0.0
    %2211 = vmatpush1.msra.mxu0 0.0
    %2212 = vmatprep.subr.mxu0 0.0
    %2213 = vmatpush1.msra.mxu0 0.0
    %2214 = vmatprep.subr.mxu0 0.0
    %2215 = vmatpush1.msra.mxu0 0.0
    %2216 = vmatprep.subr.mxu0 0.0
    %2217 = vmatpush1.msra.mxu0 0.0
    %2218 = vmatprep.subr.mxu0 0.0
    %2219 = vmatpush1.msra.mxu0 0.0
    %2220 = vmatprep.subr.mxu0 0.0
    %2221 = vmatpush1.msra.mxu0 0.0
    %2222 = vmatprep.subr.mxu0 0.0
    %2223 = vmatpush1.msra.mxu0 0.0
    %2224 = vmatprep.subr.mxu0 0.0
    %2225 = vmatpush1.msra.mxu0 0.0
    %2226 = vmatprep.subr.mxu0 0.0
    %2227 = vmatpush1.msra.mxu0 0.0
    %2228 = vmatprep.subr.mxu0 0.0
    %2229 = vmatpush1.msra.mxu0 0.0
    %2230 = vmatprep.subr.mxu0 0.0
    %2231 = vmatpush1.msra.mxu0 0.0
    %2232 = vmatprep.subr.mxu0 0.0
    %2233 = vmatpush1.msra.mxu0 0.0
    %2234 = vmatprep.subr.mxu0 0.0
    %2235 = vmatpush1.msra.mxu0 0.0
    %2236 = vmatprep.subr.mxu0 0.0
    %2237 = vmatpush1.msra.mxu0 0.0
    %2238 = vmatprep.subr.mxu0 0.0
    %2239 = vmatpush1.msra.mxu0 0.0
    %2240 = vmatprep.subr.mxu0 0.0
    %2241 = vmatpush1.msra.mxu0 0.0
    %2242 = vmatprep.subr.mxu0 0.0
    %2243 = vmatpush1.msra.mxu0 0.0
    %2244 = vmatprep.mubr.f32.mxu0 0.0
    %2245 = vmatmul.mubr.f32.gmra.mrb[0].mxu0 %v2098
    %v2246 = vpop.f32.mrb[0].mxu0
    %v2247 = vadd.f32 0.0, %v2246
    %v2248 = vpop.f32.mrb[0].mxu0
    %2249 = vdwg.mxu0
    %v2250 = vld [vmem:[#allocation22] sm:$0xff]
    %v2251 = vld [vmem:[#allocation22 + $0x8] sm:$0xff]
    %v2252 = vld [vmem:[#allocation22 + $0x10] sm:$0xff]
    %v2253 = vld [vmem:[#allocation22 + $0x18] sm:$0xff]
    %v2254 = vld [vmem:[#allocation22 + $0x20] sm:$0xff]
    %v2255 = vld [vmem:[#allocation22 + $0x28] sm:$0xff]
    %v2256 = vld [vmem:[#allocation22 + $0x30] sm:$0xff]
    %v2257 = vld [vmem:[#allocation22 + $0x38] sm:$0xff]
    %v2258 = vld [vmem:[#allocation22 + $0x40] sm:$0xff]
    %v2259 = vld [vmem:[#allocation22 + $0x48] sm:$0xff]
    %v2260 = vld [vmem:[#allocation22 + $0x50] sm:$0xff]
    %v2261 = vld [vmem:[#allocation22 + $0x58] sm:$0xff]
    %v2262 = vld [vmem:[#allocation22 + $0x60] sm:$0xff]
    %v2263 = vld [vmem:[#allocation22 + $0x68] sm:$0xff]
    %v2264 = vld [vmem:[#allocation22 + $0x70] sm:$0xff]
    %v2265 = vld [vmem:[#allocation22 + $0x78] sm:$0xff]
    %v2266 = vld [vmem:[#allocation22 + $0x80] sm:$0xff]
    %v2267 = vld [vmem:[#allocation22 + $0x88] sm:$0xff]
    %v2268 = vld [vmem:[#allocation22 + $0x90] sm:$0xff]
    %v2269 = vld [vmem:[#allocation22 + $0x98] sm:$0xff]
    %v2270 = vld [vmem:[#allocation22 + $0xa0] sm:$0xff]
    %v2271 = vld [vmem:[#allocation22 + $0xa8] sm:$0xff]
    %v2272 = vld [vmem:[#allocation22 + $0xb0] sm:$0xff]
    %v2273 = vld [vmem:[#allocation22 + $0xb8] sm:$0xff]
    %v2274 = vld [vmem:[#allocation22 + $0xc0] sm:$0xff]
    %v2275 = vld [vmem:[#allocation22 + $0xc8] sm:$0xff]
    %v2276 = vld [vmem:[#allocation22 + $0xd0] sm:$0xff]
    %v2277 = vld [vmem:[#allocation22 + $0xd8] sm:$0xff]
    %v2278 = vld [vmem:[#allocation22 + $0xe0] sm:$0xff]
    %v2279 = vld [vmem:[#allocation22 + $0xe8] sm:$0xff]
    %v2280 = vld [vmem:[#allocation22 + $0xf0] sm:$0xff]
    %v2281 = vld [vmem:[#allocation22 + $0xf8] sm:$0xff]
    %v2282 = vld [vmem:[#allocation22 + $0x100] sm:$0xff]
    %v2283 = vld [vmem:[#allocation22 + $0x108] sm:$0xff]
    %v2284 = vld [vmem:[#allocation22 + $0x110] sm:$0xff]
    %v2285 = vld [vmem:[#allocation22 + $0x118] sm:$0xff]
    %v2286 = vld [vmem:[#allocation22 + $0x120] sm:$0xff]
    %v2287 = vld [vmem:[#allocation22 + $0x128] sm:$0xff]
    %v2288 = vld [vmem:[#allocation22 + $0x130] sm:$0xff]
    %v2289 = vld [vmem:[#allocation22 + $0x138] sm:$0xff]
    %v2290 = vld [vmem:[#allocation22 + $0x140] sm:$0xff]
    %v2291 = vld [vmem:[#allocation22 + $0x148] sm:$0xff]
    %v2292 = vld [vmem:[#allocation22 + $0x150] sm:$0xff]
    %v2293 = vld [vmem:[#allocation22 + $0x158] sm:$0xff]
    %v2294 = vld [vmem:[#allocation22 + $0x160] sm:$0xff]
    %v2295 = vld [vmem:[#allocation22 + $0x168] sm:$0xff]
    %v2296 = vld [vmem:[#allocation22 + $0x170] sm:$0xff]
    %v2297 = vld [vmem:[#allocation22 + $0x178] sm:$0xff]
    %2298 = vmatprep.subr.mxu0 0.0
    %2299 = vmatpush1.msra.mxu0 %v2250
    %2300 = vmatprep.subr.mxu0 0.0
    %2301 = vmatpush1.msra.mxu0 %v2251
    %2302 = vmatprep.subr.mxu0 0.0
    %2303 = vmatpush1.msra.mxu0 %v2252
    %2304 = vmatprep.subr.mxu0 0.0
    %2305 = vmatpush1.msra.mxu0 %v2253
    %2306 = vmatprep.subr.mxu0 0.0
    %2307 = vmatpush1.msra.mxu0 %v2254
    %2308 = vmatprep.subr.mxu0 0.0
    %2309 = vmatpush1.msra.mxu0 %v2255
    %2310 = vmatprep.subr.mxu0 0.0
    %2311 = vmatpush1.msra.mxu0 %v2256
    %2312 = vmatprep.subr.mxu0 0.0
    %2313 = vmatpush1.msra.mxu0 %v2257
    %2314 = vmatprep.subr.mxu0 0.0
    %2315 = vmatpush1.msra.mxu0 %v2258
    %2316 = vmatprep.subr.mxu0 0.0
    %2317 = vmatpush1.msra.mxu0 %v2259
    %2318 = vmatprep.subr.mxu0 0.0
    %2319 = vmatpush1.msra.mxu0 %v2260
    %2320 = vmatprep.subr.mxu0 0.0
    %2321 = vmatpush1.msra.mxu0 %v2261
    %2322 = vmatprep.subr.mxu0 0.0
    %2323 = vmatpush1.msra.mxu0 %v2262
    %2324 = vmatprep.subr.mxu0 0.0
    %2325 = vmatpush1.msra.mxu0 %v2263
    %2326 = vmatprep.subr.mxu0 0.0
    %2327 = vmatpush1.msra.mxu0 %v2264
    %2328 = vmatprep.subr.mxu0 0.0
    %2329 = vmatpush1.msra.mxu0 %v2265
    %2330 = vmatprep.subr.mxu0 0.0
    %2331 = vmatpush1.msra.mxu0 %v2266
    %2332 = vmatprep.subr.mxu0 0.0
    %2333 = vmatpush1.msra.mxu0 %v2267
    %2334 = vmatprep.subr.mxu0 0.0
    %2335 = vmatpush1.msra.mxu0 %v2268
    %2336 = vmatprep.subr.mxu0 0.0
    %2337 = vmatpush1.msra.mxu0 %v2269
    %2338 = vmatprep.subr.mxu0 0.0
    %2339 = vmatpush1.msra.mxu0 %v2270
    %2340 = vmatprep.subr.mxu0 0.0
    %2341 = vmatpush1.msra.mxu0 %v2271
    %2342 = vmatprep.subr.mxu0 0.0
    %2343 = vmatpush1.msra.mxu0 %v2272
    %2344 = vmatprep.subr.mxu0 0.0
    %2345 = vmatpush1.msra.mxu0 %v2273
    %2346 = vmatprep.subr.mxu0 0.0
    %2347 = vmatpush1.msra.mxu0 %v2274
    %2348 = vmatprep.subr.mxu0 0.0
    %2349 = vmatpush1.msra.mxu0 %v2275
    %2350 = vmatprep.subr.mxu0 0.0
    %2351 = vmatpush1.msra.mxu0 %v2276
    %2352 = vmatprep.subr.mxu0 0.0
    %2353 = vmatpush1.msra.mxu0 %v2277
    %2354 = vmatprep.subr.mxu0 0.0
    %2355 = vmatpush1.msra.mxu0 %v2278
    %2356 = vmatprep.subr.mxu0 0.0
    %2357 = vmatpush1.msra.mxu0 %v2279
    %2358 = vmatprep.subr.mxu0 0.0
    %2359 = vmatpush1.msra.mxu0 %v2280
    %2360 = vmatprep.subr.mxu0 0.0
    %2361 = vmatpush1.msra.mxu0 %v2281
    %2362 = vmatprep.mubr.f32.mxu0 %v2178
    %2363 = vmatmul.mubr.f32.gmra.mrb[0].mxu0 %v2176
    %v2364 = vpop.f32.mrb[0].mxu0
    %v2365 = vadd.f32 0.0, %v2364
    %v2366 = vpop.f32.mrb[0].mxu0
    %2367 = vdwg.mxu0
    %2368 = vmatprep.subr.mxu0 0.0
    %2369 = vmatpush1.msra.mxu0 %v2282
    %2370 = vmatprep.subr.mxu0 0.0
    %2371 = vmatpush1.msra.mxu0 %v2283
    %2372 = vmatprep.subr.mxu0 0.0
    %2373 = vmatpush1.msra.mxu0 %v2284
    %2374 = vmatprep.subr.mxu0 0.0
    %2375 = vmatpush1.msra.mxu0 %v2285
    %2376 = vmatprep.subr.mxu0 0.0
    %2377 = vmatpush1.msra.mxu0 %v2286
    %2378 = vmatprep.subr.mxu0 0.0
    %2379 = vmatpush1.msra.mxu0 %v2287
    %2380 = vmatprep.subr.mxu0 0.0
    %2381 = vmatpush1.msra.mxu0 %v2288
    %2382 = vmatprep.subr.mxu0 0.0
    %2383 = vmatpush1.msra.mxu0 %v2289
    %2384 = vmatprep.subr.mxu0 0.0
    %2385 = vmatpush1.msra.mxu0 %v2290
    %2386 = vmatprep.subr.mxu0 0.0
    %2387 = vmatpush1.msra.mxu0 %v2291
    %2388 = vmatprep.subr.mxu0 0.0
    %2389 = vmatpush1.msra.mxu0 %v2292
    %2390 = vmatprep.subr.mxu0 0.0
    %2391 = vmatpush1.msra.mxu0 %v2293
    %2392 = vmatprep.subr.mxu0 0.0
    %2393 = vmatpush1.msra.mxu0 %v2294
    %2394 = vmatprep.subr.mxu0 0.0
    %2395 = vmatpush1.msra.mxu0 %v2295
    %2396 = vmatprep.subr.mxu0 0.0
    %2397 = vmatpush1.msra.mxu0 %v2296
    %2398 = vmatprep.subr.mxu0 0.0
    %2399 = vmatpush1.msra.mxu0 %v2297
    %2400 = vmatprep.subr.mxu0 0.0
    %2401 = vmatpush1.msra.mxu0 0.0
    %2402 = vmatprep.subr.mxu0 0.0
    %2403 = vmatpush1.msra.mxu0 0.0
    %2404 = vmatprep.subr.mxu0 0.0
    %2405 = vmatpush1.msra.mxu0 0.0
    %2406 = vmatprep.subr.mxu0 0.0
    %2407 = vmatpush1.msra.mxu0 0.0
    %2408 = vmatprep.subr.mxu0 0.0
    %2409 = vmatpush1.msra.mxu0 0.0
    %2410 = vmatprep.subr.mxu0 0.0
    %2411 = vmatpush1.msra.mxu0 0.0
    %2412 = vmatprep.subr.mxu0 0.0
    %2413 = vmatpush1.msra.mxu0 0.0
    %2414 = vmatprep.subr.mxu0 0.0
    %2415 = vmatpush1.msra.mxu0 0.0
    %2416 = vmatprep.subr.mxu0 0.0
    %2417 = vmatpush1.msra.mxu0 0.0
    %2418 = vmatprep.subr.mxu0 0.0
    %2419 = vmatpush1.msra.mxu0 0.0
    %2420 = vmatprep.subr.mxu0 0.0
    %2421 = vmatpush1.msra.mxu0 0.0
    %2422 = vmatprep.subr.mxu0 0.0
    %2423 = vmatpush1.msra.mxu0 0.0
    %2424 = vmatprep.subr.mxu0 0.0
    %2425 = vmatpush1.msra.mxu0 0.0
    %2426 = vmatprep.subr.mxu0 0.0
    %2427 = vmatpush1.msra.mxu0 0.0
    %2428 = vmatprep.subr.mxu0 0.0
    %2429 = vmatpush1.msra.mxu0 0.0
    %2430 = vmatprep.subr.mxu0 0.0
    %2431 = vmatpush1.msra.mxu0 0.0
    %2432 = vmatprep.mubr.f32.mxu0 0.0
    %2433 = vmatmul.mubr.f32.gmra.mrb[0].mxu0 %v2247
    %v2434 = vpop.f32.mrb[0].mxu0
    %v2435 = vadd.f32 %v2365, %v2434
    %v2436 = vpop.f32.mrb[0].mxu0
    %2437 = vdwg.mxu0
    %v2438 = vld [vmem:[%s51] sm:$0x1]
    %v2440 = vlaneseq
    %v2441 = vshrl.u32 %v2440, 7
    %v2442 = vsub.s32 0, %v2441
    %v2443 = vrot.slane %v2438, %v2442
    %v2445 = vmul.f32 %v2435, %v2443
    %v2446 = vld [vmem:[%s53] sm:$0x1]
    %v2448 = vlaneseq
    %v2449 = vshrl.u32 %v2448, 7
    %v2450 = vsub.s32 0, %v2449
    %v2451 = vrot.slane %v2446, %v2450
    %v2453 = vadd.f32 %v2445, %v2451
    %v2454 = vmax.f32 %v2453, 0.0
    %2455 = vst [vmem:[#allocation9 + $0x1] sm:$0x3] %v2454
    %2456 = vst [vmem:[#allocation9 + $0x3] sm:$0xc] %v2454
    %v2457 = vld [vmem:[#allocation9] sm:$0x3f]
    %v2458 = vld [vmem:[#allocation9 + $0x1] sm:$0x3f]
    %v2459 = vld [vmem:[#allocation9 + $0x2] sm:$0x3f]
    %v2460 = vld [vmem:[%s57] sm:$0xff]
    %v2461 = vld [vmem:[%s57 + $0x8] sm:$0xff]
    %v2462 = vld [vmem:[%s57 + $0x10] sm:$0xff]
    %v2463 = vld [vmem:[%s57 + $0x18] sm:$0xff]
    %v2464 = vld [vmem:[%s57 + $0x20] sm:$0xff]
    %v2465 = vld [vmem:[%s57 + $0x28] sm:$0xff]
    %v2466 = vld [vmem:[%s57 + $0x30] sm:$0xff]
    %v2467 = vld [vmem:[%s57 + $0x38] sm:$0xff]
    %v2468 = vld [vmem:[%s57 + $0x40] sm:$0xff]
    %v2469 = vld [vmem:[%s57 + $0x48] sm:$0xff]
    %v2470 = vld [vmem:[%s57 + $0x50] sm:$0xff]
    %v2471 = vld [vmem:[%s57 + $0x58] sm:$0xff]
    %v2472 = vld [vmem:[%s57 + $0x60] sm:$0xff]
    %v2473 = vld [vmem:[%s57 + $0x68] sm:$0xff]
    %v2474 = vld [vmem:[%s57 + $0x70] sm:$0xff]
    %v2475 = vld [vmem:[%s57 + $0x78] sm:$0xff]
    %v2476 = vld [vmem:[%s57 + $0x80] sm:$0xff]
    %v2477 = vld [vmem:[%s57 + $0x88] sm:$0xff]
    %v2478 = vld [vmem:[%s57 + $0x90] sm:$0xff]
    %v2479 = vld [vmem:[%s57 + $0x98] sm:$0xff]
    %v2480 = vld [vmem:[%s57 + $0xa0] sm:$0xff]
    %v2481 = vld [vmem:[%s57 + $0xa8] sm:$0xff]
    %v2482 = vld [vmem:[%s57 + $0xb0] sm:$0xff]
    %v2483 = vld [vmem:[%s57 + $0xb8] sm:$0xff]
    %v2484 = vld [vmem:[%s57 + $0xc0] sm:$0xff]
    %v2485 = vld [vmem:[%s57 + $0xc8] sm:$0xff]
    %v2486 = vld [vmem:[%s57 + $0xd0] sm:$0xff]
    %v2487 = vld [vmem:[%s57 + $0xd8] sm:$0xff]
    %v2488 = vld [vmem:[%s57 + $0xe0] sm:$0xff]
    %v2489 = vld [vmem:[%s57 + $0xe8] sm:$0xff]
    %v2490 = vld [vmem:[%s57 + $0xf0] sm:$0xff]
    %v2491 = vld [vmem:[%s57 + $0xf8] sm:$0xff]
    %v2492 = vld [vmem:[%s57 + $0x100] sm:$0xff]
    %v2493 = vld [vmem:[%s57 + $0x108] sm:$0xff]
    %v2494 = vld [vmem:[%s57 + $0x110] sm:$0xff]
    %v2495 = vld [vmem:[%s57 + $0x118] sm:$0xff]
    %v2496 = vld [vmem:[%s57 + $0x120] sm:$0xff]
    %v2497 = vld [vmem:[%s57 + $0x128] sm:$0xff]
    %v2498 = vld [vmem:[%s57 + $0x130] sm:$0xff]
    %v2499 = vld [vmem:[%s57 + $0x138] sm:$0xff]
    %v2500 = vld [vmem:[%s57 + $0x140] sm:$0xff]
    %v2501 = vld [vmem:[%s57 + $0x148] sm:$0xff]
    %v2502 = vld [vmem:[%s57 + $0x150] sm:$0xff]
    %v2503 = vld [vmem:[%s57 + $0x158] sm:$0xff]
    %v2504 = vld [vmem:[%s57 + $0x160] sm:$0xff]
    %v2505 = vld [vmem:[%s57 + $0x168] sm:$0xff]
    %v2506 = vld [vmem:[%s57 + $0x170] sm:$0xff]
    %v2507 = vld [vmem:[%s57 + $0x178] sm:$0xff]
    %2508 = vmatprep.subr.mxu0 0.0
    %2509 = vmatpush1.msra.mxu0 %v2460
    %2510 = vmatprep.subr.mxu0 0.0
    %2511 = vmatpush1.msra.mxu0 %v2461
    %2512 = vmatprep.subr.mxu0 0.0
    %2513 = vmatpush1.msra.mxu0 %v2462
    %2514 = vmatprep.subr.mxu0 0.0
    %2515 = vmatpush1.msra.mxu0 %v2463
    %2516 = vmatprep.subr.mxu0 0.0
    %2517 = vmatpush1.msra.mxu0 %v2464
    %2518 = vmatprep.subr.mxu0 0.0
    %2519 = vmatpush1.msra.mxu0 %v2465
    %2520 = vmatprep.subr.mxu0 0.0
    %2521 = vmatpush1.msra.mxu0 %v2466
    %2522 = vmatprep.subr.mxu0 0.0
    %2523 = vmatpush1.msra.mxu0 %v2467
    %2524 = vmatprep.subr.mxu0 0.0
    %2525 = vmatpush1.msra.mxu0 %v2468
    %2526 = vmatprep.subr.mxu0 0.0
    %2527 = vmatpush1.msra.mxu0 %v2469
    %2528 = vmatprep.subr.mxu0 0.0
    %2529 = vmatpush1.msra.mxu0 %v2470
    %2530 = vmatprep.subr.mxu0 0.0
    %2531 = vmatpush1.msra.mxu0 %v2471
    %2532 = vmatprep.subr.mxu0 0.0
    %2533 = vmatpush1.msra.mxu0 %v2472
    %2534 = vmatprep.subr.mxu0 0.0
    %2535 = vmatpush1.msra.mxu0 %v2473
    %2536 = vmatprep.subr.mxu0 0.0
    %2537 = vmatpush1.msra.mxu0 %v2474
    %2538 = vmatprep.subr.mxu0 0.0
    %2539 = vmatpush1.msra.mxu0 %v2475
    %2540 = vmatprep.subr.mxu0 0.0
    %2541 = vmatpush1.msra.mxu0 %v2476
    %2542 = vmatprep.subr.mxu0 0.0
    %2543 = vmatpush1.msra.mxu0 %v2477
    %2544 = vmatprep.subr.mxu0 0.0
    %2545 = vmatpush1.msra.mxu0 %v2478
    %2546 = vmatprep.subr.mxu0 0.0
    %2547 = vmatpush1.msra.mxu0 %v2479
    %2548 = vmatprep.subr.mxu0 0.0
    %2549 = vmatpush1.msra.mxu0 %v2480
    %2550 = vmatprep.subr.mxu0 0.0
    %2551 = vmatpush1.msra.mxu0 %v2481
    %2552 = vmatprep.subr.mxu0 0.0
    %2553 = vmatpush1.msra.mxu0 %v2482
    %2554 = vmatprep.subr.mxu0 0.0
    %2555 = vmatpush1.msra.mxu0 %v2483
    %2556 = vmatprep.subr.mxu0 0.0
    %2557 = vmatpush1.msra.mxu0 %v2484
    %2558 = vmatprep.subr.mxu0 0.0
    %2559 = vmatpush1.msra.mxu0 %v2485
    %2560 = vmatprep.subr.mxu0 0.0
    %2561 = vmatpush1.msra.mxu0 %v2486
    %2562 = vmatprep.subr.mxu0 0.0
    %2563 = vmatpush1.msra.mxu0 %v2487
    %2564 = vmatprep.subr.mxu0 0.0
    %2565 = vmatpush1.msra.mxu0 %v2488
    %2566 = vmatprep.subr.mxu0 0.0
    %2567 = vmatpush1.msra.mxu0 %v2489
    %2568 = vmatprep.subr.mxu0 0.0
    %2569 = vmatpush1.msra.mxu0 %v2490
    %2570 = vmatprep.subr.mxu0 0.0
    %2571 = vmatpush1.msra.mxu0 %v2491
    %2572 = vmatprep.mubr.f32.mxu0 %v2458
    %2573 = vmatmul.mubr.f32.gmra.mrb[0].mxu0 %v2457
    %v2574 = vpop.f32.mrb[0].mxu0
    %v2575 = vadd.f32 0.0, %v2574
    %v2576 = vpop.f32.mrb[0].mxu0
    %2577 = vdwg.mxu0
    %2578 = vmatprep.subr.mxu0 0.0
    %2579 = vmatpush1.msra.mxu0 %v2492
    %2580 = vmatprep.subr.mxu0 0.0
    %2581 = vmatpush1.msra.mxu0 %v2493
    %2582 = vmatprep.subr.mxu0 0.0
    %2583 = vmatpush1.msra.mxu0 %v2494
    %2584 = vmatprep.subr.mxu0 0.0
    %2585 = vmatpush1.msra.mxu0 %v2495
    %2586 = vmatprep.subr.mxu0 0.0
    %2587 = vmatpush1.msra.mxu0 %v2496
    %2588 = vmatprep.subr.mxu0 0.0
    %2589 = vmatpush1.msra.mxu0 %v2497
    %2590 = vmatprep.subr.mxu0 0.0
    %2591 = vmatpush1.msra.mxu0 %v2498
    %2592 = vmatprep.subr.mxu0 0.0
    %2593 = vmatpush1.msra.mxu0 %v2499
    %2594 = vmatprep.subr.mxu0 0.0
    %2595 = vmatpush1.msra.mxu0 %v2500
    %2596 = vmatprep.subr.mxu0 0.0
    %2597 = vmatpush1.msra.mxu0 %v2501
    %2598 = vmatprep.subr.mxu0 0.0
    %2599 = vmatpush1.msra.mxu0 %v2502
    %2600 = vmatprep.subr.mxu0 0.0
    %2601 = vmatpush1.msra.mxu0 %v2503
    %2602 = vmatprep.subr.mxu0 0.0
    %2603 = vmatpush1.msra.mxu0 %v2504
    %2604 = vmatprep.subr.mxu0 0.0
    %2605 = vmatpush1.msra.mxu0 %v2505
    %2606 = vmatprep.subr.mxu0 0.0
    %2607 = vmatpush1.msra.mxu0 %v2506
    %2608 = vmatprep.subr.mxu0 0.0
    %2609 = vmatpush1.msra.mxu0 %v2507
    %2610 = vmatprep.subr.mxu0 0.0
    %2611 = vmatpush1.msra.mxu0 0.0
    %2612 = vmatprep.subr.mxu0 0.0
    %2613 = vmatpush1.msra.mxu0 0.0
    %2614 = vmatprep.subr.mxu0 0.0
    %2615 = vmatpush1.msra.mxu0 0.0
    %2616 = vmatprep.subr.mxu0 0.0
    %2617 = vmatpush1.msra.mxu0 0.0
    %2618 = vmatprep.subr.mxu0 0.0
    %2619 = vmatpush1.msra.mxu0 0.0
    %2620 = vmatprep.subr.mxu0 0.0
    %2621 = vmatpush1.msra.mxu0 0.0
    %2622 = vmatprep.subr.mxu0 0.0
    %2623 = vmatpush1.msra.mxu0 0.0
    %2624 = vmatprep.subr.mxu0 0.0
    %2625 = vmatpush1.msra.mxu0 0.0
    %2626 = vmatprep.subr.mxu0 0.0
    %2627 = vmatpush1.msra.mxu0 0.0
    %2628 = vmatprep.subr.mxu0 0.0
    %2629 = vmatpush1.msra.mxu0 0.0
    %2630 = vmatprep.subr.mxu0 0.0
    %2631 = vmatpush1.msra.mxu0 0.0
    %2632 = vmatprep.subr.mxu0 0.0
    %2633 = vmatpush1.msra.mxu0 0.0
    %2634 = vmatprep.subr.mxu0 0.0
    %2635 = vmatpush1.msra.mxu0 0.0
    %2636 = vmatprep.subr.mxu0 0.0
    %2637 = vmatpush1.msra.mxu0 0.0
    %2638 = vmatprep.subr.mxu0 0.0
    %2639 = vmatpush1.msra.mxu0 0.0
    %2640 = vmatprep.subr.mxu0 0.0
    %2641 = vmatpush1.msra.mxu0 0.0
    %2642 = vmatprep.mubr.f32.mxu0 0.0
    %2643 = vmatmul.mubr.f32.gmra.mrb[0].mxu0 %v2459
    %v2644 = vpop.f32.mrb[0].mxu0
    %v2645 = vadd.f32 %v2575, %v2644
    %v2646 = vpop.f32.mrb[0].mxu0
    %2647 = vdwg.mxu0
    %v2648 = vld [vmem:[%s59] sm:$0x1]
    %v2650 = vlaneseq
    %v2651 = vshrl.u32 %v2650, 7
    %v2652 = vsub.s32 0, %v2651
    %v2653 = vrot.slane %v2648, %v2652
    %v2655 = vmul.f32 %v2645, %v2653
    %v2656 = vld [vmem:[%s61] sm:$0x1]
    %v2658 = vlaneseq
    %v2659 = vshrl.u32 %v2658, 7
    %v2660 = vsub.s32 0, %v2659
    %v2661 = vrot.slane %v2656, %v2660
    %v2663 = vadd.f32 %v2655, %v2661
    %v2664 = vmax.f32 %v2663, 0.0
    %2665 = vst [vmem:[#allocation10 + $0x1] sm:$0x3] %v2664
    %2666 = vst [vmem:[#allocation10 + $0x1] sm:$0x30] %v2664
    %v2667 = vld [vmem:[#allocation10 + $0x1] sm:$0x3]
    %v2668 = vsel %vm346, %v2667, 0.0
    %v2669 = vrot.slane %v2668, 4
    %v2670 = vadd.f32 %v2668, %v2669
    %v2671 = vrot.slane %v2670, 2
    %v2672 = vadd.f32 %v2670, %v2671
    %v2673 = vrot.slane %v2672, 1
    %v2674 = vadd.f32 %v2672, %v2673
    %v2675 = vld [vmem:[#allocation10 + $0x5] sm:$0x3]
    %v2676 = vsel %vm346, %v2675, 0.0
    %v2677 = vrot.slane %v2676, 4
    %v2678 = vadd.f32 %v2676, %v2677
    %v2679 = vrot.slane %v2678, 2
    %v2680 = vadd.f32 %v2678, %v2679
    %v2681 = vrot.slane %v2680, 1
    %v2682 = vadd.f32 %v2680, %v2681
    %vm2683 = vcmask 1040384
    %v2684 = vsel %vm2683, %v2674, %v2682
    %v2685 = vld [vmem:[%s63] sm:$0xff]
    %v2686 = vld [vmem:[%s63 + $0x8] sm:$0xff]
    %v2687 = vld [vmem:[%s63 + $0x10] sm:$0xff]
    %v2688 = vld [vmem:[%s63 + $0x18] sm:$0xff]
    %v2689 = vld [vmem:[%s63 + $0x20] sm:$0xff]
    %v2690 = vld [vmem:[%s63 + $0x28] sm:$0xff]
    %v2691 = vld [vmem:[%s63 + $0x30] sm:$0xff]
    %v2692 = vld [vmem:[%s63 + $0x38] sm:$0xff]
    %v2693 = vld [vmem:[%s63 + $0x40] sm:$0xff]
    %v2694 = vld [vmem:[%s63 + $0x48] sm:$0xff]
    %v2695 = vld [vmem:[%s63 + $0x50] sm:$0xff]
    %v2696 = vld [vmem:[%s63 + $0x58] sm:$0xff]
    %v2697 = vld [vmem:[%s63 + $0x60] sm:$0xff]
    %v2698 = vld [vmem:[%s63 + $0x68] sm:$0xff]
    %v2699 = vld [vmem:[%s63 + $0x70] sm:$0xff]
    %v2700 = vld [vmem:[%s63 + $0x78] sm:$0xff]
    %v2701 = vld [vmem:[%s65] sm:$0x1]
    %v2703 = vlaneseq
    %v2704 = vshrl.u32 %v2703, 7
    %v2705 = vsub.s32 0, %v2704
    %v2706 = vrot.slane %v2701, %v2705
    %2708 = vmatprep.subr.mxu0 0.0
    %2709 = vmatpush1.msra.mxu0 %v2685
    %2710 = vmatprep.subr.mxu0 0.0
    %2711 = vmatpush1.msra.mxu0 %v2686
    %2712 = vmatprep.subr.mxu0 0.0
    %2713 = vmatpush1.msra.mxu0 %v2687
    %2714 = vmatprep.subr.mxu0 0.0
    %2715 = vmatpush1.msra.mxu0 %v2688
    %2716 = vmatprep.subr.mxu0 0.0
    %2717 = vmatpush1.msra.mxu0 %v2689
    %2718 = vmatprep.subr.mxu0 0.0
    %2719 = vmatpush1.msra.mxu0 %v2690
    %2720 = vmatprep.subr.mxu0 0.0
    %2721 = vmatpush1.msra.mxu0 %v2691
    %2722 = vmatprep.subr.mxu0 0.0
    %2723 = vmatpush1.msra.mxu0 %v2692
    %2724 = vmatprep.subr.mxu0 0.0
    %2725 = vmatpush1.msra.mxu0 %v2693
    %2726 = vmatprep.subr.mxu0 0.0
    %2727 = vmatpush1.msra.mxu0 %v2694
    %2728 = vmatprep.subr.mxu0 0.0
    %2729 = vmatpush1.msra.mxu0 %v2695
    %2730 = vmatprep.subr.mxu0 0.0
    %2731 = vmatpush1.msra.mxu0 %v2696
    %2732 = vmatprep.subr.mxu0 0.0
    %2733 = vmatpush1.msra.mxu0 %v2697
    %2734 = vmatprep.subr.mxu0 0.0
    %2735 = vmatpush1.msra.mxu0 %v2698
    %2736 = vmatprep.subr.mxu0 0.0
    %2737 = vmatpush1.msra.mxu0 %v2699
    %2738 = vmatprep.subr.mxu0 0.0
    %2739 = vmatpush1.msra.mxu0 %v2700
    %2740 = vmatprep.subr.mxu0 0.0
    %2741 = vmatpush1.msra.mxu0 0.0
    %2742 = vmatprep.subr.mxu0 0.0
    %2743 = vmatpush1.msra.mxu0 0.0
    %2744 = vmatprep.subr.mxu0 0.0
    %2745 = vmatpush1.msra.mxu0 0.0
    %2746 = vmatprep.subr.mxu0 0.0
    %2747 = vmatpush1.msra.mxu0 0.0
    %2748 = vmatprep.subr.mxu0 0.0
    %2749 = vmatpush1.msra.mxu0 0.0
    %2750 = vmatprep.subr.mxu0 0.0
    %2751 = vmatpush1.msra.mxu0 0.0
    %2752 = vmatprep.subr.mxu0 0.0
    %2753 = vmatpush1.msra.mxu0 0.0
    %2754 = vmatprep.subr.mxu0 0.0
    %2755 = vmatpush1.msra.mxu0 0.0
    %2756 = vmatprep.subr.mxu0 0.0
    %2757 = vmatpush1.msra.mxu0 0.0
    %2758 = vmatprep.subr.mxu0 0.0
    %2759 = vmatpush1.msra.mxu0 0.0
    %2760 = vmatprep.subr.mxu0 0.0
    %2761 = vmatpush1.msra.mxu0 0.0
    %2762 = vmatprep.subr.mxu0 0.0
    %2763 = vmatpush1.msra.mxu0 0.0
    %2764 = vmatprep.subr.mxu0 0.0
    %2765 = vmatpush1.msra.mxu0 0.0
    %2766 = vmatprep.subr.mxu0 0.0
    %2767 = vmatpush1.msra.mxu0 0.0
    %2768 = vmatprep.subr.mxu0 0.0
    %2769 = vmatpush1.msra.mxu0 0.0
    %2770 = vmatprep.subr.mxu0 0.0
    %2771 = vmatpush1.msra.mxu0 0.0
    %2772 = vmatprep.mubr.f32.mxu0 0.0
    %2773 = vmatmul.mubr.f32.gmra.mrb[0].mxu0 %v2684
    %v2774 = vpop.f32.mrb[0].mxu0
    %v2775 = vadd.f32 %v2706, %v2774
    %v2776 = vpop.f32.mrb[0].mxu0
    %2777 = vdwg.mxu0
    %vm2778 = vcmask 74752
    %2779 = vst.msk [vmem:[#allocation23] sm:$0x3] %vm2778, %v2775
    // Predicated region
    $region162: #{_lambda_.1} parent=1 // pred_check
      _
    $region163: #{_lambda_.1} parent=1 // pred_check_branch
      %2781 = sbr.rel (0) target = $region165
    $region164: #{_lambda_.1} parent=1 // pred_region
      %s2783 = ssub.s32 32, 32
      %2784 = vsyncadd [#allocation13], %s2783
      %s2786 = sshll.u32 [#allocation23], 4
      %s2787 = int_to_ptr.vmem [resolvable:$true] %s2786
      %2789 = dma.vmem_to_hbm [thread:$0]  %s2787, 32, %s67, [#allocation13]
    $region165: #{_lambda_.1} parent=1 // pred_fallthru
      _
    // Predicated region
    $region166: #{_lambda_.1} parent=1 // pred_check
      _
    $region167: #{_lambda_.1} parent=1 // pred_check_branch
      %2791 = sbr.rel (0) target = $region169
    $region168: #{_lambda_.1} parent=1 // pred_region
      %2792 = dma.done [#allocation13], 32
    $region169: #{_lambda_.1} parent=1 // pred_fallthru
      _
    %2793 = vsyncpa [#allocation12], 1
    %2794 = vsyncpa [#allocation15], 1
    %2795 = vsyncpa [#allocation18], 1
    %2796 = vsyncpa [#allocation21], 1
    %2797 = vsyncpa [#allocation13], 1

</llo_original>
